<compile_context>
chip_gen: v7x
topology: tpu7x:2x2x1
jax: 0.10.0
libtpu: 0.0.40
codegen_flags: <defaults>
</compile_context>

<pallas_src>
import functools

import jax
import jax.numpy as jnp
from jax.experimental import pallas as pl
from jax.experimental.pallas import tpu as pltpu


def _round_up(x, m):
    return (x + m - 1) // m * m


def _device_kind():
    try:
        return jax.devices()[0].device_kind.lower()
    except Exception:
        return ""


def _num_tensorcores(kind=None):
    kind = _device_kind() if kind is None else kind
    return 2 if "v7" in kind else 1          # v7x: 2 TCs/chip; v5e/v6e: 1


def select_act_dtype(kind=None):
    """Elementwise (bias-add / ReLU) dtype: bf16 where the VPU supports it."""
    kind = _device_kind() if kind is None else kind
    if "v6" in kind or "v7" in kind:
        return jnp.bfloat16
    return jnp.float32                        # v5e (and unknown): f32 VPU path


def _mlp_kernel(x_ref, w_ref, b_ref, out_ref, *, layer_dims, col_stride, act_dtype):
    """Whole-MLP forward for one batch tile.

    x_ref:   [TB, in_features]          f32
    w_ref:   [k_pad, n*col_stride]      bf16 packed weight slab
             rows [0:d_in) of column block li -> weight_li ([d_in, d_out])
    b_ref:   [1, n*col_stride]          f32 packed bias slab
    out_ref: [1, TB]                    f32 probabilities (lane-dense layout)
    """
    h = x_ref[...].astype(jnp.bfloat16)                       # MXU operand dtype
    n_linear = len(layer_dims)
    probs = None
    for li, (d_in, d_out) in enumerate(layer_dims):
        c0 = li * col_stride
        w = w_ref[0:d_in, c0:c0 + d_out]                      # bf16, static slice
        b = b_ref[0:1, c0:c0 + d_out]                         # f32 [1, d_out]
        acc = jnp.dot(h, w, preferred_element_type=jnp.float32)   # f32 accumulate
        if li < n_linear - 1:
            z = acc.astype(act_dtype) + b.astype(act_dtype)
            # ReLU (Dropout == identity at inference); next matmul wants bf16.
            h = jnp.maximum(z, 0.0).astype(jnp.bfloat16)
        else:
            z = acc + b                                       # final logit in f32
            # sigmoid(z) == 0.5*tanh(z/2)+0.5 : single EUP op, exact.
            probs = 0.5 * jnp.tanh(0.5 * z) + 0.5
    # Lane-dense store: [TB, 1] -> [1, TB] (relayout rides the XLU slot).
    out_ref[...] = probs.reshape(1, -1).astype(out_ref.dtype)


def pack_params(weights, biases):
    """Pack weights into one bf16 slab, biases into one f32 slab.

    Layer li occupies lane-aligned column block [li*col_stride, li*col_stride+d_out):
      weight slab rows [0, d_in) -> weight (stored [in, out], transpose of PyTorch)
      bias slab row 0            -> bias
    """
    assert len(weights) == len(biases)
    n_linear = len(weights)
    max_in = max(int(w.shape[0]) for w in weights)
    max_out = max(int(w.shape[1]) for w in weights)
    k_pad = _round_up(max_in, 16)             # bf16 packs 16 rows per vreg
    col_stride = _round_up(max_out, 128)      # lane-aligned per-layer column block
    w_slab = jnp.zeros((k_pad, n_linear * col_stride), jnp.bfloat16)
    b_slab = jnp.zeros((1, n_linear * col_stride), jnp.float32)
    layer_dims = []
    for li, (w, b) in enumerate(zip(weights, biases)):
        d_in, d_out = int(w.shape[0]), int(w.shape[1])
        c0 = li * col_stride
        w_slab = w_slab.at[0:d_in, c0:c0 + d_out].set(w.astype(jnp.bfloat16))
        b_slab = b_slab.at[0:1, c0:c0 + d_out].set(
            jnp.reshape(b, (1, d_out)).astype(jnp.float32))
        layer_dims.append((d_in, d_out))
    return w_slab, b_slab, col_stride, tuple(layer_dims)


def heart_disease_nn_forward(x, weights, biases, *, block_batch=None, act_dtype=None):
    """Run the MLP forward pass as a single batch-tiled Pallas call.

    Args:
      x: [batch, input_size] float32
      weights: list of [in, out] float32 arrays (transposed PyTorch weights)
      biases:  list of [1, out] (or [out]) float32 arrays
      block_batch: rows per grid step.  Default is generation-aware:
        grid=1 for small/medium batches on single-TC chips, an even split on
        v7x, and up-to-2048-row (128-aligned) tiles for large batches.
      act_dtype: dtype for bias-add/ReLU (default: bf16 on v6e/v7x, f32 else).
    Returns:
      [batch, 1] float32 probabilities.
    """
    batch, in_features = x.shape
    w_slab, b_slab, col_stride, layer_dims = pack_params(weights, biases)
    assert layer_dims[0][0] == in_features

    kind = _device_kind()
    n_tc = _num_tensorcores(kind)
    if act_dtype is None:
        act_dtype = select_act_dtype(kind)

    # ---- Tile selection (no host-side padding of x in any case). ----
    if block_batch is None:
        block_batch = min(2048, pl.cdiv(batch, n_tc))
    block_batch = int(block_batch)
    if block_batch >= batch:
        block_batch = batch                     # grid=1: block == full array
    else:
        block_batch = max(128, _round_up(block_batch, 128))  # lane-dense out blocks
        if block_batch >= batch:
            block_batch = batch
    grid = pl.cdiv(batch, block_batch)          # ragged last tile handled by Pallas

    kernel = functools.partial(_mlp_kernel, layer_dims=layer_dims,
                               col_stride=col_stride, act_dtype=act_dtype)

    flops = 2 * batch * sum(a * b for a, b in layer_dims)
    bytes_accessed = int(batch * in_features * 4        # x
                         + w_slab.size * 2               # bf16 weight slab (once)
                         + b_slab.size * 4               # f32 bias slab (once)
                         + batch * 4)                    # output
    cost = pl.CostEstimate(flops=flops, transcendentals=batch,
                           bytes_accessed=bytes_accessed)

    out = pl.pallas_call(
        kernel,
        out_shape=jax.ShapeDtypeStruct((1, batch), jnp.float32),   # lane-dense
        grid=(grid,),
        in_specs=[
            pl.BlockSpec((block_batch, in_features), lambda i: (i, 0)),  # tiled x
            pl.BlockSpec(w_slab.shape, lambda i: (0, 0)),                # resident W
            pl.BlockSpec(b_slab.shape, lambda i: (0, 0)),                # resident b
        ],
        out_specs=pl.BlockSpec((1, block_batch), lambda i: (0, i)),
        compiler_params=pltpu.CompilerParams(
            dimension_semantics=("parallel",)),   # shards the batch grid on v7x
        cost_estimate=cost,
    )(x, w_slab, b_slab)
    # (1, batch) -> (batch, 1); trailing dim is 1 so reshape == transpose.
    return out.reshape(batch, 1)


def make_params(key, input_size, hidden_size, num_layers):
    """Deterministic init matching the PyTorch module's layer shapes.

    Mirrors nn.Linear default init U(-1/sqrt(fan_in), 1/sqrt(fan_in)).
    Weights stored [in, out], biases [1, out].
    """
    sizes = [input_size, hidden_size]
    current = hidden_size
    for _ in range(num_layers - 1):
        current = max(current // 2, 8)
        sizes.append(current)
    sizes.append(1)  # final Linear(current, 1)

    weights, biases = [], []
    for i in range(len(sizes) - 1):
        fan_in, fan_out = sizes[i], sizes[i + 1]
        key, kw, kb = jax.random.split(key, 3)
        bound = 1.0 / jnp.sqrt(jnp.float32(fan_in))
        w = jax.random.uniform(kw, (fan_in, fan_out), jnp.float32, -bound, bound)
        b = jax.random.uniform(kb, (1, fan_out), jnp.float32, -bound, bound)
        weights.append(w)
        biases.append(b)
    return weights, biases


def reference_forward(x, weights, biases, *, match_kernel_precision=False,
                      act_dtype=jnp.float32):
    """Pure-JAX reference.  With match_kernel_precision=True it mimics the
    kernel's bf16 matmul operands (f32 accumulation) and elementwise dtype so
    the comparison can be tight."""
    h = x.astype(jnp.float32)
    n = len(weights)
    for i, (w, b) in enumerate(zip(weights, biases)):
        b = jnp.reshape(b, (1, -1)).astype(jnp.float32)
        if match_kernel_precision:
            acc = jnp.dot(h.astype(jnp.bfloat16), w.astype(jnp.bfloat16),
                          preferred_element_type=jnp.float32)
            if i < n - 1:
                z = acc.astype(act_dtype) + b.astype(act_dtype)
                h = jnp.maximum(z, 0.0).astype(jnp.float32)
            else:
                h = jax.nn.sigmoid(acc + b)
        else:
            z = h @ w + b
            h = jnp.maximum(z, 0.0) if i < n - 1 else jax.nn.sigmoid(z)
    return h


if __name__ == "__main__":
    # Module-consistent shapes: 13 clinical features, hidden_size=32, num_layers=3
    # -> Linear widths 13 -> 32 -> 16 -> 8 -> 1.
    # dropout_rate is irrelevant at inference (Dropout == identity in eval mode).
    batch = 256
    input_size = 13
    hidden_size = 32
    num_layers = 3

    key = jax.random.PRNGKey(0)
    key, kx = jax.random.split(key)
    x = jax.random.normal(kx, (batch, input_size), jnp.float32)
    weights, biases = make_params(key, input_size, hidden_size, num_layers)

    act_dtype = select_act_dtype()

    # Default (generation-aware) tiling: grid=1 on v5e/v6e, even 2-way grid on v7x.
    out = heart_disease_nn_forward(x, weights, biases)
    out = jax.block_until_ready(out)
    assert out.shape == (batch, 1)

    # Tight check vs. a reference using the same bf16-matmul / elementwise math.
    ref_match = reference_forward(x, weights, biases,
                                  match_kernel_precision=True, act_dtype=act_dtype)
    assert jnp.allclose(out, ref_match, atol=5e-3, rtol=5e-3)
    # Looser sanity check against the full-f32 PyTorch-equivalent math.
    ref_f32 = reference_forward(x, weights, biases)
    assert jnp.allclose(out, ref_f32, atol=3e-2, rtol=3e-2)

    # Also exercise the multi-step pipelined path with a ragged (non-dividing)
    # last tile -- no host-side padding of x is performed.
    batch2 = 200
    key, kx2 = jax.random.split(key)
    x2 = jax.random.normal(kx2, (batch2, input_size), jnp.float32)
    out2 = heart_disease_nn_forward(x2, weights, biases, block_batch=128)
    out2 = jax.block_until_ready(out2)
    assert out2.shape == (batch2, 1)
    ref2 = reference_forward(x2, weights, biases,
                             match_kernel_precision=True, act_dtype=act_dtype)
    assert jnp.allclose(out2, ref2, atol=5e-3, rtol=5e-3)

    print("KERNEL_OK")
</pallas_src>

<mosaic_0001>
module attributes {stable_mosaic.version = 11 : i64} {
  func.func @_mlp_kernel(%arg0: i32, %arg1: memref<256x13xf32, #tpu.memory_space<vmem>>, %arg2: memref<32x512xbf16, #tpu.memory_space<vmem>>, %arg3: memref<1x512xf32, #tpu.memory_space<vmem>>, %arg4: memref<1x256xf32, #tpu.memory_space<vmem>>) attributes {dimension_semantics = [#tpu.dimension_semantics<parallel>], iteration_bounds = array<i64: 1>, scalar_prefetch = 0 : i64, scratch_operands = 0 : i64, tpu.core_type = #tpu.core_type<tc>, window_params = [{transform_indices = @transform_0, window_bounds = array<i64: 256, 13>}, {pipeline_mode = #tpu.pipeline_mode<synchronous>, transform_indices = @transform_1, window_bounds = array<i64: 32, 512>}, {pipeline_mode = #tpu.pipeline_mode<synchronous>, transform_indices = @transform_2, window_bounds = array<i64: 1, 512>}, {transform_indices = @transform_3, window_bounds = array<i64: 1, 256>}]} {
    %c0 = arith.constant 0 : index
    %c0_0 = arith.constant 0 : index
    %0 = vector.load %arg1[%c0, %c0_0] : memref<256x13xf32, #tpu.memory_space<vmem>>, vector<256x13xf32>
    %1 = arith.truncf %0 : vector<256x13xf32> to vector<256x13xbf16>
    %c0_1 = arith.constant 0 : index
    %c0_2 = arith.constant 0 : index
    %2 = vector.load %arg2[%c0_1, %c0_2] : memref<32x512xbf16, #tpu.memory_space<vmem>>, vector<13x32xbf16>
    %c0_3 = arith.constant 0 : index
    %c0_4 = arith.constant 0 : index
    %3 = vector.load %arg3[%c0_3, %c0_4] : memref<1x512xf32, #tpu.memory_space<vmem>>, vector<1x32xf32>
    %cst = arith.constant dense<0.000000e+00> : vector<256x32xf32>
    %4 = tpu.matmul %1, %2, %cst {dimension_numbers = #tpu.dot_dimension_numbers<[1], [0], [0], [1], [0, 0, 1, 1], [], []>} : vector<256x13xbf16>, vector<13x32xbf16>, vector<256x32xf32> -> vector<256x32xf32>
    %5 = vector.broadcast %3 : vector<1x32xf32> to vector<256x32xf32>
    %6 = arith.addf %4, %5 : vector<256x32xf32>
    %cst_5 = arith.constant 0.000000e+00 : f32
    %7 = vector.broadcast %cst_5 : f32 to vector<256x32xf32>
    %8 = arith.maximumf %6, %7 : vector<256x32xf32>
    %9 = arith.truncf %8 : vector<256x32xf32> to vector<256x32xbf16>
    %c0_6 = arith.constant 0 : index
    %c128 = arith.constant 128 : index
    %10 = vector.load %arg2[%c0_6, %c128] : memref<32x512xbf16, #tpu.memory_space<vmem>>, vector<32x16xbf16>
    %c0_7 = arith.constant 0 : index
    %c128_8 = arith.constant 128 : index
    %11 = vector.load %arg3[%c0_7, %c128_8] : memref<1x512xf32, #tpu.memory_space<vmem>>, vector<1x16xf32>
    %cst_9 = arith.constant dense<0.000000e+00> : vector<256x16xf32>
    %12 = tpu.matmul %9, %10, %cst_9 {dimension_numbers = #tpu.dot_dimension_numbers<[1], [0], [0], [1], [0, 0, 1, 1], [], []>} : vector<256x32xbf16>, vector<32x16xbf16>, vector<256x16xf32> -> vector<256x16xf32>
    %13 = vector.broadcast %11 : vector<1x16xf32> to vector<256x16xf32>
    %14 = arith.addf %12, %13 : vector<256x16xf32>
    %cst_10 = arith.constant 0.000000e+00 : f32
    %15 = vector.broadcast %cst_10 : f32 to vector<256x16xf32>
    %16 = arith.maximumf %14, %15 : vector<256x16xf32>
    %17 = arith.truncf %16 : vector<256x16xf32> to vector<256x16xbf16>
    %c0_11 = arith.constant 0 : index
    %c256 = arith.constant 256 : index
    %18 = vector.load %arg2[%c0_11, %c256] : memref<32x512xbf16, #tpu.memory_space<vmem>>, vector<16x8xbf16>
    %c0_12 = arith.constant 0 : index
    %c256_13 = arith.constant 256 : index
    %19 = vector.load %arg3[%c0_12, %c256_13] : memref<1x512xf32, #tpu.memory_space<vmem>>, vector<1x8xf32>
    %cst_14 = arith.constant dense<0.000000e+00> : vector<256x8xf32>
    %20 = tpu.matmul %17, %18, %cst_14 {dimension_numbers = #tpu.dot_dimension_numbers<[1], [0], [0], [1], [0, 0, 1, 1], [], []>} : vector<256x16xbf16>, vector<16x8xbf16>, vector<256x8xf32> -> vector<256x8xf32>
    %21 = vector.broadcast %19 : vector<1x8xf32> to vector<256x8xf32>
    %22 = arith.addf %20, %21 : vector<256x8xf32>
    %cst_15 = arith.constant 0.000000e+00 : f32
    %23 = vector.broadcast %cst_15 : f32 to vector<256x8xf32>
    %24 = arith.maximumf %22, %23 : vector<256x8xf32>
    %25 = arith.truncf %24 : vector<256x8xf32> to vector<256x8xbf16>
    %c0_16 = arith.constant 0 : index
    %c384 = arith.constant 384 : index
    %26 = vector.load %arg2[%c0_16, %c384] : memref<32x512xbf16, #tpu.memory_space<vmem>>, vector<8x1xbf16>
    %c0_17 = arith.constant 0 : index
    %c384_18 = arith.constant 384 : index
    %27 = vector.load %arg3[%c0_17, %c384_18] : memref<1x512xf32, #tpu.memory_space<vmem>>, vector<1x1xf32>
    %cst_19 = arith.constant dense<0.000000e+00> : vector<256x1xf32>
    %28 = tpu.matmul %25, %26, %cst_19 {dimension_numbers = #tpu.dot_dimension_numbers<[1], [0], [0], [1], [0, 0, 1, 1], [], []>} : vector<256x8xbf16>, vector<8x1xbf16>, vector<256x1xf32> -> vector<256x1xf32>
    %29 = vector.broadcast %27 : vector<1x1xf32> to vector<256x1xf32>
    %30 = arith.addf %28, %29 : vector<256x1xf32>
    %cst_20 = arith.constant 5.000000e-01 : f32
    %31 = vector.broadcast %cst_20 : f32 to vector<256x1xf32>
    %32 = arith.mulf %31, %30 : vector<256x1xf32>
    %33 = math.tanh %32 : vector<256x1xf32>
    %cst_21 = arith.constant 5.000000e-01 : f32
    %34 = vector.broadcast %cst_21 : f32 to vector<256x1xf32>
    %35 = arith.mulf %34, %33 : vector<256x1xf32>
    %cst_22 = arith.constant 5.000000e-01 : f32
    %36 = vector.broadcast %cst_22 : f32 to vector<256x1xf32>
    %37 = arith.addf %35, %36 : vector<256x1xf32>
    %38 = vector.shape_cast %37 : vector<256x1xf32> to vector<1x256xf32>
    %c0_23 = arith.constant 0 : index
    %c0_24 = arith.constant 0 : index
    %39 = vector.load %arg4[%c0_23, %c0_24] : memref<1x256xf32, #tpu.memory_space<vmem>>, vector<1x256xf32>
    tpu.vector_store %arg4[%c0_23, %c0_24], %38 {strides = array<i32>} : memref<1x256xf32, #tpu.memory_space<vmem>>, vector<1x256xf32>,
    return
  }
  func.func @transform_0(%arg0: i32) -> (i32, i32) {
    %c0_i32 = arith.constant 0 : i32
    %c0_i32_0 = arith.constant 0 : i32
    return %arg0, %c0_i32 : i32, i32
  }
  func.func @transform_1(%arg0: i32) -> (i32, i32) {
    %c0_i32 = arith.constant 0 : i32
    %c0_i32_0 = arith.constant 0 : i32
    %c0_i32_1 = arith.constant 0 : i32
    return %c0_i32, %c0_i32_0 : i32, i32
  }
  func.func @transform_2(%arg0: i32) -> (i32, i32) {
    %c0_i32 = arith.constant 0 : i32
    %c0_i32_0 = arith.constant 0 : i32
    %c0_i32_1 = arith.constant 0 : i32
    return %c0_i32, %c0_i32_0 : i32, i32
  }
  func.func @transform_3(%arg0: i32) -> (i32, i32) {
    %c0_i32 = arith.constant 0 : i32
    %c0_i32_0 = arith.constant 0 : i32
    return %c0_i32, %arg0 : i32, i32
  }
}

</mosaic_0001>

<llo_original>
// kernel: tpu_custom_call.1
$region0: #{tpu_custom_call.1}
  #allocation0 [shape = 'u32[]', space=smem, size = 0x4, offset = 0x4, fixed_abs, tag = 'smem constant byte address 0x4 - core index']
  #allocation1 [shape = 'u32[144,128]{1,0:T(1,128)}', space=vmem, size = 0x12000, scoped, tag = 'internal scratch']
  %s0 = inlined_call_operand.vmem [shape: f32[256,13], index: 0, kind: input, shape index: {}]
  %s1 = inlined_call_operand.vmem [shape: bf16[32,512], index: 1, kind: input, shape index: {}]
  %s2 = inlined_call_operand.vmem [shape: f32[1,512], index: 2, kind: input, shape index: {}]
  %s3 = inlined_call_operand.hbm [shape: f32[1,256], index: 3, kind: output, shape index: {}]
  %s4 = sld [smem:[#allocation0]]
  $region22: #{tpu_custom_call.1} parent=0
    _
  %s6 = ssub.s32 1, %s4
  %s7 = scalar_select 0, %s6, %s4
  $region1: #{tpu_custom_call.1} parent=0
    #allocation2 [shape = 'u8[1024]{0}', space=vmem, size = 0x400, scoped, tag = 'output window, operand 0, single buffered']
    #allocation3 [shape = 's32[1]{0}', space=sflag, size = 0x4, scoped, tag = 'scoped memory for tpu_custom_call.1']
    %8 = vsyncpa [#allocation3], 0
    // Predicated region
    $region2: #{tpu_custom_call.1} parent=1 // pred_check
      _
    $region3: #{tpu_custom_call.1} parent=1 // pred_check_branch
      %10 = sbr.rel (0) target = $region5
    $region4: #{tpu_custom_call.1} parent=1 // pred_region
      _
    $region5: #{tpu_custom_call.1} parent=1 // pred_fallthru
      _
    // Predicated region
    $region6: #{tpu_custom_call.1} parent=1 // pred_check
      _
    $region7: #{tpu_custom_call.1} parent=1 // pred_check_branch
      %12 = sbr.rel (0) target = $region9
    $region8: #{tpu_custom_call.1} parent=1 // pred_region
      _
    $region9: #{tpu_custom_call.1} parent=1 // pred_fallthru
      _
    // Predicated region
    $region10: #{tpu_custom_call.1} parent=1 // pred_check
      _
    $region11: #{tpu_custom_call.1} parent=1 // pred_check_branch
      %14 = sbr.rel (0) target = $region13
    $region12: #{tpu_custom_call.1} parent=1 // pred_region
      _
    $region13: #{tpu_custom_call.1} parent=1 // pred_fallthru
      _
    %v16 = vld [vmem:[%s0] sm:$0xff]
    %v17 = vld [vmem:[%s0 + $0x8] sm:$0xff]
    %v18 = vld [vmem:[%s0 + $0x10] sm:$0xff]
    %v19 = vld [vmem:[%s0 + $0x18] sm:$0xff]
    %v20 = vld [vmem:[%s0 + $0x20] sm:$0xff]
    %v21 = vld [vmem:[%s0 + $0x28] sm:$0xff]
    %v22 = vld [vmem:[%s0 + $0x30] sm:$0xff]
    %v23 = vld [vmem:[%s0 + $0x38] sm:$0xff]
    %v24 = vld [vmem:[%s0 + $0x40] sm:$0xff]
    %v25 = vld [vmem:[%s0 + $0x48] sm:$0xff]
    %v26 = vld [vmem:[%s0 + $0x50] sm:$0xff]
    %v27 = vld [vmem:[%s0 + $0x58] sm:$0xff]
    %v28 = vld [vmem:[%s0 + $0x60] sm:$0xff]
    %v29 = vld [vmem:[%s0 + $0x68] sm:$0xff]
    %v30 = vld [vmem:[%s0 + $0x70] sm:$0xff]
    %v31 = vld [vmem:[%s0 + $0x78] sm:$0xff]
    %v32 = vld [vmem:[%s0 + $0x80] sm:$0xff]
    %v33 = vld [vmem:[%s0 + $0x88] sm:$0xff]
    %v34 = vld [vmem:[%s0 + $0x90] sm:$0xff]
    %v35 = vld [vmem:[%s0 + $0x98] sm:$0xff]
    %v36 = vld [vmem:[%s0 + $0xa0] sm:$0xff]
    %v37 = vld [vmem:[%s0 + $0xa8] sm:$0xff]
    %v38 = vld [vmem:[%s0 + $0xb0] sm:$0xff]
    %v39 = vld [vmem:[%s0 + $0xb8] sm:$0xff]
    %v40 = vld [vmem:[%s0 + $0xc0] sm:$0xff]
    %v41 = vld [vmem:[%s0 + $0xc8] sm:$0xff]
    %v42 = vld [vmem:[%s0 + $0xd0] sm:$0xff]
    %v43 = vld [vmem:[%s0 + $0xd8] sm:$0xff]
    %v44 = vld [vmem:[%s0 + $0xe0] sm:$0xff]
    %v45 = vld [vmem:[%s0 + $0xe8] sm:$0xff]
    %v46 = vld [vmem:[%s0 + $0xf0] sm:$0xff]
    %v47 = vld [vmem:[%s0 + $0xf8] sm:$0xff]
    %v48 = vpack.c.bf16 %v17, %v16
    %v49 = vpack.c.bf16 %v19, %v18
    %v50 = vpack.c.bf16 %v21, %v20
    %v51 = vpack.c.bf16 %v23, %v22
    %v52 = vpack.c.bf16 %v25, %v24
    %v53 = vpack.c.bf16 %v27, %v26
    %v54 = vpack.c.bf16 %v29, %v28
    %v55 = vpack.c.bf16 %v31, %v30
    %v56 = vpack.c.bf16 %v33, %v32
    %v57 = vpack.c.bf16 %v35, %v34
    %v58 = vpack.c.bf16 %v37, %v36
    %v59 = vpack.c.bf16 %v39, %v38
    %v60 = vpack.c.bf16 %v41, %v40
    %v61 = vpack.c.bf16 %v43, %v42
    %v62 = vpack.c.bf16 %v45, %v44
    %v63 = vpack.c.bf16 %v47, %v46
    %v64 = vld [vmem:[%s1] sm:$0xf]
    %v65 = vld [vmem:[%s1 + $0x10] sm:$0x7]
    %v66 = vld [vmem:[%s2] sm:$0x1]
    %v68 = vlaneseq
    %v69 = vshrl.u32 %v68, 7
    %v70 = vsub.s32 0, %v69
    %v71 = vrot.slane %v66, %v70
    %v75 = vunpack.c.l.b16 %v64
    %v76 = vunpack.c.l.b16 %v65
    %v77 = vpack.c.b16 %v76, %v75
    %vm78 = vcmask 105472
    %v80 = vsel %vm78, %v48, 0
    %v83 = vsel %vm78, %v49, 0
    %v86 = vsel %vm78, %v50, 0
    %v89 = vsel %vm78, %v51, 0
    %v92 = vsel %vm78, %v52, 0
    %v95 = vsel %vm78, %v53, 0
    %v98 = vsel %vm78, %v54, 0
    %v101 = vsel %vm78, %v55, 0
    %v104 = vsel %vm78, %v56, 0
    %v107 = vsel %vm78, %v57, 0
    %v110 = vsel %vm78, %v58, 0
    %v113 = vsel %vm78, %v59, 0
    %v116 = vsel %vm78, %v60, 0
    %v119 = vsel %vm78, %v61, 0
    %v122 = vsel %vm78, %v62, 0
    %v125 = vsel %vm78, %v63, 0
    %vm127 = vcmask 1045504
    %vm128 = vcmask 1046528
    %v129 = vsel %vm127, 4294967295, 65535
    %v130 = vsel %vm128, %v129, 0
    %v132 = vand.u32 %v77, %v130
    %134 = vmatprep.subr.bf16.mxu0 0
    %135 = vmatpush1.bf16.msra.mxu0 %v132
    %136 = vmatprep.subr.bf16.mxu0 0
    %137 = vmatpush1.bf16.msra.mxu0 0
    %138 = vmatprep.subr.bf16.mxu0 0
    %139 = vmatpush1.bf16.msra.mxu0 0
    %140 = vmatprep.subr.bf16.mxu0 0
    %141 = vmatpush1.bf16.msra.mxu0 0
    %142 = vmatprep.subr.bf16.mxu0 0
    %143 = vmatpush1.bf16.msra.mxu0 0
    %144 = vmatprep.subr.bf16.mxu0 0
    %145 = vmatpush1.bf16.msra.mxu0 0
    %146 = vmatprep.subr.bf16.mxu0 0
    %147 = vmatpush1.bf16.msra.mxu0 0
    %148 = vmatprep.subr.bf16.mxu0 0
    %149 = vmatpush1.bf16.msra.mxu0 0
    %150 = vmatprep.subr.bf16.mxu0 0
    %151 = vmatpush1.bf16.msra.mxu0 0
    %152 = vmatprep.subr.bf16.mxu0 0
    %153 = vmatpush1.bf16.msra.mxu0 0
    %154 = vmatprep.subr.bf16.mxu0 0
    %155 = vmatpush1.bf16.msra.mxu0 0
    %156 = vmatprep.subr.bf16.mxu0 0
    %157 = vmatpush1.bf16.msra.mxu0 0
    %158 = vmatprep.subr.bf16.mxu0 0
    %159 = vmatpush1.bf16.msra.mxu0 0
    %160 = vmatprep.subr.bf16.mxu0 0
    %161 = vmatpush1.bf16.msra.mxu0 0
    %162 = vmatprep.subr.bf16.mxu0 0
    %163 = vmatpush1.bf16.msra.mxu0 0
    %164 = vmatprep.subr.bf16.mxu0 0
    %165 = vmatpush1.bf16.msra.mxu0 0
    %166 = vmatprep.mubr.bf16.mxu0 0
    %167 = vmatmul.mubr.bf16.gmra.mrb[0].mxu0 %v80
    %v168 = vpop.f32.mrb[0].mxu0
    %v169 = vadd.f32 %v71, %v168
    %v170 = vpop.f32.mrb[0].mxu0
    %v171 = vpop.f32.mrb[0].mxu0
    %v172 = vadd.f32 %v71, %v171
    %v173 = vpop.f32.mrb[0].mxu0
    %174 = vmatprep.mubr.bf16.mxu0 0
    %175 = vmatmul.mubr.bf16.gmra.mrb[0].mxu0 %v83
    %v176 = vpop.f32.mrb[0].mxu0
    %v177 = vadd.f32 %v71, %v176
    %v178 = vpop.f32.mrb[0].mxu0
    %v179 = vpop.f32.mrb[0].mxu0
    %v180 = vadd.f32 %v71, %v179
    %v181 = vpop.f32.mrb[0].mxu0
    %182 = vmatprep.mubr.bf16.mxu0 0
    %183 = vmatmul.mubr.bf16.gmra.mrb[0].mxu0 %v86
    %v184 = vpop.f32.mrb[0].mxu0
    %v185 = vadd.f32 %v71, %v184
    %v186 = vpop.f32.mrb[0].mxu0
    %v187 = vpop.f32.mrb[0].mxu0
    %v188 = vadd.f32 %v71, %v187
    %v189 = vpop.f32.mrb[0].mxu0
    %190 = vmatprep.mubr.bf16.mxu0 0
    %191 = vmatmul.mubr.bf16.gmra.mrb[0].mxu0 %v89
    %v192 = vpop.f32.mrb[0].mxu0
    %v193 = vadd.f32 %v71, %v192
    %v194 = vpop.f32.mrb[0].mxu0
    %v195 = vpop.f32.mrb[0].mxu0
    %v196 = vadd.f32 %v71, %v195
    %v197 = vpop.f32.mrb[0].mxu0
    %198 = vmatprep.mubr.bf16.mxu0 0
    %199 = vmatmul.mubr.bf16.gmra.mrb[0].mxu0 %v92
    %v200 = vpop.f32.mrb[0].mxu0
    %v201 = vadd.f32 %v71, %v200
    %v202 = vpop.f32.mrb[0].mxu0
    %v203 = vpop.f32.mrb[0].mxu0
    %v204 = vadd.f32 %v71, %v203
    %v205 = vpop.f32.mrb[0].mxu0
    %206 = vmatprep.mubr.bf16.mxu0 0
    %207 = vmatmul.mubr.bf16.gmra.mrb[0].mxu0 %v95
    %v208 = vpop.f32.mrb[0].mxu0
    %v209 = vadd.f32 %v71, %v208
    %v210 = vpop.f32.mrb[0].mxu0
    %v211 = vpop.f32.mrb[0].mxu0
    %v212 = vadd.f32 %v71, %v211
    %v213 = vpop.f32.mrb[0].mxu0
    %214 = vmatprep.mubr.bf16.mxu0 0
    %215 = vmatmul.mubr.bf16.gmra.mrb[0].mxu0 %v98
    %v216 = vpop.f32.mrb[0].mxu0
    %v217 = vadd.f32 %v71, %v216
    %v218 = vpop.f32.mrb[0].mxu0
    %v219 = vpop.f32.mrb[0].mxu0
    %v220 = vadd.f32 %v71, %v219
    %v221 = vpop.f32.mrb[0].mxu0
    %222 = vmatprep.mubr.bf16.mxu0 0
    %223 = vmatmul.mubr.bf16.gmra.mrb[0].mxu0 %v101
    %v224 = vpop.f32.mrb[0].mxu0
    %v225 = vadd.f32 %v71, %v224
    %v226 = vpop.f32.mrb[0].mxu0
    %v227 = vpop.f32.mrb[0].mxu0
    %v228 = vadd.f32 %v71, %v227
    %v229 = vpop.f32.mrb[0].mxu0
    %230 = vmatprep.mubr.bf16.mxu0 0
    %231 = vmatmul.mubr.bf16.gmra.mrb[0].mxu0 %v104
    %v232 = vpop.f32.mrb[0].mxu0
    %v233 = vadd.f32 %v71, %v232
    %v234 = vpop.f32.mrb[0].mxu0
    %v235 = vpop.f32.mrb[0].mxu0
    %v236 = vadd.f32 %v71, %v235
    %v237 = vpop.f32.mrb[0].mxu0
    %238 = vmatprep.mubr.bf16.mxu0 0
    %239 = vmatmul.mubr.bf16.gmra.mrb[0].mxu0 %v107
    %v240 = vpop.f32.mrb[0].mxu0
    %v241 = vadd.f32 %v71, %v240
    %v242 = vpop.f32.mrb[0].mxu0
    %v243 = vpop.f32.mrb[0].mxu0
    %v244 = vadd.f32 %v71, %v243
    %v245 = vpop.f32.mrb[0].mxu0
    %246 = vmatprep.mubr.bf16.mxu0 0
    %247 = vmatmul.mubr.bf16.gmra.mrb[0].mxu0 %v110
    %v248 = vpop.f32.mrb[0].mxu0
    %v249 = vadd.f32 %v71, %v248
    %v250 = vpop.f32.mrb[0].mxu0
    %v251 = vpop.f32.mrb[0].mxu0
    %v252 = vadd.f32 %v71, %v251
    %v253 = vpop.f32.mrb[0].mxu0
    %254 = vmatprep.mubr.bf16.mxu0 0
    %255 = vmatmul.mubr.bf16.gmra.mrb[0].mxu0 %v113
    %v256 = vpop.f32.mrb[0].mxu0
    %v257 = vadd.f32 %v71, %v256
    %v258 = vpop.f32.mrb[0].mxu0
    %v259 = vpop.f32.mrb[0].mxu0
    %v260 = vadd.f32 %v71, %v259
    %v261 = vpop.f32.mrb[0].mxu0
    %262 = vmatprep.mubr.bf16.mxu0 0
    %263 = vmatmul.mubr.bf16.gmra.mrb[0].mxu0 %v116
    %v264 = vpop.f32.mrb[0].mxu0
    %v265 = vadd.f32 %v71, %v264
    %v266 = vpop.f32.mrb[0].mxu0
    %v267 = vpop.f32.mrb[0].mxu0
    %v268 = vadd.f32 %v71, %v267
    %v269 = vpop.f32.mrb[0].mxu0
    %270 = vmatprep.mubr.bf16.mxu0 0
    %271 = vmatmul.mubr.bf16.gmra.mrb[0].mxu0 %v119
    %v272 = vpop.f32.mrb[0].mxu0
    %v273 = vadd.f32 %v71, %v272
    %v274 = vpop.f32.mrb[0].mxu0
    %v275 = vpop.f32.mrb[0].mxu0
    %v276 = vadd.f32 %v71, %v275
    %v277 = vpop.f32.mrb[0].mxu0
    %278 = vmatprep.mubr.bf16.mxu0 0
    %279 = vmatmul.mubr.bf16.gmra.mrb[0].mxu0 %v122
    %v280 = vpop.f32.mrb[0].mxu0
    %v281 = vadd.f32 %v71, %v280
    %v282 = vpop.f32.mrb[0].mxu0
    %v283 = vpop.f32.mrb[0].mxu0
    %v284 = vadd.f32 %v71, %v283
    %v285 = vpop.f32.mrb[0].mxu0
    %286 = vmatprep.mubr.bf16.mxu0 0
    %287 = vmatmul.mubr.bf16.gmra.mrb[0].mxu0 %v125
    %v288 = vpop.f32.mrb[0].mxu0
    %v289 = vadd.f32 %v71, %v288
    %v290 = vpop.f32.mrb[0].mxu0
    %v291 = vpop.f32.mrb[0].mxu0
    %v292 = vadd.f32 %v71, %v291
    %v293 = vpop.f32.mrb[0].mxu0
    %294 = vdwg.mxu0
    %v295 = vmax.f32 %v169, 0.0
    %v296 = vmax.f32 %v172, 0.0
    %v297 = vmax.f32 %v177, 0.0
    %v298 = vmax.f32 %v180, 0.0
    %v299 = vmax.f32 %v185, 0.0
    %v300 = vmax.f32 %v188, 0.0
    %v301 = vmax.f32 %v193, 0.0
    %v302 = vmax.f32 %v196, 0.0
    %v303 = vmax.f32 %v201, 0.0
    %v304 = vmax.f32 %v204, 0.0
    %v305 = vmax.f32 %v209, 0.0
    %v306 = vmax.f32 %v212, 0.0
    %v307 = vmax.f32 %v217, 0.0
    %v308 = vmax.f32 %v220, 0.0
    %v309 = vmax.f32 %v225, 0.0
    %v310 = vmax.f32 %v228, 0.0
    %v311 = vmax.f32 %v233, 0.0
    %v312 = vmax.f32 %v236, 0.0
    %v313 = vmax.f32 %v241, 0.0
    %v314 = vmax.f32 %v244, 0.0
    %v315 = vmax.f32 %v249, 0.0
    %v316 = vmax.f32 %v252, 0.0
    %v317 = vmax.f32 %v257, 0.0
    %v318 = vmax.f32 %v260, 0.0
    %v319 = vmax.f32 %v265, 0.0
    %v320 = vmax.f32 %v268, 0.0
    %v321 = vmax.f32 %v273, 0.0
    %v322 = vmax.f32 %v276, 0.0
    %v323 = vmax.f32 %v281, 0.0
    %v324 = vmax.f32 %v284, 0.0
    %v325 = vmax.f32 %v289, 0.0
    %v326 = vmax.f32 %v292, 0.0
    %v327 = vpack.c.bf16 %v296, %v295
    %v328 = vpack.c.bf16 %v298, %v297
    %v329 = vpack.c.bf16 %v300, %v299
    %v330 = vpack.c.bf16 %v302, %v301
    %v331 = vpack.c.bf16 %v304, %v303
    %v332 = vpack.c.bf16 %v306, %v305
    %v333 = vpack.c.bf16 %v308, %v307
    %v334 = vpack.c.bf16 %v310, %v309
    %v335 = vpack.c.bf16 %v312, %v311
    %v336 = vpack.c.bf16 %v314, %v313
    %v337 = vpack.c.bf16 %v316, %v315
    %v338 = vpack.c.bf16 %v318, %v317
    %v339 = vpack.c.bf16 %v320, %v319
    %v340 = vpack.c.bf16 %v322, %v321
    %v341 = vpack.c.bf16 %v324, %v323
    %v342 = vpack.c.bf16 %v326, %v325
    %v343 = vld [vmem:[%s1 + $0x4] sm:$0xf]
    %v344 = vld [vmem:[%s1 + $0x14] sm:$0xf]
    %v345 = vld [vmem:[%s1 + $0x24] sm:$0xf]
    %v346 = vld [vmem:[%s1 + $0x34] sm:$0xf]
    %v347 = vld [vmem:[%s2 + $0x1] sm:$0x1]
    %v349 = vlaneseq
    %v350 = vshrl.u32 %v349, 7
    %v351 = vsub.s32 0, %v350
    %v352 = vrot.slane %v347, %v351
    %v358 = vunpack.c.l.b16 %v343
    %v359 = vunpack.c.l.b16 %v344
    %v360 = vunpack.c.l.b16 %v345
    %v361 = vunpack.c.l.b16 %v346
    %v362 = vpack.c.b16 %v359, %v358
    %v363 = vpack.c.b16 %v361, %v360
    %vm366 = vcmask 261120
    %v368 = vsel %vm366, %v327, 0
    %v371 = vsel %vm366, %v328, 0
    %v374 = vsel %vm366, %v329, 0
    %v377 = vsel %vm366, %v330, 0
    %v380 = vsel %vm366, %v331, 0
    %v383 = vsel %vm366, %v332, 0
    %v386 = vsel %vm366, %v333, 0
    %v389 = vsel %vm366, %v334, 0
    %v392 = vsel %vm366, %v335, 0
    %v395 = vsel %vm366, %v336, 0
    %v398 = vsel %vm366, %v337, 0
    %v401 = vsel %vm366, %v338, 0
    %v404 = vsel %vm366, %v339, 0
    %v407 = vsel %vm366, %v340, 0
    %v410 = vsel %vm366, %v341, 0
    %v413 = vsel %vm366, %v342, 0
    %415 = vmatprep.subr.bf16.mxu0 0
    %416 = vmatpush1.bf16.msra.mxu0 %v362
    %417 = vmatprep.subr.bf16.mxu0 0
    %418 = vmatpush1.bf16.msra.mxu0 %v363
    %419 = vmatprep.subr.bf16.mxu0 0
    %420 = vmatpush1.bf16.msra.mxu0 0
    %421 = vmatprep.subr.bf16.mxu0 0
    %422 = vmatpush1.bf16.msra.mxu0 0
    %423 = vmatprep.subr.bf16.mxu0 0
    %424 = vmatpush1.bf16.msra.mxu0 0
    %425 = vmatprep.subr.bf16.mxu0 0
    %426 = vmatpush1.bf16.msra.mxu0 0
    %427 = vmatprep.subr.bf16.mxu0 0
    %428 = vmatpush1.bf16.msra.mxu0 0
    %429 = vmatprep.subr.bf16.mxu0 0
    %430 = vmatpush1.bf16.msra.mxu0 0
    %431 = vmatprep.subr.bf16.mxu0 0
    %432 = vmatpush1.bf16.msra.mxu0 0
    %433 = vmatprep.subr.bf16.mxu0 0
    %434 = vmatpush1.bf16.msra.mxu0 0
    %435 = vmatprep.subr.bf16.mxu0 0
    %436 = vmatpush1.bf16.msra.mxu0 0
    %437 = vmatprep.subr.bf16.mxu0 0
    %438 = vmatpush1.bf16.msra.mxu0 0
    %439 = vmatprep.subr.bf16.mxu0 0
    %440 = vmatpush1.bf16.msra.mxu0 0
    %441 = vmatprep.subr.bf16.mxu0 0
    %442 = vmatpush1.bf16.msra.mxu0 0
    %443 = vmatprep.subr.bf16.mxu0 0
    %444 = vmatpush1.bf16.msra.mxu0 0
    %445 = vmatprep.subr.bf16.mxu0 0
    %446 = vmatpush1.bf16.msra.mxu0 0
    %447 = vmatprep.mubr.bf16.mxu0 0
    %448 = vmatmul.mubr.bf16.gmra.mrb[0].mxu0 %v368
    %v449 = vpop.f32.mrb[0].mxu0
    %v450 = vadd.f32 %v352, %v449
    %v451 = vpop.f32.mrb[0].mxu0
    %v452 = vpop.f32.mrb[0].mxu0
    %v453 = vadd.f32 %v352, %v452
    %v454 = vpop.f32.mrb[0].mxu0
    %455 = vmatprep.mubr.bf16.mxu0 0
    %456 = vmatmul.mubr.bf16.gmra.mrb[0].mxu0 %v371
    %v457 = vpop.f32.mrb[0].mxu0
    %v458 = vadd.f32 %v352, %v457
    %v459 = vpop.f32.mrb[0].mxu0
    %v460 = vpop.f32.mrb[0].mxu0
    %v461 = vadd.f32 %v352, %v460
    %v462 = vpop.f32.mrb[0].mxu0
    %463 = vmatprep.mubr.bf16.mxu0 0
    %464 = vmatmul.mubr.bf16.gmra.mrb[0].mxu0 %v374
    %v465 = vpop.f32.mrb[0].mxu0
    %v466 = vadd.f32 %v352, %v465
    %v467 = vpop.f32.mrb[0].mxu0
    %v468 = vpop.f32.mrb[0].mxu0
    %v469 = vadd.f32 %v352, %v468
    %v470 = vpop.f32.mrb[0].mxu0
    %471 = vmatprep.mubr.bf16.mxu0 0
    %472 = vmatmul.mubr.bf16.gmra.mrb[0].mxu0 %v377
    %v473 = vpop.f32.mrb[0].mxu0
    %v474 = vadd.f32 %v352, %v473
    %v475 = vpop.f32.mrb[0].mxu0
    %v476 = vpop.f32.mrb[0].mxu0
    %v477 = vadd.f32 %v352, %v476
    %v478 = vpop.f32.mrb[0].mxu0
    %479 = vmatprep.mubr.bf16.mxu0 0
    %480 = vmatmul.mubr.bf16.gmra.mrb[0].mxu0 %v380
    %v481 = vpop.f32.mrb[0].mxu0
    %v482 = vadd.f32 %v352, %v481
    %v483 = vpop.f32.mrb[0].mxu0
    %v484 = vpop.f32.mrb[0].mxu0
    %v485 = vadd.f32 %v352, %v484
    %v486 = vpop.f32.mrb[0].mxu0
    %487 = vmatprep.mubr.bf16.mxu0 0
    %488 = vmatmul.mubr.bf16.gmra.mrb[0].mxu0 %v383
    %v489 = vpop.f32.mrb[0].mxu0
    %v490 = vadd.f32 %v352, %v489
    %v491 = vpop.f32.mrb[0].mxu0
    %v492 = vpop.f32.mrb[0].mxu0
    %v493 = vadd.f32 %v352, %v492
    %v494 = vpop.f32.mrb[0].mxu0
    %495 = vmatprep.mubr.bf16.mxu0 0
    %496 = vmatmul.mubr.bf16.gmra.mrb[0].mxu0 %v386
    %v497 = vpop.f32.mrb[0].mxu0
    %v498 = vadd.f32 %v352, %v497
    %v499 = vpop.f32.mrb[0].mxu0
    %v500 = vpop.f32.mrb[0].mxu0
    %v501 = vadd.f32 %v352, %v500
    %v502 = vpop.f32.mrb[0].mxu0
    %503 = vmatprep.mubr.bf16.mxu0 0
    %504 = vmatmul.mubr.bf16.gmra.mrb[0].mxu0 %v389
    %v505 = vpop.f32.mrb[0].mxu0
    %v506 = vadd.f32 %v352, %v505
    %v507 = vpop.f32.mrb[0].mxu0
    %v508 = vpop.f32.mrb[0].mxu0
    %v509 = vadd.f32 %v352, %v508
    %v510 = vpop.f32.mrb[0].mxu0
    %511 = vmatprep.mubr.bf16.mxu0 0
    %512 = vmatmul.mubr.bf16.gmra.mrb[0].mxu0 %v392
    %v513 = vpop.f32.mrb[0].mxu0
    %v514 = vadd.f32 %v352, %v513
    %v515 = vpop.f32.mrb[0].mxu0
    %v516 = vpop.f32.mrb[0].mxu0
    %v517 = vadd.f32 %v352, %v516
    %v518 = vpop.f32.mrb[0].mxu0
    %519 = vmatprep.mubr.bf16.mxu0 0
    %520 = vmatmul.mubr.bf16.gmra.mrb[0].mxu0 %v395
    %v521 = vpop.f32.mrb[0].mxu0
    %v522 = vadd.f32 %v352, %v521
    %v523 = vpop.f32.mrb[0].mxu0
    %v524 = vpop.f32.mrb[0].mxu0
    %v525 = vadd.f32 %v352, %v524
    %v526 = vpop.f32.mrb[0].mxu0
    %527 = vmatprep.mubr.bf16.mxu0 0
    %528 = vmatmul.mubr.bf16.gmra.mrb[0].mxu0 %v398
    %v529 = vpop.f32.mrb[0].mxu0
    %v530 = vadd.f32 %v352, %v529
    %v531 = vpop.f32.mrb[0].mxu0
    %v532 = vpop.f32.mrb[0].mxu0
    %v533 = vadd.f32 %v352, %v532
    %v534 = vpop.f32.mrb[0].mxu0
    %535 = vmatprep.mubr.bf16.mxu0 0
    %536 = vmatmul.mubr.bf16.gmra.mrb[0].mxu0 %v401
    %v537 = vpop.f32.mrb[0].mxu0
    %v538 = vadd.f32 %v352, %v537
    %v539 = vpop.f32.mrb[0].mxu0
    %v540 = vpop.f32.mrb[0].mxu0
    %v541 = vadd.f32 %v352, %v540
    %v542 = vpop.f32.mrb[0].mxu0
    %543 = vmatprep.mubr.bf16.mxu0 0
    %544 = vmatmul.mubr.bf16.gmra.mrb[0].mxu0 %v404
    %v545 = vpop.f32.mrb[0].mxu0
    %v546 = vadd.f32 %v352, %v545
    %v547 = vpop.f32.mrb[0].mxu0
    %v548 = vpop.f32.mrb[0].mxu0
    %v549 = vadd.f32 %v352, %v548
    %v550 = vpop.f32.mrb[0].mxu0
    %551 = vmatprep.mubr.bf16.mxu0 0
    %552 = vmatmul.mubr.bf16.gmra.mrb[0].mxu0 %v407
    %v553 = vpop.f32.mrb[0].mxu0
    %v554 = vadd.f32 %v352, %v553
    %v555 = vpop.f32.mrb[0].mxu0
    %v556 = vpop.f32.mrb[0].mxu0
    %v557 = vadd.f32 %v352, %v556
    %v558 = vpop.f32.mrb[0].mxu0
    %559 = vmatprep.mubr.bf16.mxu0 0
    %560 = vmatmul.mubr.bf16.gmra.mrb[0].mxu0 %v410
    %v561 = vpop.f32.mrb[0].mxu0
    %v562 = vadd.f32 %v352, %v561
    %v563 = vpop.f32.mrb[0].mxu0
    %v564 = vpop.f32.mrb[0].mxu0
    %v565 = vadd.f32 %v352, %v564
    %v566 = vpop.f32.mrb[0].mxu0
    %567 = vmatprep.mubr.bf16.mxu0 0
    %568 = vmatmul.mubr.bf16.gmra.mrb[0].mxu0 %v413
    %v569 = vpop.f32.mrb[0].mxu0
    %v570 = vadd.f32 %v352, %v569
    %v571 = vpop.f32.mrb[0].mxu0
    %v572 = vpop.f32.mrb[0].mxu0
    %v573 = vadd.f32 %v352, %v572
    %v574 = vpop.f32.mrb[0].mxu0
    %575 = vdwg.mxu0
    %v576 = vmax.f32 %v450, 0.0
    %v577 = vmax.f32 %v453, 0.0
    %v578 = vmax.f32 %v458, 0.0
    %v579 = vmax.f32 %v461, 0.0
    %v580 = vmax.f32 %v466, 0.0
    %v581 = vmax.f32 %v469, 0.0
    %v582 = vmax.f32 %v474, 0.0
    %v583 = vmax.f32 %v477, 0.0
    %v584 = vmax.f32 %v482, 0.0
    %v585 = vmax.f32 %v485, 0.0
    %v586 = vmax.f32 %v490, 0.0
    %v587 = vmax.f32 %v493, 0.0
    %v588 = vmax.f32 %v498, 0.0
    %v589 = vmax.f32 %v501, 0.0
    %v590 = vmax.f32 %v506, 0.0
    %v591 = vmax.f32 %v509, 0.0
    %v592 = vmax.f32 %v514, 0.0
    %v593 = vmax.f32 %v517, 0.0
    %v594 = vmax.f32 %v522, 0.0
    %v595 = vmax.f32 %v525, 0.0
    %v596 = vmax.f32 %v530, 0.0
    %v597 = vmax.f32 %v533, 0.0
    %v598 = vmax.f32 %v538, 0.0
    %v599 = vmax.f32 %v541, 0.0
    %v600 = vmax.f32 %v546, 0.0
    %v601 = vmax.f32 %v549, 0.0
    %v602 = vmax.f32 %v554, 0.0
    %v603 = vmax.f32 %v557, 0.0
    %v604 = vmax.f32 %v562, 0.0
    %v605 = vmax.f32 %v565, 0.0
    %v606 = vmax.f32 %v570, 0.0
    %v607 = vmax.f32 %v573, 0.0
    %v608 = vpack.c.bf16 %v577, %v576
    %v609 = vpack.c.bf16 %v579, %v578
    %v610 = vpack.c.bf16 %v581, %v580
    %v611 = vpack.c.bf16 %v583, %v582
    %v612 = vpack.c.bf16 %v585, %v584
    %v613 = vpack.c.bf16 %v587, %v586
    %v614 = vpack.c.bf16 %v589, %v588
    %v615 = vpack.c.bf16 %v591, %v590
    %v616 = vpack.c.bf16 %v593, %v592
    %v617 = vpack.c.bf16 %v595, %v594
    %v618 = vpack.c.bf16 %v597, %v596
    %v619 = vpack.c.bf16 %v599, %v598
    %v620 = vpack.c.bf16 %v601, %v600
    %v621 = vpack.c.bf16 %v603, %v602
    %v622 = vpack.c.bf16 %v605, %v604
    %v623 = vpack.c.bf16 %v607, %v606
    %v624 = vld [vmem:[%s1 + $0x8] sm:$0xf]
    %v625 = vld [vmem:[%s1 + $0x18] sm:$0xf]
    %v626 = vld [vmem:[%s2 + $0x2] sm:$0x1]
    %v628 = vlaneseq
    %v629 = vshrl.u32 %v628, 7
    %v630 = vsub.s32 0, %v629
    %v631 = vrot.slane %v626, %v630
    %v635 = vunpack.c.l.b16 %v624
    %v636 = vunpack.c.l.b16 %v625
    %v637 = vpack.c.b16 %v636, %v635
    %vm639 = vcmask 130048
    %v641 = vsel %vm639, %v608, 0
    %v644 = vsel %vm639, %v609, 0
    %v647 = vsel %vm639, %v610, 0
    %v650 = vsel %vm639, %v611, 0
    %v653 = vsel %vm639, %v612, 0
    %v656 = vsel %vm639, %v613, 0
    %v659 = vsel %vm639, %v614, 0
    %v662 = vsel %vm639, %v615, 0
    %v665 = vsel %vm639, %v616, 0
    %v668 = vsel %vm639, %v617, 0
    %v671 = vsel %vm639, %v618, 0
    %v674 = vsel %vm639, %v619, 0
    %v677 = vsel %vm639, %v620, 0
    %v680 = vsel %vm639, %v621, 0
    %v683 = vsel %vm639, %v622, 0
    %v686 = vsel %vm639, %v623, 0
    %688 = vmatprep.subr.bf16.mxu0 0
    %689 = vmatpush1.bf16.msra.mxu0 %v637
    %690 = vmatprep.subr.bf16.mxu0 0
    %691 = vmatpush1.bf16.msra.mxu0 0
    %692 = vmatprep.subr.bf16.mxu0 0
    %693 = vmatpush1.bf16.msra.mxu0 0
    %694 = vmatprep.subr.bf16.mxu0 0
    %695 = vmatpush1.bf16.msra.mxu0 0
    %696 = vmatprep.subr.bf16.mxu0 0
    %697 = vmatpush1.bf16.msra.mxu0 0
    %698 = vmatprep.subr.bf16.mxu0 0
    %699 = vmatpush1.bf16.msra.mxu0 0
    %700 = vmatprep.subr.bf16.mxu0 0
    %701 = vmatpush1.bf16.msra.mxu0 0
    %702 = vmatprep.subr.bf16.mxu0 0
    %703 = vmatpush1.bf16.msra.mxu0 0
    %704 = vmatprep.subr.bf16.mxu0 0
    %705 = vmatpush1.bf16.msra.mxu0 0
    %706 = vmatprep.subr.bf16.mxu0 0
    %707 = vmatpush1.bf16.msra.mxu0 0
    %708 = vmatprep.subr.bf16.mxu0 0
    %709 = vmatpush1.bf16.msra.mxu0 0
    %710 = vmatprep.subr.bf16.mxu0 0
    %711 = vmatpush1.bf16.msra.mxu0 0
    %712 = vmatprep.subr.bf16.mxu0 0
    %713 = vmatpush1.bf16.msra.mxu0 0
    %714 = vmatprep.subr.bf16.mxu0 0
    %715 = vmatpush1.bf16.msra.mxu0 0
    %716 = vmatprep.subr.bf16.mxu0 0
    %717 = vmatpush1.bf16.msra.mxu0 0
    %718 = vmatprep.subr.bf16.mxu0 0
    %719 = vmatpush1.bf16.msra.mxu0 0
    %720 = vmatprep.mubr.bf16.mxu0 0
    %721 = vmatmul.mubr.bf16.gmra.mrb[0].mxu0 %v641
    %v722 = vpop.f32.mrb[0].mxu0
    %v723 = vadd.f32 %v631, %v722
    %v724 = vpop.f32.mrb[0].mxu0
    %v725 = vpop.f32.mrb[0].mxu0
    %v726 = vadd.f32 %v631, %v725
    %v727 = vpop.f32.mrb[0].mxu0
    %728 = vmatprep.mubr.bf16.mxu0 0
    %729 = vmatmul.mubr.bf16.gmra.mrb[0].mxu0 %v644
    %v730 = vpop.f32.mrb[0].mxu0
    %v731 = vadd.f32 %v631, %v730
    %v732 = vpop.f32.mrb[0].mxu0
    %v733 = vpop.f32.mrb[0].mxu0
    %v734 = vadd.f32 %v631, %v733
    %v735 = vpop.f32.mrb[0].mxu0
    %736 = vmatprep.mubr.bf16.mxu0 0
    %737 = vmatmul.mubr.bf16.gmra.mrb[0].mxu0 %v647
    %v738 = vpop.f32.mrb[0].mxu0
    %v739 = vadd.f32 %v631, %v738
    %v740 = vpop.f32.mrb[0].mxu0
    %v741 = vpop.f32.mrb[0].mxu0
    %v742 = vadd.f32 %v631, %v741
    %v743 = vpop.f32.mrb[0].mxu0
    %744 = vmatprep.mubr.bf16.mxu0 0
    %745 = vmatmul.mubr.bf16.gmra.mrb[0].mxu0 %v650
    %v746 = vpop.f32.mrb[0].mxu0
    %v747 = vadd.f32 %v631, %v746
    %v748 = vpop.f32.mrb[0].mxu0
    %v749 = vpop.f32.mrb[0].mxu0
    %v750 = vadd.f32 %v631, %v749
    %v751 = vpop.f32.mrb[0].mxu0
    %752 = vmatprep.mubr.bf16.mxu0 0
    %753 = vmatmul.mubr.bf16.gmra.mrb[0].mxu0 %v653
    %v754 = vpop.f32.mrb[0].mxu0
    %v755 = vadd.f32 %v631, %v754
    %v756 = vpop.f32.mrb[0].mxu0
    %v757 = vpop.f32.mrb[0].mxu0
    %v758 = vadd.f32 %v631, %v757
    %v759 = vpop.f32.mrb[0].mxu0
    %760 = vmatprep.mubr.bf16.mxu0 0
    %761 = vmatmul.mubr.bf16.gmra.mrb[0].mxu0 %v656
    %v762 = vpop.f32.mrb[0].mxu0
    %v763 = vadd.f32 %v631, %v762
    %v764 = vpop.f32.mrb[0].mxu0
    %v765 = vpop.f32.mrb[0].mxu0
    %v766 = vadd.f32 %v631, %v765
    %v767 = vpop.f32.mrb[0].mxu0
    %768 = vmatprep.mubr.bf16.mxu0 0
    %769 = vmatmul.mubr.bf16.gmra.mrb[0].mxu0 %v659
    %v770 = vpop.f32.mrb[0].mxu0
    %v771 = vadd.f32 %v631, %v770
    %v772 = vpop.f32.mrb[0].mxu0
    %v773 = vpop.f32.mrb[0].mxu0
    %v774 = vadd.f32 %v631, %v773
    %v775 = vpop.f32.mrb[0].mxu0
    %776 = vmatprep.mubr.bf16.mxu0 0
    %777 = vmatmul.mubr.bf16.gmra.mrb[0].mxu0 %v662
    %v778 = vpop.f32.mrb[0].mxu0
    %v779 = vadd.f32 %v631, %v778
    %v780 = vpop.f32.mrb[0].mxu0
    %v781 = vpop.f32.mrb[0].mxu0
    %v782 = vadd.f32 %v631, %v781
    %v783 = vpop.f32.mrb[0].mxu0
    %784 = vmatprep.mubr.bf16.mxu0 0
    %785 = vmatmul.mubr.bf16.gmra.mrb[0].mxu0 %v665
    %v786 = vpop.f32.mrb[0].mxu0
    %v787 = vadd.f32 %v631, %v786
    %v788 = vpop.f32.mrb[0].mxu0
    %v789 = vpop.f32.mrb[0].mxu0
    %v790 = vadd.f32 %v631, %v789
    %v791 = vpop.f32.mrb[0].mxu0
    %792 = vmatprep.mubr.bf16.mxu0 0
    %793 = vmatmul.mubr.bf16.gmra.mrb[0].mxu0 %v668
    %v794 = vpop.f32.mrb[0].mxu0
    %v795 = vadd.f32 %v631, %v794
    %v796 = vpop.f32.mrb[0].mxu0
    %v797 = vpop.f32.mrb[0].mxu0
    %v798 = vadd.f32 %v631, %v797
    %v799 = vpop.f32.mrb[0].mxu0
    %800 = vmatprep.mubr.bf16.mxu0 0
    %801 = vmatmul.mubr.bf16.gmra.mrb[0].mxu0 %v671
    %v802 = vpop.f32.mrb[0].mxu0
    %v803 = vadd.f32 %v631, %v802
    %v804 = vpop.f32.mrb[0].mxu0
    %v805 = vpop.f32.mrb[0].mxu0
    %v806 = vadd.f32 %v631, %v805
    %v807 = vpop.f32.mrb[0].mxu0
    %808 = vmatprep.mubr.bf16.mxu0 0
    %809 = vmatmul.mubr.bf16.gmra.mrb[0].mxu0 %v674
    %v810 = vpop.f32.mrb[0].mxu0
    %v811 = vadd.f32 %v631, %v810
    %v812 = vpop.f32.mrb[0].mxu0
    %v813 = vpop.f32.mrb[0].mxu0
    %v814 = vadd.f32 %v631, %v813
    %v815 = vpop.f32.mrb[0].mxu0
    %816 = vmatprep.mubr.bf16.mxu0 0
    %817 = vmatmul.mubr.bf16.gmra.mrb[0].mxu0 %v677
    %v818 = vpop.f32.mrb[0].mxu0
    %v819 = vadd.f32 %v631, %v818
    %v820 = vpop.f32.mrb[0].mxu0
    %v821 = vpop.f32.mrb[0].mxu0
    %v822 = vadd.f32 %v631, %v821
    %v823 = vpop.f32.mrb[0].mxu0
    %824 = vmatprep.mubr.bf16.mxu0 0
    %825 = vmatmul.mubr.bf16.gmra.mrb[0].mxu0 %v680
    %v826 = vpop.f32.mrb[0].mxu0
    %v827 = vadd.f32 %v631, %v826
    %v828 = vpop.f32.mrb[0].mxu0
    %v829 = vpop.f32.mrb[0].mxu0
    %v830 = vadd.f32 %v631, %v829
    %v831 = vpop.f32.mrb[0].mxu0
    %832 = vmatprep.mubr.bf16.mxu0 0
    %833 = vmatmul.mubr.bf16.gmra.mrb[0].mxu0 %v683
    %v834 = vpop.f32.mrb[0].mxu0
    %v835 = vadd.f32 %v631, %v834
    %v836 = vpop.f32.mrb[0].mxu0
    %v837 = vpop.f32.mrb[0].mxu0
    %v838 = vadd.f32 %v631, %v837
    %v839 = vpop.f32.mrb[0].mxu0
    %840 = vmatprep.mubr.bf16.mxu0 0
    %841 = vmatmul.mubr.bf16.gmra.mrb[0].mxu0 %v686
    %v842 = vpop.f32.mrb[0].mxu0
    %v843 = vadd.f32 %v631, %v842
    %v844 = vpop.f32.mrb[0].mxu0
    %v845 = vpop.f32.mrb[0].mxu0
    %v846 = vadd.f32 %v631, %v845
    %v847 = vpop.f32.mrb[0].mxu0
    %848 = vdwg.mxu0
    %v849 = vmax.f32 %v723, 0.0
    %v850 = vmax.f32 %v726, 0.0
    %v851 = vmax.f32 %v731, 0.0
    %v852 = vmax.f32 %v734, 0.0
    %v853 = vmax.f32 %v739, 0.0
    %v854 = vmax.f32 %v742, 0.0
    %v855 = vmax.f32 %v747, 0.0
    %v856 = vmax.f32 %v750, 0.0
    %v857 = vmax.f32 %v755, 0.0
    %v858 = vmax.f32 %v758, 0.0
    %v859 = vmax.f32 %v763, 0.0
    %v860 = vmax.f32 %v766, 0.0
    %v861 = vmax.f32 %v771, 0.0
    %v862 = vmax.f32 %v774, 0.0
    %v863 = vmax.f32 %v779, 0.0
    %v864 = vmax.f32 %v782, 0.0
    %v865 = vmax.f32 %v787, 0.0
    %v866 = vmax.f32 %v790, 0.0
    %v867 = vmax.f32 %v795, 0.0
    %v868 = vmax.f32 %v798, 0.0
    %v869 = vmax.f32 %v803, 0.0
    %v870 = vmax.f32 %v806, 0.0
    %v871 = vmax.f32 %v811, 0.0
    %v872 = vmax.f32 %v814, 0.0
    %v873 = vmax.f32 %v819, 0.0
    %v874 = vmax.f32 %v822, 0.0
    %v875 = vmax.f32 %v827, 0.0
    %v876 = vmax.f32 %v830, 0.0
    %v877 = vmax.f32 %v835, 0.0
    %v878 = vmax.f32 %v838, 0.0
    %v879 = vmax.f32 %v843, 0.0
    %v880 = vmax.f32 %v846, 0.0
    %v881 = vpack.c.bf16 %v850, %v849
    %v882 = vpack.c.bf16 %v852, %v851
    %v883 = vpack.c.bf16 %v854, %v853
    %v884 = vpack.c.bf16 %v856, %v855
    %v885 = vpack.c.bf16 %v858, %v857
    %v886 = vpack.c.bf16 %v860, %v859
    %v887 = vpack.c.bf16 %v862, %v861
    %v888 = vpack.c.bf16 %v864, %v863
    %v889 = vpack.c.bf16 %v866, %v865
    %v890 = vpack.c.bf16 %v868, %v867
    %v891 = vpack.c.bf16 %v870, %v869
    %v892 = vpack.c.bf16 %v872, %v871
    %v893 = vpack.c.bf16 %v874, %v873
    %v894 = vpack.c.bf16 %v876, %v875
    %v895 = vpack.c.bf16 %v878, %v877
    %v896 = vpack.c.bf16 %v880, %v879
    %v897 = vld [vmem:[%s1 + $0xc] sm:$0xf]
    %v898 = vld [vmem:[%s2 + $0x3] sm:$0x1]
    %v900 = vlaneseq
    %v901 = vshrl.u32 %v900, 7
    %v902 = vsub.s32 0, %v901
    %v903 = vrot.slane %v898, %v902
    %vm905 = vcmask 64512
    %v907 = vsel %vm905, %v881, 0
    %v910 = vsel %vm905, %v882, 0
    %v913 = vsel %vm905, %v883, 0
    %v916 = vsel %vm905, %v884, 0
    %v919 = vsel %vm905, %v885, 0
    %v922 = vsel %vm905, %v886, 0
    %v925 = vsel %vm905, %v887, 0
    %v928 = vsel %vm905, %v888, 0
    %v931 = vsel %vm905, %v889, 0
    %v934 = vsel %vm905, %v890, 0
    %v937 = vsel %vm905, %v891, 0
    %v940 = vsel %vm905, %v892, 0
    %v943 = vsel %vm905, %v893, 0
    %v946 = vsel %vm905, %v894, 0
    %v949 = vsel %vm905, %v895, 0
    %v952 = vsel %vm905, %v896, 0
    %vm954 = vcmask 1043456
    %v956 = vsel %vm954, %v897, 0
    %958 = vmatprep.subr.bf16.mxu0 0
    %959 = vmatpush1.bf16.msra.mxu0 %v956
    %960 = vmatprep.subr.bf16.mxu0 0
    %961 = vmatpush1.bf16.msra.mxu0 0
    %962 = vmatprep.subr.bf16.mxu0 0
    %963 = vmatpush1.bf16.msra.mxu0 0
    %964 = vmatprep.subr.bf16.mxu0 0
    %965 = vmatpush1.bf16.msra.mxu0 0
    %966 = vmatprep.subr.bf16.mxu0 0
    %967 = vmatpush1.bf16.msra.mxu0 0
    %968 = vmatprep.subr.bf16.mxu0 0
    %969 = vmatpush1.bf16.msra.mxu0 0
    %970 = vmatprep.subr.bf16.mxu0 0
    %971 = vmatpush1.bf16.msra.mxu0 0
    %972 = vmatprep.subr.bf16.mxu0 0
    %973 = vmatpush1.bf16.msra.mxu0 0
    %974 = vmatprep.subr.bf16.mxu0 0
    %975 = vmatpush1.bf16.msra.mxu0 0
    %976 = vmatprep.subr.bf16.mxu0 0
    %977 = vmatpush1.bf16.msra.mxu0 0
    %978 = vmatprep.subr.bf16.mxu0 0
    %979 = vmatpush1.bf16.msra.mxu0 0
    %980 = vmatprep.subr.bf16.mxu0 0
    %981 = vmatpush1.bf16.msra.mxu0 0
    %982 = vmatprep.subr.bf16.mxu0 0
    %983 = vmatpush1.bf16.msra.mxu0 0
    %984 = vmatprep.subr.bf16.mxu0 0
    %985 = vmatpush1.bf16.msra.mxu0 0
    %986 = vmatprep.subr.bf16.mxu0 0
    %987 = vmatpush1.bf16.msra.mxu0 0
    %988 = vmatprep.subr.bf16.mxu0 0
    %989 = vmatpush1.bf16.msra.mxu0 0
    %990 = vmatprep.mubr.bf16.mxu0 0
    %991 = vmatmul.mubr.bf16.gmra.mrb[0].mxu0 %v907
    %v992 = vpop.f32.mrb[0].mxu0
    %v993 = vadd.f32 %v903, %v992
    %v994 = vpop.f32.mrb[0].mxu0
    %v995 = vpop.f32.mrb[0].mxu0
    %v996 = vadd.f32 %v903, %v995
    %v997 = vpop.f32.mrb[0].mxu0
    %998 = vmatprep.mubr.bf16.mxu0 0
    %999 = vmatmul.mubr.bf16.gmra.mrb[0].mxu0 %v910
    %v1000 = vpop.f32.mrb[0].mxu0
    %v1001 = vadd.f32 %v903, %v1000
    %v1002 = vpop.f32.mrb[0].mxu0
    %v1003 = vpop.f32.mrb[0].mxu0
    %v1004 = vadd.f32 %v903, %v1003
    %v1005 = vpop.f32.mrb[0].mxu0
    %1006 = vmatprep.mubr.bf16.mxu0 0
    %1007 = vmatmul.mubr.bf16.gmra.mrb[0].mxu0 %v913
    %v1008 = vpop.f32.mrb[0].mxu0
    %v1009 = vadd.f32 %v903, %v1008
    %v1010 = vpop.f32.mrb[0].mxu0
    %v1011 = vpop.f32.mrb[0].mxu0
    %v1012 = vadd.f32 %v903, %v1011
    %v1013 = vpop.f32.mrb[0].mxu0
    %1014 = vmatprep.mubr.bf16.mxu0 0
    %1015 = vmatmul.mubr.bf16.gmra.mrb[0].mxu0 %v916
    %v1016 = vpop.f32.mrb[0].mxu0
    %v1017 = vadd.f32 %v903, %v1016
    %v1018 = vpop.f32.mrb[0].mxu0
    %v1019 = vpop.f32.mrb[0].mxu0
    %v1020 = vadd.f32 %v903, %v1019
    %v1021 = vpop.f32.mrb[0].mxu0
    %1022 = vmatprep.mubr.bf16.mxu0 0
    %1023 = vmatmul.mubr.bf16.gmra.mrb[0].mxu0 %v919
    %v1024 = vpop.f32.mrb[0].mxu0
    %v1025 = vadd.f32 %v903, %v1024
    %v1026 = vpop.f32.mrb[0].mxu0
    %v1027 = vpop.f32.mrb[0].mxu0
    %v1028 = vadd.f32 %v903, %v1027
    %v1029 = vpop.f32.mrb[0].mxu0
    %1030 = vmatprep.mubr.bf16.mxu0 0
    %1031 = vmatmul.mubr.bf16.gmra.mrb[0].mxu0 %v922
    %v1032 = vpop.f32.mrb[0].mxu0
    %v1033 = vadd.f32 %v903, %v1032
    %v1034 = vpop.f32.mrb[0].mxu0
    %v1035 = vpop.f32.mrb[0].mxu0
    %v1036 = vadd.f32 %v903, %v1035
    %v1037 = vpop.f32.mrb[0].mxu0
    %1038 = vmatprep.mubr.bf16.mxu0 0
    %1039 = vmatmul.mubr.bf16.gmra.mrb[0].mxu0 %v925
    %v1040 = vpop.f32.mrb[0].mxu0
    %v1041 = vadd.f32 %v903, %v1040
    %v1042 = vpop.f32.mrb[0].mxu0
    %v1043 = vpop.f32.mrb[0].mxu0
    %v1044 = vadd.f32 %v903, %v1043
    %v1045 = vpop.f32.mrb[0].mxu0
    %1046 = vmatprep.mubr.bf16.mxu0 0
    %1047 = vmatmul.mubr.bf16.gmra.mrb[0].mxu0 %v928
    %v1048 = vpop.f32.mrb[0].mxu0
    %v1049 = vadd.f32 %v903, %v1048
    %v1050 = vpop.f32.mrb[0].mxu0
    %v1051 = vpop.f32.mrb[0].mxu0
    %v1052 = vadd.f32 %v903, %v1051
    %v1053 = vpop.f32.mrb[0].mxu0
    %1054 = vmatprep.mubr.bf16.mxu0 0
    %1055 = vmatmul.mubr.bf16.gmra.mrb[0].mxu0 %v931
    %v1056 = vpop.f32.mrb[0].mxu0
    %v1057 = vadd.f32 %v903, %v1056
    %v1058 = vpop.f32.mrb[0].mxu0
    %v1059 = vpop.f32.mrb[0].mxu0
    %v1060 = vadd.f32 %v903, %v1059
    %v1061 = vpop.f32.mrb[0].mxu0
    %1062 = vmatprep.mubr.bf16.mxu0 0
    %1063 = vmatmul.mubr.bf16.gmra.mrb[0].mxu0 %v934
    %v1064 = vpop.f32.mrb[0].mxu0
    %v1065 = vadd.f32 %v903, %v1064
    %v1066 = vpop.f32.mrb[0].mxu0
    %v1067 = vpop.f32.mrb[0].mxu0
    %v1068 = vadd.f32 %v903, %v1067
    %v1069 = vpop.f32.mrb[0].mxu0
    %1070 = vmatprep.mubr.bf16.mxu0 0
    %1071 = vmatmul.mubr.bf16.gmra.mrb[0].mxu0 %v937
    %v1072 = vpop.f32.mrb[0].mxu0
    %v1073 = vadd.f32 %v903, %v1072
    %v1074 = vpop.f32.mrb[0].mxu0
    %v1075 = vpop.f32.mrb[0].mxu0
    %v1076 = vadd.f32 %v903, %v1075
    %v1077 = vpop.f32.mrb[0].mxu0
    %1078 = vmatprep.mubr.bf16.mxu0 0
    %1079 = vmatmul.mubr.bf16.gmra.mrb[0].mxu0 %v940
    %v1080 = vpop.f32.mrb[0].mxu0
    %v1081 = vadd.f32 %v903, %v1080
    %v1082 = vpop.f32.mrb[0].mxu0
    %v1083 = vpop.f32.mrb[0].mxu0
    %v1084 = vadd.f32 %v903, %v1083
    %v1085 = vpop.f32.mrb[0].mxu0
    %1086 = vmatprep.mubr.bf16.mxu0 0
    %1087 = vmatmul.mubr.bf16.gmra.mrb[0].mxu0 %v943
    %v1088 = vpop.f32.mrb[0].mxu0
    %v1089 = vadd.f32 %v903, %v1088
    %v1090 = vpop.f32.mrb[0].mxu0
    %v1091 = vpop.f32.mrb[0].mxu0
    %v1092 = vadd.f32 %v903, %v1091
    %v1093 = vpop.f32.mrb[0].mxu0
    %1094 = vmatprep.mubr.bf16.mxu0 0
    %1095 = vmatmul.mubr.bf16.gmra.mrb[0].mxu0 %v946
    %v1096 = vpop.f32.mrb[0].mxu0
    %v1097 = vadd.f32 %v903, %v1096
    %v1098 = vpop.f32.mrb[0].mxu0
    %v1099 = vpop.f32.mrb[0].mxu0
    %v1100 = vadd.f32 %v903, %v1099
    %v1101 = vpop.f32.mrb[0].mxu0
    %1102 = vmatprep.mubr.bf16.mxu0 0
    %1103 = vmatmul.mubr.bf16.gmra.mrb[0].mxu0 %v949
    %v1104 = vpop.f32.mrb[0].mxu0
    %v1105 = vadd.f32 %v903, %v1104
    %v1106 = vpop.f32.mrb[0].mxu0
    %v1107 = vpop.f32.mrb[0].mxu0
    %v1108 = vadd.f32 %v903, %v1107
    %v1109 = vpop.f32.mrb[0].mxu0
    %1110 = vmatprep.mubr.bf16.mxu0 0
    %1111 = vmatmul.mubr.bf16.gmra.mrb[0].mxu0 %v952
    %v1112 = vpop.f32.mrb[0].mxu0
    %v1113 = vadd.f32 %v903, %v1112
    %v1114 = vpop.f32.mrb[0].mxu0
    %v1115 = vpop.f32.mrb[0].mxu0
    %v1116 = vadd.f32 %v903, %v1115
    %v1117 = vpop.f32.mrb[0].mxu0
    %1118 = vdwg.mxu0
    %v1119 = vmul.f32 %v993, 0.5
    %v1120 = vmul.f32 %v996, 0.5
    %v1121 = vmul.f32 %v1001, 0.5
    %v1122 = vmul.f32 %v1004, 0.5
    %v1123 = vmul.f32 %v1009, 0.5
    %v1124 = vmul.f32 %v1012, 0.5
    %v1125 = vmul.f32 %v1017, 0.5
    %v1126 = vmul.f32 %v1020, 0.5
    %v1127 = vmul.f32 %v1025, 0.5
    %v1128 = vmul.f32 %v1028, 0.5
    %v1129 = vmul.f32 %v1033, 0.5
    %v1130 = vmul.f32 %v1036, 0.5
    %v1131 = vmul.f32 %v1041, 0.5
    %v1132 = vmul.f32 %v1044, 0.5
    %v1133 = vmul.f32 %v1049, 0.5
    %v1134 = vmul.f32 %v1052, 0.5
    %v1135 = vmul.f32 %v1057, 0.5
    %v1136 = vmul.f32 %v1060, 0.5
    %v1137 = vmul.f32 %v1065, 0.5
    %v1138 = vmul.f32 %v1068, 0.5
    %v1139 = vmul.f32 %v1073, 0.5
    %v1140 = vmul.f32 %v1076, 0.5
    %v1141 = vmul.f32 %v1081, 0.5
    %v1142 = vmul.f32 %v1084, 0.5
    %v1143 = vmul.f32 %v1089, 0.5
    %v1144 = vmul.f32 %v1092, 0.5
    %v1145 = vmul.f32 %v1097, 0.5
    %v1146 = vmul.f32 %v1100, 0.5
    %v1147 = vmul.f32 %v1105, 0.5
    %v1148 = vmul.f32 %v1108, 0.5
    %v1149 = vmul.f32 %v1113, 0.5
    %v1150 = vmul.f32 %v1116, 0.5
    %v1151 = vtanh.pop %v1119
    %v1152 = vtanh.pop %v1120
    %v1153 = vtanh.pop %v1121
    %v1154 = vtanh.pop %v1122
    %v1155 = vtanh.pop %v1123
    %v1156 = vtanh.pop %v1124
    %v1157 = vtanh.pop %v1125
    %v1158 = vtanh.pop %v1126
    %v1159 = vtanh.pop %v1127
    %v1160 = vtanh.pop %v1128
    %v1161 = vtanh.pop %v1129
    %v1162 = vtanh.pop %v1130
    %v1163 = vtanh.pop %v1131
    %v1164 = vtanh.pop %v1132
    %v1165 = vtanh.pop %v1133
    %v1166 = vtanh.pop %v1134
    %v1167 = vtanh.pop %v1135
    %v1168 = vtanh.pop %v1136
    %v1169 = vtanh.pop %v1137
    %v1170 = vtanh.pop %v1138
    %v1171 = vtanh.pop %v1139
    %v1172 = vtanh.pop %v1140
    %v1173 = vtanh.pop %v1141
    %v1174 = vtanh.pop %v1142
    %v1175 = vtanh.pop %v1143
    %v1176 = vtanh.pop %v1144
    %v1177 = vtanh.pop %v1145
    %v1178 = vtanh.pop %v1146
    %v1179 = vtanh.pop %v1147
    %v1180 = vtanh.pop %v1148
    %v1181 = vtanh.pop %v1149
    %v1182 = vtanh.pop %v1150
    %v1183 = vmul.f32 %v1151, 0.5
    %v1184 = vmul.f32 %v1152, 0.5
    %v1185 = vmul.f32 %v1153, 0.5
    %v1186 = vmul.f32 %v1154, 0.5
    %v1187 = vmul.f32 %v1155, 0.5
    %v1188 = vmul.f32 %v1156, 0.5
    %v1189 = vmul.f32 %v1157, 0.5
    %v1190 = vmul.f32 %v1158, 0.5
    %v1191 = vmul.f32 %v1159, 0.5
    %v1192 = vmul.f32 %v1160, 0.5
    %v1193 = vmul.f32 %v1161, 0.5
    %v1194 = vmul.f32 %v1162, 0.5
    %v1195 = vmul.f32 %v1163, 0.5
    %v1196 = vmul.f32 %v1164, 0.5
    %v1197 = vmul.f32 %v1165, 0.5
    %v1198 = vmul.f32 %v1166, 0.5
    %v1199 = vmul.f32 %v1167, 0.5
    %v1200 = vmul.f32 %v1168, 0.5
    %v1201 = vmul.f32 %v1169, 0.5
    %v1202 = vmul.f32 %v1170, 0.5
    %v1203 = vmul.f32 %v1171, 0.5
    %v1204 = vmul.f32 %v1172, 0.5
    %v1205 = vmul.f32 %v1173, 0.5
    %v1206 = vmul.f32 %v1174, 0.5
    %v1207 = vmul.f32 %v1175, 0.5
    %v1208 = vmul.f32 %v1176, 0.5
    %v1209 = vmul.f32 %v1177, 0.5
    %v1210 = vmul.f32 %v1178, 0.5
    %v1211 = vmul.f32 %v1179, 0.5
    %v1212 = vmul.f32 %v1180, 0.5
    %v1213 = vmul.f32 %v1181, 0.5
    %v1214 = vmul.f32 %v1182, 0.5
    %v1215 = vadd.f32 %v1183, 0.5
    %v1216 = vadd.f32 %v1184, 0.5
    %v1217 = vadd.f32 %v1185, 0.5
    %v1218 = vadd.f32 %v1186, 0.5
    %v1219 = vadd.f32 %v1187, 0.5
    %v1220 = vadd.f32 %v1188, 0.5
    %v1221 = vadd.f32 %v1189, 0.5
    %v1222 = vadd.f32 %v1190, 0.5
    %v1223 = vadd.f32 %v1191, 0.5
    %v1224 = vadd.f32 %v1192, 0.5
    %v1225 = vadd.f32 %v1193, 0.5
    %v1226 = vadd.f32 %v1194, 0.5
    %v1227 = vadd.f32 %v1195, 0.5
    %v1228 = vadd.f32 %v1196, 0.5
    %v1229 = vadd.f32 %v1197, 0.5
    %v1230 = vadd.f32 %v1198, 0.5
    %v1231 = vadd.f32 %v1199, 0.5
    %v1232 = vadd.f32 %v1200, 0.5
    %v1233 = vadd.f32 %v1201, 0.5
    %v1234 = vadd.f32 %v1202, 0.5
    %v1235 = vadd.f32 %v1203, 0.5
    %v1236 = vadd.f32 %v1204, 0.5
    %v1237 = vadd.f32 %v1205, 0.5
    %v1238 = vadd.f32 %v1206, 0.5
    %v1239 = vadd.f32 %v1207, 0.5
    %v1240 = vadd.f32 %v1208, 0.5
    %v1241 = vadd.f32 %v1209, 0.5
    %v1242 = vadd.f32 %v1210, 0.5
    %v1243 = vadd.f32 %v1211, 0.5
    %v1244 = vadd.f32 %v1212, 0.5
    %v1245 = vadd.f32 %v1213, 0.5
    %v1246 = vadd.f32 %v1214, 0.5
    %v1279 = vcombine.high %v1215, %v1215
    %v1281 = vunpack.c.l.s4 1966171168
    %v1282 = vunpack.c.0.s8 %v1281
    %v1283 = vlaneseq
    %v1284 = vshrl.u32 %v1283, 7
    %v1285 = vsub.s32 %v1282, %v1284
    %v1286 = vrot.slane %v1215, %v1285
    %v1288 = vunpack.c.l.s4 1966171168
    %v1289 = vunpack.c.0.s8 %v1288
    %v1290 = vlaneseq
    %v1291 = vshrl.u32 %v1290, 7
    %v1292 = vsub.s32 %v1289, %v1291
    %v1293 = vrot.slane %v1279, %v1292
    %v1294 = vcombine.high %v1286, %v1286
    %v1295 = vcombine.high %v1293, %v1293
    %v1297 = vunpack.c.l.s4 1966171168
    %v1298 = vunpack.c.0.s8 %v1297
    %v1299 = vlaneseq
    %v1300 = vshrl.u32 %v1299, 7
    %v1301 = vsub.s32 %v1298, %v1300
    %v1302 = vrot.slane %v1286, %v1301
    %v1304 = vunpack.c.l.s4 1966171168
    %v1305 = vunpack.c.0.s8 %v1304
    %v1306 = vlaneseq
    %v1307 = vshrl.u32 %v1306, 7
    %v1308 = vsub.s32 %v1305, %v1307
    %v1309 = vrot.slane %v1293, %v1308
    %v1311 = vunpack.c.l.s4 1966171168
    %v1312 = vunpack.c.0.s8 %v1311
    %v1313 = vlaneseq
    %v1314 = vshrl.u32 %v1313, 7
    %v1315 = vsub.s32 %v1312, %v1314
    %v1316 = vrot.slane %v1294, %v1315
    %v1318 = vunpack.c.l.s4 1966171168
    %v1319 = vunpack.c.0.s8 %v1318
    %v1320 = vlaneseq
    %v1321 = vshrl.u32 %v1320, 7
    %v1322 = vsub.s32 %v1319, %v1321
    %v1323 = vrot.slane %v1295, %v1322
    %v1324 = vcombine.high %v1302, %v1302
    %v1325 = vcombine.high %v1309, %v1309
    %v1326 = vcombine.high %v1316, %v1316
    %v1327 = vcombine.high %v1323, %v1323
    %v1328 = vcombine.high %v1216, %v1216
    %v1330 = vunpack.c.l.s4 1966171168
    %v1331 = vunpack.c.0.s8 %v1330
    %v1332 = vlaneseq
    %v1333 = vshrl.u32 %v1332, 7
    %v1334 = vsub.s32 %v1331, %v1333
    %v1335 = vrot.slane %v1216, %v1334
    %v1337 = vunpack.c.l.s4 1966171168
    %v1338 = vunpack.c.0.s8 %v1337
    %v1339 = vlaneseq
    %v1340 = vshrl.u32 %v1339, 7
    %v1341 = vsub.s32 %v1338, %v1340
    %v1342 = vrot.slane %v1328, %v1341
    %v1343 = vcombine.high %v1335, %v1335
    %v1344 = vcombine.high %v1342, %v1342
    %v1346 = vunpack.c.l.s4 1966171168
    %v1347 = vunpack.c.0.s8 %v1346
    %v1348 = vlaneseq
    %v1349 = vshrl.u32 %v1348, 7
    %v1350 = vsub.s32 %v1347, %v1349
    %v1351 = vrot.slane %v1335, %v1350
    %v1353 = vunpack.c.l.s4 1966171168
    %v1354 = vunpack.c.0.s8 %v1353
    %v1355 = vlaneseq
    %v1356 = vshrl.u32 %v1355, 7
    %v1357 = vsub.s32 %v1354, %v1356
    %v1358 = vrot.slane %v1342, %v1357
    %v1360 = vunpack.c.l.s4 1966171168
    %v1361 = vunpack.c.0.s8 %v1360
    %v1362 = vlaneseq
    %v1363 = vshrl.u32 %v1362, 7
    %v1364 = vsub.s32 %v1361, %v1363
    %v1365 = vrot.slane %v1343, %v1364
    %v1367 = vunpack.c.l.s4 1966171168
    %v1368 = vunpack.c.0.s8 %v1367
    %v1369 = vlaneseq
    %v1370 = vshrl.u32 %v1369, 7
    %v1371 = vsub.s32 %v1368, %v1370
    %v1372 = vrot.slane %v1344, %v1371
    %v1373 = vcombine.high %v1351, %v1351
    %v1374 = vcombine.high %v1358, %v1358
    %v1375 = vcombine.high %v1365, %v1365
    %v1376 = vcombine.high %v1372, %v1372
    %v1377 = vcombine.high %v1217, %v1217
    %v1379 = vunpack.c.l.s4 1966171168
    %v1380 = vunpack.c.0.s8 %v1379
    %v1381 = vlaneseq
    %v1382 = vshrl.u32 %v1381, 7
    %v1383 = vsub.s32 %v1380, %v1382
    %v1384 = vrot.slane %v1217, %v1383
    %v1386 = vunpack.c.l.s4 1966171168
    %v1387 = vunpack.c.0.s8 %v1386
    %v1388 = vlaneseq
    %v1389 = vshrl.u32 %v1388, 7
    %v1390 = vsub.s32 %v1387, %v1389
    %v1391 = vrot.slane %v1377, %v1390
    %v1392 = vcombine.high %v1384, %v1384
    %v1393 = vcombine.high %v1391, %v1391
    %v1395 = vunpack.c.l.s4 1966171168
    %v1396 = vunpack.c.0.s8 %v1395
    %v1397 = vlaneseq
    %v1398 = vshrl.u32 %v1397, 7
    %v1399 = vsub.s32 %v1396, %v1398
    %v1400 = vrot.slane %v1384, %v1399
    %v1402 = vunpack.c.l.s4 1966171168
    %v1403 = vunpack.c.0.s8 %v1402
    %v1404 = vlaneseq
    %v1405 = vshrl.u32 %v1404, 7
    %v1406 = vsub.s32 %v1403, %v1405
    %v1407 = vrot.slane %v1391, %v1406
    %v1409 = vunpack.c.l.s4 1966171168
    %v1410 = vunpack.c.0.s8 %v1409
    %v1411 = vlaneseq
    %v1412 = vshrl.u32 %v1411, 7
    %v1413 = vsub.s32 %v1410, %v1412
    %v1414 = vrot.slane %v1392, %v1413
    %v1416 = vunpack.c.l.s4 1966171168
    %v1417 = vunpack.c.0.s8 %v1416
    %v1418 = vlaneseq
    %v1419 = vshrl.u32 %v1418, 7
    %v1420 = vsub.s32 %v1417, %v1419
    %v1421 = vrot.slane %v1393, %v1420
    %v1422 = vcombine.high %v1400, %v1400
    %v1423 = vcombine.high %v1407, %v1407
    %v1424 = vcombine.high %v1414, %v1414
    %v1425 = vcombine.high %v1421, %v1421
    %v1426 = vcombine.high %v1218, %v1218
    %v1428 = vunpack.c.l.s4 1966171168
    %v1429 = vunpack.c.0.s8 %v1428
    %v1430 = vlaneseq
    %v1431 = vshrl.u32 %v1430, 7
    %v1432 = vsub.s32 %v1429, %v1431
    %v1433 = vrot.slane %v1218, %v1432
    %v1435 = vunpack.c.l.s4 1966171168
    %v1436 = vunpack.c.0.s8 %v1435
    %v1437 = vlaneseq
    %v1438 = vshrl.u32 %v1437, 7
    %v1439 = vsub.s32 %v1436, %v1438
    %v1440 = vrot.slane %v1426, %v1439
    %v1441 = vcombine.high %v1433, %v1433
    %v1442 = vcombine.high %v1440, %v1440
    %v1444 = vunpack.c.l.s4 1966171168
    %v1445 = vunpack.c.0.s8 %v1444
    %v1446 = vlaneseq
    %v1447 = vshrl.u32 %v1446, 7
    %v1448 = vsub.s32 %v1445, %v1447
    %v1449 = vrot.slane %v1433, %v1448
    %v1451 = vunpack.c.l.s4 1966171168
    %v1452 = vunpack.c.0.s8 %v1451
    %v1453 = vlaneseq
    %v1454 = vshrl.u32 %v1453, 7
    %v1455 = vsub.s32 %v1452, %v1454
    %v1456 = vrot.slane %v1440, %v1455
    %v1458 = vunpack.c.l.s4 1966171168
    %v1459 = vunpack.c.0.s8 %v1458
    %v1460 = vlaneseq
    %v1461 = vshrl.u32 %v1460, 7
    %v1462 = vsub.s32 %v1459, %v1461
    %v1463 = vrot.slane %v1441, %v1462
    %v1465 = vunpack.c.l.s4 1966171168
    %v1466 = vunpack.c.0.s8 %v1465
    %v1467 = vlaneseq
    %v1468 = vshrl.u32 %v1467, 7
    %v1469 = vsub.s32 %v1466, %v1468
    %v1470 = vrot.slane %v1442, %v1469
    %v1471 = vcombine.high %v1449, %v1449
    %v1472 = vcombine.high %v1456, %v1456
    %v1473 = vcombine.high %v1463, %v1463
    %v1474 = vcombine.high %v1470, %v1470
    %v1475 = vcombine.high %v1219, %v1219
    %v1477 = vunpack.c.l.s4 1966171168
    %v1478 = vunpack.c.0.s8 %v1477
    %v1479 = vlaneseq
    %v1480 = vshrl.u32 %v1479, 7
    %v1481 = vsub.s32 %v1478, %v1480
    %v1482 = vrot.slane %v1219, %v1481
    %v1484 = vunpack.c.l.s4 1966171168
    %v1485 = vunpack.c.0.s8 %v1484
    %v1486 = vlaneseq
    %v1487 = vshrl.u32 %v1486, 7
    %v1488 = vsub.s32 %v1485, %v1487
    %v1489 = vrot.slane %v1475, %v1488
    %v1490 = vcombine.high %v1482, %v1482
    %v1491 = vcombine.high %v1489, %v1489
    %v1493 = vunpack.c.l.s4 1966171168
    %v1494 = vunpack.c.0.s8 %v1493
    %v1495 = vlaneseq
    %v1496 = vshrl.u32 %v1495, 7
    %v1497 = vsub.s32 %v1494, %v1496
    %v1498 = vrot.slane %v1482, %v1497
    %v1500 = vunpack.c.l.s4 1966171168
    %v1501 = vunpack.c.0.s8 %v1500
    %v1502 = vlaneseq
    %v1503 = vshrl.u32 %v1502, 7
    %v1504 = vsub.s32 %v1501, %v1503
    %v1505 = vrot.slane %v1489, %v1504
    %v1507 = vunpack.c.l.s4 1966171168
    %v1508 = vunpack.c.0.s8 %v1507
    %v1509 = vlaneseq
    %v1510 = vshrl.u32 %v1509, 7
    %v1511 = vsub.s32 %v1508, %v1510
    %v1512 = vrot.slane %v1490, %v1511
    %v1514 = vunpack.c.l.s4 1966171168
    %v1515 = vunpack.c.0.s8 %v1514
    %v1516 = vlaneseq
    %v1517 = vshrl.u32 %v1516, 7
    %v1518 = vsub.s32 %v1515, %v1517
    %v1519 = vrot.slane %v1491, %v1518
    %v1520 = vcombine.high %v1498, %v1498
    %v1521 = vcombine.high %v1505, %v1505
    %v1522 = vcombine.high %v1512, %v1512
    %v1523 = vcombine.high %v1519, %v1519
    %v1524 = vcombine.high %v1220, %v1220
    %v1526 = vunpack.c.l.s4 1966171168
    %v1527 = vunpack.c.0.s8 %v1526
    %v1528 = vlaneseq
    %v1529 = vshrl.u32 %v1528, 7
    %v1530 = vsub.s32 %v1527, %v1529
    %v1531 = vrot.slane %v1220, %v1530
    %v1533 = vunpack.c.l.s4 1966171168
    %v1534 = vunpack.c.0.s8 %v1533
    %v1535 = vlaneseq
    %v1536 = vshrl.u32 %v1535, 7
    %v1537 = vsub.s32 %v1534, %v1536
    %v1538 = vrot.slane %v1524, %v1537
    %v1539 = vcombine.high %v1531, %v1531
    %v1540 = vcombine.high %v1538, %v1538
    %v1542 = vunpack.c.l.s4 1966171168
    %v1543 = vunpack.c.0.s8 %v1542
    %v1544 = vlaneseq
    %v1545 = vshrl.u32 %v1544, 7
    %v1546 = vsub.s32 %v1543, %v1545
    %v1547 = vrot.slane %v1531, %v1546
    %v1549 = vunpack.c.l.s4 1966171168
    %v1550 = vunpack.c.0.s8 %v1549
    %v1551 = vlaneseq
    %v1552 = vshrl.u32 %v1551, 7
    %v1553 = vsub.s32 %v1550, %v1552
    %v1554 = vrot.slane %v1538, %v1553
    %v1556 = vunpack.c.l.s4 1966171168
    %v1557 = vunpack.c.0.s8 %v1556
    %v1558 = vlaneseq
    %v1559 = vshrl.u32 %v1558, 7
    %v1560 = vsub.s32 %v1557, %v1559
    %v1561 = vrot.slane %v1539, %v1560
    %v1563 = vunpack.c.l.s4 1966171168
    %v1564 = vunpack.c.0.s8 %v1563
    %v1565 = vlaneseq
    %v1566 = vshrl.u32 %v1565, 7
    %v1567 = vsub.s32 %v1564, %v1566
    %v1568 = vrot.slane %v1540, %v1567
    %v1569 = vcombine.high %v1547, %v1547
    %v1570 = vcombine.high %v1554, %v1554
    %v1571 = vcombine.high %v1561, %v1561
    %v1572 = vcombine.high %v1568, %v1568
    %v1573 = vcombine.high %v1221, %v1221
    %v1575 = vunpack.c.l.s4 1966171168
    %v1576 = vunpack.c.0.s8 %v1575
    %v1577 = vlaneseq
    %v1578 = vshrl.u32 %v1577, 7
    %v1579 = vsub.s32 %v1576, %v1578
    %v1580 = vrot.slane %v1221, %v1579
    %v1582 = vunpack.c.l.s4 1966171168
    %v1583 = vunpack.c.0.s8 %v1582
    %v1584 = vlaneseq
    %v1585 = vshrl.u32 %v1584, 7
    %v1586 = vsub.s32 %v1583, %v1585
    %v1587 = vrot.slane %v1573, %v1586
    %v1588 = vcombine.high %v1580, %v1580
    %v1589 = vcombine.high %v1587, %v1587
    %v1591 = vunpack.c.l.s4 1966171168
    %v1592 = vunpack.c.0.s8 %v1591
    %v1593 = vlaneseq
    %v1594 = vshrl.u32 %v1593, 7
    %v1595 = vsub.s32 %v1592, %v1594
    %v1596 = vrot.slane %v1580, %v1595
    %v1598 = vunpack.c.l.s4 1966171168
    %v1599 = vunpack.c.0.s8 %v1598
    %v1600 = vlaneseq
    %v1601 = vshrl.u32 %v1600, 7
    %v1602 = vsub.s32 %v1599, %v1601
    %v1603 = vrot.slane %v1587, %v1602
    %v1605 = vunpack.c.l.s4 1966171168
    %v1606 = vunpack.c.0.s8 %v1605
    %v1607 = vlaneseq
    %v1608 = vshrl.u32 %v1607, 7
    %v1609 = vsub.s32 %v1606, %v1608
    %v1610 = vrot.slane %v1588, %v1609
    %v1612 = vunpack.c.l.s4 1966171168
    %v1613 = vunpack.c.0.s8 %v1612
    %v1614 = vlaneseq
    %v1615 = vshrl.u32 %v1614, 7
    %v1616 = vsub.s32 %v1613, %v1615
    %v1617 = vrot.slane %v1589, %v1616
    %v1618 = vcombine.high %v1596, %v1596
    %v1619 = vcombine.high %v1603, %v1603
    %v1620 = vcombine.high %v1610, %v1610
    %v1621 = vcombine.high %v1617, %v1617
    %v1622 = vcombine.high %v1222, %v1222
    %v1624 = vunpack.c.l.s4 1966171168
    %v1625 = vunpack.c.0.s8 %v1624
    %v1626 = vlaneseq
    %v1627 = vshrl.u32 %v1626, 7
    %v1628 = vsub.s32 %v1625, %v1627
    %v1629 = vrot.slane %v1222, %v1628
    %v1631 = vunpack.c.l.s4 1966171168
    %v1632 = vunpack.c.0.s8 %v1631
    %v1633 = vlaneseq
    %v1634 = vshrl.u32 %v1633, 7
    %v1635 = vsub.s32 %v1632, %v1634
    %v1636 = vrot.slane %v1622, %v1635
    %v1637 = vcombine.high %v1629, %v1629
    %v1638 = vcombine.high %v1636, %v1636
    %v1640 = vunpack.c.l.s4 1966171168
    %v1641 = vunpack.c.0.s8 %v1640
    %v1642 = vlaneseq
    %v1643 = vshrl.u32 %v1642, 7
    %v1644 = vsub.s32 %v1641, %v1643
    %v1645 = vrot.slane %v1629, %v1644
    %v1647 = vunpack.c.l.s4 1966171168
    %v1648 = vunpack.c.0.s8 %v1647
    %v1649 = vlaneseq
    %v1650 = vshrl.u32 %v1649, 7
    %v1651 = vsub.s32 %v1648, %v1650
    %v1652 = vrot.slane %v1636, %v1651
    %v1654 = vunpack.c.l.s4 1966171168
    %v1655 = vunpack.c.0.s8 %v1654
    %v1656 = vlaneseq
    %v1657 = vshrl.u32 %v1656, 7
    %v1658 = vsub.s32 %v1655, %v1657
    %v1659 = vrot.slane %v1637, %v1658
    %v1661 = vunpack.c.l.s4 1966171168
    %v1662 = vunpack.c.0.s8 %v1661
    %v1663 = vlaneseq
    %v1664 = vshrl.u32 %v1663, 7
    %v1665 = vsub.s32 %v1662, %v1664
    %v1666 = vrot.slane %v1638, %v1665
    %v1667 = vcombine.high %v1645, %v1645
    %v1668 = vcombine.high %v1652, %v1652
    %v1669 = vcombine.high %v1659, %v1659
    %v1670 = vcombine.high %v1666, %v1666
    %v1671 = vcombine.high %v1223, %v1223
    %v1673 = vunpack.c.l.s4 1966171168
    %v1674 = vunpack.c.0.s8 %v1673
    %v1675 = vlaneseq
    %v1676 = vshrl.u32 %v1675, 7
    %v1677 = vsub.s32 %v1674, %v1676
    %v1678 = vrot.slane %v1223, %v1677
    %v1680 = vunpack.c.l.s4 1966171168
    %v1681 = vunpack.c.0.s8 %v1680
    %v1682 = vlaneseq
    %v1683 = vshrl.u32 %v1682, 7
    %v1684 = vsub.s32 %v1681, %v1683
    %v1685 = vrot.slane %v1671, %v1684
    %v1686 = vcombine.high %v1678, %v1678
    %v1687 = vcombine.high %v1685, %v1685
    %v1689 = vunpack.c.l.s4 1966171168
    %v1690 = vunpack.c.0.s8 %v1689
    %v1691 = vlaneseq
    %v1692 = vshrl.u32 %v1691, 7
    %v1693 = vsub.s32 %v1690, %v1692
    %v1694 = vrot.slane %v1678, %v1693
    %v1696 = vunpack.c.l.s4 1966171168
    %v1697 = vunpack.c.0.s8 %v1696
    %v1698 = vlaneseq
    %v1699 = vshrl.u32 %v1698, 7
    %v1700 = vsub.s32 %v1697, %v1699
    %v1701 = vrot.slane %v1685, %v1700
    %v1703 = vunpack.c.l.s4 1966171168
    %v1704 = vunpack.c.0.s8 %v1703
    %v1705 = vlaneseq
    %v1706 = vshrl.u32 %v1705, 7
    %v1707 = vsub.s32 %v1704, %v1706
    %v1708 = vrot.slane %v1686, %v1707
    %v1710 = vunpack.c.l.s4 1966171168
    %v1711 = vunpack.c.0.s8 %v1710
    %v1712 = vlaneseq
    %v1713 = vshrl.u32 %v1712, 7
    %v1714 = vsub.s32 %v1711, %v1713
    %v1715 = vrot.slane %v1687, %v1714
    %v1716 = vcombine.high %v1694, %v1694
    %v1717 = vcombine.high %v1701, %v1701
    %v1718 = vcombine.high %v1708, %v1708
    %v1719 = vcombine.high %v1715, %v1715
    %v1720 = vcombine.high %v1224, %v1224
    %v1722 = vunpack.c.l.s4 1966171168
    %v1723 = vunpack.c.0.s8 %v1722
    %v1724 = vlaneseq
    %v1725 = vshrl.u32 %v1724, 7
    %v1726 = vsub.s32 %v1723, %v1725
    %v1727 = vrot.slane %v1224, %v1726
    %v1729 = vunpack.c.l.s4 1966171168
    %v1730 = vunpack.c.0.s8 %v1729
    %v1731 = vlaneseq
    %v1732 = vshrl.u32 %v1731, 7
    %v1733 = vsub.s32 %v1730, %v1732
    %v1734 = vrot.slane %v1720, %v1733
    %v1735 = vcombine.high %v1727, %v1727
    %v1736 = vcombine.high %v1734, %v1734
    %v1738 = vunpack.c.l.s4 1966171168
    %v1739 = vunpack.c.0.s8 %v1738
    %v1740 = vlaneseq
    %v1741 = vshrl.u32 %v1740, 7
    %v1742 = vsub.s32 %v1739, %v1741
    %v1743 = vrot.slane %v1727, %v1742
    %v1745 = vunpack.c.l.s4 1966171168
    %v1746 = vunpack.c.0.s8 %v1745
    %v1747 = vlaneseq
    %v1748 = vshrl.u32 %v1747, 7
    %v1749 = vsub.s32 %v1746, %v1748
    %v1750 = vrot.slane %v1734, %v1749
    %v1752 = vunpack.c.l.s4 1966171168
    %v1753 = vunpack.c.0.s8 %v1752
    %v1754 = vlaneseq
    %v1755 = vshrl.u32 %v1754, 7
    %v1756 = vsub.s32 %v1753, %v1755
    %v1757 = vrot.slane %v1735, %v1756
    %v1759 = vunpack.c.l.s4 1966171168
    %v1760 = vunpack.c.0.s8 %v1759
    %v1761 = vlaneseq
    %v1762 = vshrl.u32 %v1761, 7
    %v1763 = vsub.s32 %v1760, %v1762
    %v1764 = vrot.slane %v1736, %v1763
    %v1765 = vcombine.high %v1743, %v1743
    %v1766 = vcombine.high %v1750, %v1750
    %v1767 = vcombine.high %v1757, %v1757
    %v1768 = vcombine.high %v1764, %v1764
    %v1769 = vcombine.high %v1225, %v1225
    %v1771 = vunpack.c.l.s4 1966171168
    %v1772 = vunpack.c.0.s8 %v1771
    %v1773 = vlaneseq
    %v1774 = vshrl.u32 %v1773, 7
    %v1775 = vsub.s32 %v1772, %v1774
    %v1776 = vrot.slane %v1225, %v1775
    %v1778 = vunpack.c.l.s4 1966171168
    %v1779 = vunpack.c.0.s8 %v1778
    %v1780 = vlaneseq
    %v1781 = vshrl.u32 %v1780, 7
    %v1782 = vsub.s32 %v1779, %v1781
    %v1783 = vrot.slane %v1769, %v1782
    %v1784 = vcombine.high %v1776, %v1776
    %v1785 = vcombine.high %v1783, %v1783
    %v1787 = vunpack.c.l.s4 1966171168
    %v1788 = vunpack.c.0.s8 %v1787
    %v1789 = vlaneseq
    %v1790 = vshrl.u32 %v1789, 7
    %v1791 = vsub.s32 %v1788, %v1790
    %v1792 = vrot.slane %v1776, %v1791
    %v1794 = vunpack.c.l.s4 1966171168
    %v1795 = vunpack.c.0.s8 %v1794
    %v1796 = vlaneseq
    %v1797 = vshrl.u32 %v1796, 7
    %v1798 = vsub.s32 %v1795, %v1797
    %v1799 = vrot.slane %v1783, %v1798
    %v1801 = vunpack.c.l.s4 1966171168
    %v1802 = vunpack.c.0.s8 %v1801
    %v1803 = vlaneseq
    %v1804 = vshrl.u32 %v1803, 7
    %v1805 = vsub.s32 %v1802, %v1804
    %v1806 = vrot.slane %v1784, %v1805
    %v1808 = vunpack.c.l.s4 1966171168
    %v1809 = vunpack.c.0.s8 %v1808
    %v1810 = vlaneseq
    %v1811 = vshrl.u32 %v1810, 7
    %v1812 = vsub.s32 %v1809, %v1811
    %v1813 = vrot.slane %v1785, %v1812
    %v1814 = vcombine.high %v1792, %v1792
    %v1815 = vcombine.high %v1799, %v1799
    %v1816 = vcombine.high %v1806, %v1806
    %v1817 = vcombine.high %v1813, %v1813
    %v1818 = vcombine.high %v1226, %v1226
    %v1820 = vunpack.c.l.s4 1966171168
    %v1821 = vunpack.c.0.s8 %v1820
    %v1822 = vlaneseq
    %v1823 = vshrl.u32 %v1822, 7
    %v1824 = vsub.s32 %v1821, %v1823
    %v1825 = vrot.slane %v1226, %v1824
    %v1827 = vunpack.c.l.s4 1966171168
    %v1828 = vunpack.c.0.s8 %v1827
    %v1829 = vlaneseq
    %v1830 = vshrl.u32 %v1829, 7
    %v1831 = vsub.s32 %v1828, %v1830
    %v1832 = vrot.slane %v1818, %v1831
    %v1833 = vcombine.high %v1825, %v1825
    %v1834 = vcombine.high %v1832, %v1832
    %v1836 = vunpack.c.l.s4 1966171168
    %v1837 = vunpack.c.0.s8 %v1836
    %v1838 = vlaneseq
    %v1839 = vshrl.u32 %v1838, 7
    %v1840 = vsub.s32 %v1837, %v1839
    %v1841 = vrot.slane %v1825, %v1840
    %v1843 = vunpack.c.l.s4 1966171168
    %v1844 = vunpack.c.0.s8 %v1843
    %v1845 = vlaneseq
    %v1846 = vshrl.u32 %v1845, 7
    %v1847 = vsub.s32 %v1844, %v1846
    %v1848 = vrot.slane %v1832, %v1847
    %v1850 = vunpack.c.l.s4 1966171168
    %v1851 = vunpack.c.0.s8 %v1850
    %v1852 = vlaneseq
    %v1853 = vshrl.u32 %v1852, 7
    %v1854 = vsub.s32 %v1851, %v1853
    %v1855 = vrot.slane %v1833, %v1854
    %v1857 = vunpack.c.l.s4 1966171168
    %v1858 = vunpack.c.0.s8 %v1857
    %v1859 = vlaneseq
    %v1860 = vshrl.u32 %v1859, 7
    %v1861 = vsub.s32 %v1858, %v1860
    %v1862 = vrot.slane %v1834, %v1861
    %v1863 = vcombine.high %v1841, %v1841
    %v1864 = vcombine.high %v1848, %v1848
    %v1865 = vcombine.high %v1855, %v1855
    %v1866 = vcombine.high %v1862, %v1862
    %v1867 = vcombine.high %v1227, %v1227
    %v1869 = vunpack.c.l.s4 1966171168
    %v1870 = vunpack.c.0.s8 %v1869
    %v1871 = vlaneseq
    %v1872 = vshrl.u32 %v1871, 7
    %v1873 = vsub.s32 %v1870, %v1872
    %v1874 = vrot.slane %v1227, %v1873
    %v1876 = vunpack.c.l.s4 1966171168
    %v1877 = vunpack.c.0.s8 %v1876
    %v1878 = vlaneseq
    %v1879 = vshrl.u32 %v1878, 7
    %v1880 = vsub.s32 %v1877, %v1879
    %v1881 = vrot.slane %v1867, %v1880
    %v1882 = vcombine.high %v1874, %v1874
    %v1883 = vcombine.high %v1881, %v1881
    %v1885 = vunpack.c.l.s4 1966171168
    %v1886 = vunpack.c.0.s8 %v1885
    %v1887 = vlaneseq
    %v1888 = vshrl.u32 %v1887, 7
    %v1889 = vsub.s32 %v1886, %v1888
    %v1890 = vrot.slane %v1874, %v1889
    %v1892 = vunpack.c.l.s4 1966171168
    %v1893 = vunpack.c.0.s8 %v1892
    %v1894 = vlaneseq
    %v1895 = vshrl.u32 %v1894, 7
    %v1896 = vsub.s32 %v1893, %v1895
    %v1897 = vrot.slane %v1881, %v1896
    %v1899 = vunpack.c.l.s4 1966171168
    %v1900 = vunpack.c.0.s8 %v1899
    %v1901 = vlaneseq
    %v1902 = vshrl.u32 %v1901, 7
    %v1903 = vsub.s32 %v1900, %v1902
    %v1904 = vrot.slane %v1882, %v1903
    %v1906 = vunpack.c.l.s4 1966171168
    %v1907 = vunpack.c.0.s8 %v1906
    %v1908 = vlaneseq
    %v1909 = vshrl.u32 %v1908, 7
    %v1910 = vsub.s32 %v1907, %v1909
    %v1911 = vrot.slane %v1883, %v1910
    %v1912 = vcombine.high %v1890, %v1890
    %v1913 = vcombine.high %v1897, %v1897
    %v1914 = vcombine.high %v1904, %v1904
    %v1915 = vcombine.high %v1911, %v1911
    %v1916 = vcombine.high %v1228, %v1228
    %v1918 = vunpack.c.l.s4 1966171168
    %v1919 = vunpack.c.0.s8 %v1918
    %v1920 = vlaneseq
    %v1921 = vshrl.u32 %v1920, 7
    %v1922 = vsub.s32 %v1919, %v1921
    %v1923 = vrot.slane %v1228, %v1922
    %v1925 = vunpack.c.l.s4 1966171168
    %v1926 = vunpack.c.0.s8 %v1925
    %v1927 = vlaneseq
    %v1928 = vshrl.u32 %v1927, 7
    %v1929 = vsub.s32 %v1926, %v1928
    %v1930 = vrot.slane %v1916, %v1929
    %v1931 = vcombine.high %v1923, %v1923
    %v1932 = vcombine.high %v1930, %v1930
    %v1934 = vunpack.c.l.s4 1966171168
    %v1935 = vunpack.c.0.s8 %v1934
    %v1936 = vlaneseq
    %v1937 = vshrl.u32 %v1936, 7
    %v1938 = vsub.s32 %v1935, %v1937
    %v1939 = vrot.slane %v1923, %v1938
    %v1941 = vunpack.c.l.s4 1966171168
    %v1942 = vunpack.c.0.s8 %v1941
    %v1943 = vlaneseq
    %v1944 = vshrl.u32 %v1943, 7
    %v1945 = vsub.s32 %v1942, %v1944
    %v1946 = vrot.slane %v1930, %v1945
    %v1948 = vunpack.c.l.s4 1966171168
    %v1949 = vunpack.c.0.s8 %v1948
    %v1950 = vlaneseq
    %v1951 = vshrl.u32 %v1950, 7
    %v1952 = vsub.s32 %v1949, %v1951
    %v1953 = vrot.slane %v1931, %v1952
    %v1955 = vunpack.c.l.s4 1966171168
    %v1956 = vunpack.c.0.s8 %v1955
    %v1957 = vlaneseq
    %v1958 = vshrl.u32 %v1957, 7
    %v1959 = vsub.s32 %v1956, %v1958
    %v1960 = vrot.slane %v1932, %v1959
    %v1961 = vcombine.high %v1939, %v1939
    %v1962 = vcombine.high %v1946, %v1946
    %v1963 = vcombine.high %v1953, %v1953
    %v1964 = vcombine.high %v1960, %v1960
    %v1965 = vcombine.high %v1229, %v1229
    %v1967 = vunpack.c.l.s4 1966171168
    %v1968 = vunpack.c.0.s8 %v1967
    %v1969 = vlaneseq
    %v1970 = vshrl.u32 %v1969, 7
    %v1971 = vsub.s32 %v1968, %v1970
    %v1972 = vrot.slane %v1229, %v1971
    %v1974 = vunpack.c.l.s4 1966171168
    %v1975 = vunpack.c.0.s8 %v1974
    %v1976 = vlaneseq
    %v1977 = vshrl.u32 %v1976, 7
    %v1978 = vsub.s32 %v1975, %v1977
    %v1979 = vrot.slane %v1965, %v1978
    %v1980 = vcombine.high %v1972, %v1972
    %v1981 = vcombine.high %v1979, %v1979
    %v1983 = vunpack.c.l.s4 1966171168
    %v1984 = vunpack.c.0.s8 %v1983
    %v1985 = vlaneseq
    %v1986 = vshrl.u32 %v1985, 7
    %v1987 = vsub.s32 %v1984, %v1986
    %v1988 = vrot.slane %v1972, %v1987
    %v1990 = vunpack.c.l.s4 1966171168
    %v1991 = vunpack.c.0.s8 %v1990
    %v1992 = vlaneseq
    %v1993 = vshrl.u32 %v1992, 7
    %v1994 = vsub.s32 %v1991, %v1993
    %v1995 = vrot.slane %v1979, %v1994
    %v1997 = vunpack.c.l.s4 1966171168
    %v1998 = vunpack.c.0.s8 %v1997
    %v1999 = vlaneseq
    %v2000 = vshrl.u32 %v1999, 7
    %v2001 = vsub.s32 %v1998, %v2000
    %v2002 = vrot.slane %v1980, %v2001
    %v2004 = vunpack.c.l.s4 1966171168
    %v2005 = vunpack.c.0.s8 %v2004
    %v2006 = vlaneseq
    %v2007 = vshrl.u32 %v2006, 7
    %v2008 = vsub.s32 %v2005, %v2007
    %v2009 = vrot.slane %v1981, %v2008
    %v2010 = vcombine.high %v1988, %v1988
    %v2011 = vcombine.high %v1995, %v1995
    %v2012 = vcombine.high %v2002, %v2002
    %v2013 = vcombine.high %v2009, %v2009
    %v2014 = vcombine.high %v1230, %v1230
    %v2016 = vunpack.c.l.s4 1966171168
    %v2017 = vunpack.c.0.s8 %v2016
    %v2018 = vlaneseq
    %v2019 = vshrl.u32 %v2018, 7
    %v2020 = vsub.s32 %v2017, %v2019
    %v2021 = vrot.slane %v1230, %v2020
    %v2023 = vunpack.c.l.s4 1966171168
    %v2024 = vunpack.c.0.s8 %v2023
    %v2025 = vlaneseq
    %v2026 = vshrl.u32 %v2025, 7
    %v2027 = vsub.s32 %v2024, %v2026
    %v2028 = vrot.slane %v2014, %v2027
    %v2029 = vcombine.high %v2021, %v2021
    %v2030 = vcombine.high %v2028, %v2028
    %v2032 = vunpack.c.l.s4 1966171168
    %v2033 = vunpack.c.0.s8 %v2032
    %v2034 = vlaneseq
    %v2035 = vshrl.u32 %v2034, 7
    %v2036 = vsub.s32 %v2033, %v2035
    %v2037 = vrot.slane %v2021, %v2036
    %v2039 = vunpack.c.l.s4 1966171168
    %v2040 = vunpack.c.0.s8 %v2039
    %v2041 = vlaneseq
    %v2042 = vshrl.u32 %v2041, 7
    %v2043 = vsub.s32 %v2040, %v2042
    %v2044 = vrot.slane %v2028, %v2043
    %v2046 = vunpack.c.l.s4 1966171168
    %v2047 = vunpack.c.0.s8 %v2046
    %v2048 = vlaneseq
    %v2049 = vshrl.u32 %v2048, 7
    %v2050 = vsub.s32 %v2047, %v2049
    %v2051 = vrot.slane %v2029, %v2050
    %v2053 = vunpack.c.l.s4 1966171168
    %v2054 = vunpack.c.0.s8 %v2053
    %v2055 = vlaneseq
    %v2056 = vshrl.u32 %v2055, 7
    %v2057 = vsub.s32 %v2054, %v2056
    %v2058 = vrot.slane %v2030, %v2057
    %v2059 = vcombine.high %v2037, %v2037
    %v2060 = vcombine.high %v2044, %v2044
    %v2061 = vcombine.high %v2051, %v2051
    %v2062 = vcombine.high %v2058, %v2058
    %v2063 = vcombine.high %v1231, %v1231
    %v2065 = vunpack.c.l.s4 1966171168
    %v2066 = vunpack.c.0.s8 %v2065
    %v2067 = vlaneseq
    %v2068 = vshrl.u32 %v2067, 7
    %v2069 = vsub.s32 %v2066, %v2068
    %v2070 = vrot.slane %v1231, %v2069
    %v2072 = vunpack.c.l.s4 1966171168
    %v2073 = vunpack.c.0.s8 %v2072
    %v2074 = vlaneseq
    %v2075 = vshrl.u32 %v2074, 7
    %v2076 = vsub.s32 %v2073, %v2075
    %v2077 = vrot.slane %v2063, %v2076
    %v2078 = vcombine.high %v2070, %v2070
    %v2079 = vcombine.high %v2077, %v2077
    %v2081 = vunpack.c.l.s4 1966171168
    %v2082 = vunpack.c.0.s8 %v2081
    %v2083 = vlaneseq
    %v2084 = vshrl.u32 %v2083, 7
    %v2085 = vsub.s32 %v2082, %v2084
    %v2086 = vrot.slane %v2070, %v2085
    %v2088 = vunpack.c.l.s4 1966171168
    %v2089 = vunpack.c.0.s8 %v2088
    %v2090 = vlaneseq
    %v2091 = vshrl.u32 %v2090, 7
    %v2092 = vsub.s32 %v2089, %v2091
    %v2093 = vrot.slane %v2077, %v2092
    %v2095 = vunpack.c.l.s4 1966171168
    %v2096 = vunpack.c.0.s8 %v2095
    %v2097 = vlaneseq
    %v2098 = vshrl.u32 %v2097, 7
    %v2099 = vsub.s32 %v2096, %v2098
    %v2100 = vrot.slane %v2078, %v2099
    %v2102 = vunpack.c.l.s4 1966171168
    %v2103 = vunpack.c.0.s8 %v2102
    %v2104 = vlaneseq
    %v2105 = vshrl.u32 %v2104, 7
    %v2106 = vsub.s32 %v2103, %v2105
    %v2107 = vrot.slane %v2079, %v2106
    %v2108 = vcombine.high %v2086, %v2086
    %v2109 = vcombine.high %v2093, %v2093
    %v2110 = vcombine.high %v2100, %v2100
    %v2111 = vcombine.high %v2107, %v2107
    %v2112 = vcombine.high %v1232, %v1232
    %v2114 = vunpack.c.l.s4 1966171168
    %v2115 = vunpack.c.0.s8 %v2114
    %v2116 = vlaneseq
    %v2117 = vshrl.u32 %v2116, 7
    %v2118 = vsub.s32 %v2115, %v2117
    %v2119 = vrot.slane %v1232, %v2118
    %v2121 = vunpack.c.l.s4 1966171168
    %v2122 = vunpack.c.0.s8 %v2121
    %v2123 = vlaneseq
    %v2124 = vshrl.u32 %v2123, 7
    %v2125 = vsub.s32 %v2122, %v2124
    %v2126 = vrot.slane %v2112, %v2125
    %v2127 = vcombine.high %v2119, %v2119
    %v2128 = vcombine.high %v2126, %v2126
    %v2130 = vunpack.c.l.s4 1966171168
    %v2131 = vunpack.c.0.s8 %v2130
    %v2132 = vlaneseq
    %v2133 = vshrl.u32 %v2132, 7
    %v2134 = vsub.s32 %v2131, %v2133
    %v2135 = vrot.slane %v2119, %v2134
    %v2137 = vunpack.c.l.s4 1966171168
    %v2138 = vunpack.c.0.s8 %v2137
    %v2139 = vlaneseq
    %v2140 = vshrl.u32 %v2139, 7
    %v2141 = vsub.s32 %v2138, %v2140
    %v2142 = vrot.slane %v2126, %v2141
    %v2144 = vunpack.c.l.s4 1966171168
    %v2145 = vunpack.c.0.s8 %v2144
    %v2146 = vlaneseq
    %v2147 = vshrl.u32 %v2146, 7
    %v2148 = vsub.s32 %v2145, %v2147
    %v2149 = vrot.slane %v2127, %v2148
    %v2151 = vunpack.c.l.s4 1966171168
    %v2152 = vunpack.c.0.s8 %v2151
    %v2153 = vlaneseq
    %v2154 = vshrl.u32 %v2153, 7
    %v2155 = vsub.s32 %v2152, %v2154
    %v2156 = vrot.slane %v2128, %v2155
    %v2157 = vcombine.high %v2135, %v2135
    %v2158 = vcombine.high %v2142, %v2142
    %v2159 = vcombine.high %v2149, %v2149
    %v2160 = vcombine.high %v2156, %v2156
    %v2161 = vcombine.high %v1233, %v1233
    %v2163 = vunpack.c.l.s4 1966171168
    %v2164 = vunpack.c.0.s8 %v2163
    %v2165 = vlaneseq
    %v2166 = vshrl.u32 %v2165, 7
    %v2167 = vsub.s32 %v2164, %v2166
    %v2168 = vrot.slane %v1233, %v2167
    %v2170 = vunpack.c.l.s4 1966171168
    %v2171 = vunpack.c.0.s8 %v2170
    %v2172 = vlaneseq
    %v2173 = vshrl.u32 %v2172, 7
    %v2174 = vsub.s32 %v2171, %v2173
    %v2175 = vrot.slane %v2161, %v2174
    %v2176 = vcombine.high %v2168, %v2168
    %v2177 = vcombine.high %v2175, %v2175
    %v2179 = vunpack.c.l.s4 1966171168
    %v2180 = vunpack.c.0.s8 %v2179
    %v2181 = vlaneseq
    %v2182 = vshrl.u32 %v2181, 7
    %v2183 = vsub.s32 %v2180, %v2182
    %v2184 = vrot.slane %v2168, %v2183
    %v2186 = vunpack.c.l.s4 1966171168
    %v2187 = vunpack.c.0.s8 %v2186
    %v2188 = vlaneseq
    %v2189 = vshrl.u32 %v2188, 7
    %v2190 = vsub.s32 %v2187, %v2189
    %v2191 = vrot.slane %v2175, %v2190
    %v2193 = vunpack.c.l.s4 1966171168
    %v2194 = vunpack.c.0.s8 %v2193
    %v2195 = vlaneseq
    %v2196 = vshrl.u32 %v2195, 7
    %v2197 = vsub.s32 %v2194, %v2196
    %v2198 = vrot.slane %v2176, %v2197
    %v2200 = vunpack.c.l.s4 1966171168
    %v2201 = vunpack.c.0.s8 %v2200
    %v2202 = vlaneseq
    %v2203 = vshrl.u32 %v2202, 7
    %v2204 = vsub.s32 %v2201, %v2203
    %v2205 = vrot.slane %v2177, %v2204
    %v2206 = vcombine.high %v2184, %v2184
    %v2207 = vcombine.high %v2191, %v2191
    %v2208 = vcombine.high %v2198, %v2198
    %v2209 = vcombine.high %v2205, %v2205
    %v2210 = vcombine.high %v1234, %v1234
    %v2212 = vunpack.c.l.s4 1966171168
    %v2213 = vunpack.c.0.s8 %v2212
    %v2214 = vlaneseq
    %v2215 = vshrl.u32 %v2214, 7
    %v2216 = vsub.s32 %v2213, %v2215
    %v2217 = vrot.slane %v1234, %v2216
    %v2219 = vunpack.c.l.s4 1966171168
    %v2220 = vunpack.c.0.s8 %v2219
    %v2221 = vlaneseq
    %v2222 = vshrl.u32 %v2221, 7
    %v2223 = vsub.s32 %v2220, %v2222
    %v2224 = vrot.slane %v2210, %v2223
    %v2225 = vcombine.high %v2217, %v2217
    %v2226 = vcombine.high %v2224, %v2224
    %v2228 = vunpack.c.l.s4 1966171168
    %v2229 = vunpack.c.0.s8 %v2228
    %v2230 = vlaneseq
    %v2231 = vshrl.u32 %v2230, 7
    %v2232 = vsub.s32 %v2229, %v2231
    %v2233 = vrot.slane %v2217, %v2232
    %v2235 = vunpack.c.l.s4 1966171168
    %v2236 = vunpack.c.0.s8 %v2235
    %v2237 = vlaneseq
    %v2238 = vshrl.u32 %v2237, 7
    %v2239 = vsub.s32 %v2236, %v2238
    %v2240 = vrot.slane %v2224, %v2239
    %v2242 = vunpack.c.l.s4 1966171168
    %v2243 = vunpack.c.0.s8 %v2242
    %v2244 = vlaneseq
    %v2245 = vshrl.u32 %v2244, 7
    %v2246 = vsub.s32 %v2243, %v2245
    %v2247 = vrot.slane %v2225, %v2246
    %v2249 = vunpack.c.l.s4 1966171168
    %v2250 = vunpack.c.0.s8 %v2249
    %v2251 = vlaneseq
    %v2252 = vshrl.u32 %v2251, 7
    %v2253 = vsub.s32 %v2250, %v2252
    %v2254 = vrot.slane %v2226, %v2253
    %v2255 = vcombine.high %v2233, %v2233
    %v2256 = vcombine.high %v2240, %v2240
    %v2257 = vcombine.high %v2247, %v2247
    %v2258 = vcombine.high %v2254, %v2254
    %v2259 = vcombine.high %v1235, %v1235
    %v2261 = vunpack.c.l.s4 1966171168
    %v2262 = vunpack.c.0.s8 %v2261
    %v2263 = vlaneseq
    %v2264 = vshrl.u32 %v2263, 7
    %v2265 = vsub.s32 %v2262, %v2264
    %v2266 = vrot.slane %v1235, %v2265
    %v2268 = vunpack.c.l.s4 1966171168
    %v2269 = vunpack.c.0.s8 %v2268
    %v2270 = vlaneseq
    %v2271 = vshrl.u32 %v2270, 7
    %v2272 = vsub.s32 %v2269, %v2271
    %v2273 = vrot.slane %v2259, %v2272
    %v2274 = vcombine.high %v2266, %v2266
    %v2275 = vcombine.high %v2273, %v2273
    %v2277 = vunpack.c.l.s4 1966171168
    %v2278 = vunpack.c.0.s8 %v2277
    %v2279 = vlaneseq
    %v2280 = vshrl.u32 %v2279, 7
    %v2281 = vsub.s32 %v2278, %v2280
    %v2282 = vrot.slane %v2266, %v2281
    %v2284 = vunpack.c.l.s4 1966171168
    %v2285 = vunpack.c.0.s8 %v2284
    %v2286 = vlaneseq
    %v2287 = vshrl.u32 %v2286, 7
    %v2288 = vsub.s32 %v2285, %v2287
    %v2289 = vrot.slane %v2273, %v2288
    %v2291 = vunpack.c.l.s4 1966171168
    %v2292 = vunpack.c.0.s8 %v2291
    %v2293 = vlaneseq
    %v2294 = vshrl.u32 %v2293, 7
    %v2295 = vsub.s32 %v2292, %v2294
    %v2296 = vrot.slane %v2274, %v2295
    %v2298 = vunpack.c.l.s4 1966171168
    %v2299 = vunpack.c.0.s8 %v2298
    %v2300 = vlaneseq
    %v2301 = vshrl.u32 %v2300, 7
    %v2302 = vsub.s32 %v2299, %v2301
    %v2303 = vrot.slane %v2275, %v2302
    %v2304 = vcombine.high %v2282, %v2282
    %v2305 = vcombine.high %v2289, %v2289
    %v2306 = vcombine.high %v2296, %v2296
    %v2307 = vcombine.high %v2303, %v2303
    %v2308 = vcombine.high %v1236, %v1236
    %v2310 = vunpack.c.l.s4 1966171168
    %v2311 = vunpack.c.0.s8 %v2310
    %v2312 = vlaneseq
    %v2313 = vshrl.u32 %v2312, 7
    %v2314 = vsub.s32 %v2311, %v2313
    %v2315 = vrot.slane %v1236, %v2314
    %v2317 = vunpack.c.l.s4 1966171168
    %v2318 = vunpack.c.0.s8 %v2317
    %v2319 = vlaneseq
    %v2320 = vshrl.u32 %v2319, 7
    %v2321 = vsub.s32 %v2318, %v2320
    %v2322 = vrot.slane %v2308, %v2321
    %v2323 = vcombine.high %v2315, %v2315
    %v2324 = vcombine.high %v2322, %v2322
    %v2326 = vunpack.c.l.s4 1966171168
    %v2327 = vunpack.c.0.s8 %v2326
    %v2328 = vlaneseq
    %v2329 = vshrl.u32 %v2328, 7
    %v2330 = vsub.s32 %v2327, %v2329
    %v2331 = vrot.slane %v2315, %v2330
    %v2333 = vunpack.c.l.s4 1966171168
    %v2334 = vunpack.c.0.s8 %v2333
    %v2335 = vlaneseq
    %v2336 = vshrl.u32 %v2335, 7
    %v2337 = vsub.s32 %v2334, %v2336
    %v2338 = vrot.slane %v2322, %v2337
    %v2340 = vunpack.c.l.s4 1966171168
    %v2341 = vunpack.c.0.s8 %v2340
    %v2342 = vlaneseq
    %v2343 = vshrl.u32 %v2342, 7
    %v2344 = vsub.s32 %v2341, %v2343
    %v2345 = vrot.slane %v2323, %v2344
    %v2347 = vunpack.c.l.s4 1966171168
    %v2348 = vunpack.c.0.s8 %v2347
    %v2349 = vlaneseq
    %v2350 = vshrl.u32 %v2349, 7
    %v2351 = vsub.s32 %v2348, %v2350
    %v2352 = vrot.slane %v2324, %v2351
    %v2353 = vcombine.high %v2331, %v2331
    %v2354 = vcombine.high %v2338, %v2338
    %v2355 = vcombine.high %v2345, %v2345
    %v2356 = vcombine.high %v2352, %v2352
    %v2357 = vcombine.high %v1237, %v1237
    %v2359 = vunpack.c.l.s4 1966171168
    %v2360 = vunpack.c.0.s8 %v2359
    %v2361 = vlaneseq
    %v2362 = vshrl.u32 %v2361, 7
    %v2363 = vsub.s32 %v2360, %v2362
    %v2364 = vrot.slane %v1237, %v2363
    %v2366 = vunpack.c.l.s4 1966171168
    %v2367 = vunpack.c.0.s8 %v2366
    %v2368 = vlaneseq
    %v2369 = vshrl.u32 %v2368, 7
    %v2370 = vsub.s32 %v2367, %v2369
    %v2371 = vrot.slane %v2357, %v2370
    %v2372 = vcombine.high %v2364, %v2364
    %v2373 = vcombine.high %v2371, %v2371
    %v2375 = vunpack.c.l.s4 1966171168
    %v2376 = vunpack.c.0.s8 %v2375
    %v2377 = vlaneseq
    %v2378 = vshrl.u32 %v2377, 7
    %v2379 = vsub.s32 %v2376, %v2378
    %v2380 = vrot.slane %v2364, %v2379
    %v2382 = vunpack.c.l.s4 1966171168
    %v2383 = vunpack.c.0.s8 %v2382
    %v2384 = vlaneseq
    %v2385 = vshrl.u32 %v2384, 7
    %v2386 = vsub.s32 %v2383, %v2385
    %v2387 = vrot.slane %v2371, %v2386
    %v2389 = vunpack.c.l.s4 1966171168
    %v2390 = vunpack.c.0.s8 %v2389
    %v2391 = vlaneseq
    %v2392 = vshrl.u32 %v2391, 7
    %v2393 = vsub.s32 %v2390, %v2392
    %v2394 = vrot.slane %v2372, %v2393
    %v2396 = vunpack.c.l.s4 1966171168
    %v2397 = vunpack.c.0.s8 %v2396
    %v2398 = vlaneseq
    %v2399 = vshrl.u32 %v2398, 7
    %v2400 = vsub.s32 %v2397, %v2399
    %v2401 = vrot.slane %v2373, %v2400
    %v2402 = vcombine.high %v2380, %v2380
    %v2403 = vcombine.high %v2387, %v2387
    %v2404 = vcombine.high %v2394, %v2394
    %v2405 = vcombine.high %v2401, %v2401
    %v2406 = vcombine.high %v1238, %v1238
    %v2408 = vunpack.c.l.s4 1966171168
    %v2409 = vunpack.c.0.s8 %v2408
    %v2410 = vlaneseq
    %v2411 = vshrl.u32 %v2410, 7
    %v2412 = vsub.s32 %v2409, %v2411
    %v2413 = vrot.slane %v1238, %v2412
    %v2415 = vunpack.c.l.s4 1966171168
    %v2416 = vunpack.c.0.s8 %v2415
    %v2417 = vlaneseq
    %v2418 = vshrl.u32 %v2417, 7
    %v2419 = vsub.s32 %v2416, %v2418
    %v2420 = vrot.slane %v2406, %v2419
    %v2421 = vcombine.high %v2413, %v2413
    %v2422 = vcombine.high %v2420, %v2420
    %v2424 = vunpack.c.l.s4 1966171168
    %v2425 = vunpack.c.0.s8 %v2424
    %v2426 = vlaneseq
    %v2427 = vshrl.u32 %v2426, 7
    %v2428 = vsub.s32 %v2425, %v2427
    %v2429 = vrot.slane %v2413, %v2428
    %v2431 = vunpack.c.l.s4 1966171168
    %v2432 = vunpack.c.0.s8 %v2431
    %v2433 = vlaneseq
    %v2434 = vshrl.u32 %v2433, 7
    %v2435 = vsub.s32 %v2432, %v2434
    %v2436 = vrot.slane %v2420, %v2435
    %v2438 = vunpack.c.l.s4 1966171168
    %v2439 = vunpack.c.0.s8 %v2438
    %v2440 = vlaneseq
    %v2441 = vshrl.u32 %v2440, 7
    %v2442 = vsub.s32 %v2439, %v2441
    %v2443 = vrot.slane %v2421, %v2442
    %v2445 = vunpack.c.l.s4 1966171168
    %v2446 = vunpack.c.0.s8 %v2445
    %v2447 = vlaneseq
    %v2448 = vshrl.u32 %v2447, 7
    %v2449 = vsub.s32 %v2446, %v2448
    %v2450 = vrot.slane %v2422, %v2449
    %v2451 = vcombine.high %v2429, %v2429
    %v2452 = vcombine.high %v2436, %v2436
    %v2453 = vcombine.high %v2443, %v2443
    %v2454 = vcombine.high %v2450, %v2450
    %v2455 = vcombine.high %v1239, %v1239
    %v2457 = vunpack.c.l.s4 1966171168
    %v2458 = vunpack.c.0.s8 %v2457
    %v2459 = vlaneseq
    %v2460 = vshrl.u32 %v2459, 7
    %v2461 = vsub.s32 %v2458, %v2460
    %v2462 = vrot.slane %v1239, %v2461
    %v2464 = vunpack.c.l.s4 1966171168
    %v2465 = vunpack.c.0.s8 %v2464
    %v2466 = vlaneseq
    %v2467 = vshrl.u32 %v2466, 7
    %v2468 = vsub.s32 %v2465, %v2467
    %v2469 = vrot.slane %v2455, %v2468
    %v2470 = vcombine.high %v2462, %v2462
    %v2471 = vcombine.high %v2469, %v2469
    %v2473 = vunpack.c.l.s4 1966171168
    %v2474 = vunpack.c.0.s8 %v2473
    %v2475 = vlaneseq
    %v2476 = vshrl.u32 %v2475, 7
    %v2477 = vsub.s32 %v2474, %v2476
    %v2478 = vrot.slane %v2462, %v2477
    %v2480 = vunpack.c.l.s4 1966171168
    %v2481 = vunpack.c.0.s8 %v2480
    %v2482 = vlaneseq
    %v2483 = vshrl.u32 %v2482, 7
    %v2484 = vsub.s32 %v2481, %v2483
    %v2485 = vrot.slane %v2469, %v2484
    %v2487 = vunpack.c.l.s4 1966171168
    %v2488 = vunpack.c.0.s8 %v2487
    %v2489 = vlaneseq
    %v2490 = vshrl.u32 %v2489, 7
    %v2491 = vsub.s32 %v2488, %v2490
    %v2492 = vrot.slane %v2470, %v2491
    %v2494 = vunpack.c.l.s4 1966171168
    %v2495 = vunpack.c.0.s8 %v2494
    %v2496 = vlaneseq
    %v2497 = vshrl.u32 %v2496, 7
    %v2498 = vsub.s32 %v2495, %v2497
    %v2499 = vrot.slane %v2471, %v2498
    %v2500 = vcombine.high %v2478, %v2478
    %v2501 = vcombine.high %v2485, %v2485
    %v2502 = vcombine.high %v2492, %v2492
    %v2503 = vcombine.high %v2499, %v2499
    %v2504 = vcombine.high %v1240, %v1240
    %v2506 = vunpack.c.l.s4 1966171168
    %v2507 = vunpack.c.0.s8 %v2506
    %v2508 = vlaneseq
    %v2509 = vshrl.u32 %v2508, 7
    %v2510 = vsub.s32 %v2507, %v2509
    %v2511 = vrot.slane %v1240, %v2510
    %v2513 = vunpack.c.l.s4 1966171168
    %v2514 = vunpack.c.0.s8 %v2513
    %v2515 = vlaneseq
    %v2516 = vshrl.u32 %v2515, 7
    %v2517 = vsub.s32 %v2514, %v2516
    %v2518 = vrot.slane %v2504, %v2517
    %v2519 = vcombine.high %v2511, %v2511
    %v2520 = vcombine.high %v2518, %v2518
    %v2522 = vunpack.c.l.s4 1966171168
    %v2523 = vunpack.c.0.s8 %v2522
    %v2524 = vlaneseq
    %v2525 = vshrl.u32 %v2524, 7
    %v2526 = vsub.s32 %v2523, %v2525
    %v2527 = vrot.slane %v2511, %v2526
    %v2529 = vunpack.c.l.s4 1966171168
    %v2530 = vunpack.c.0.s8 %v2529
    %v2531 = vlaneseq
    %v2532 = vshrl.u32 %v2531, 7
    %v2533 = vsub.s32 %v2530, %v2532
    %v2534 = vrot.slane %v2518, %v2533
    %v2536 = vunpack.c.l.s4 1966171168
    %v2537 = vunpack.c.0.s8 %v2536
    %v2538 = vlaneseq
    %v2539 = vshrl.u32 %v2538, 7
    %v2540 = vsub.s32 %v2537, %v2539
    %v2541 = vrot.slane %v2519, %v2540
    %v2543 = vunpack.c.l.s4 1966171168
    %v2544 = vunpack.c.0.s8 %v2543
    %v2545 = vlaneseq
    %v2546 = vshrl.u32 %v2545, 7
    %v2547 = vsub.s32 %v2544, %v2546
    %v2548 = vrot.slane %v2520, %v2547
    %v2549 = vcombine.high %v2527, %v2527
    %v2550 = vcombine.high %v2534, %v2534
    %v2551 = vcombine.high %v2541, %v2541
    %v2552 = vcombine.high %v2548, %v2548
    %v2553 = vcombine.high %v1241, %v1241
    %v2555 = vunpack.c.l.s4 1966171168
    %v2556 = vunpack.c.0.s8 %v2555
    %v2557 = vlaneseq
    %v2558 = vshrl.u32 %v2557, 7
    %v2559 = vsub.s32 %v2556, %v2558
    %v2560 = vrot.slane %v1241, %v2559
    %v2562 = vunpack.c.l.s4 1966171168
    %v2563 = vunpack.c.0.s8 %v2562
    %v2564 = vlaneseq
    %v2565 = vshrl.u32 %v2564, 7
    %v2566 = vsub.s32 %v2563, %v2565
    %v2567 = vrot.slane %v2553, %v2566
    %v2568 = vcombine.high %v2560, %v2560
    %v2569 = vcombine.high %v2567, %v2567
    %v2571 = vunpack.c.l.s4 1966171168
    %v2572 = vunpack.c.0.s8 %v2571
    %v2573 = vlaneseq
    %v2574 = vshrl.u32 %v2573, 7
    %v2575 = vsub.s32 %v2572, %v2574
    %v2576 = vrot.slane %v2560, %v2575
    %v2578 = vunpack.c.l.s4 1966171168
    %v2579 = vunpack.c.0.s8 %v2578
    %v2580 = vlaneseq
    %v2581 = vshrl.u32 %v2580, 7
    %v2582 = vsub.s32 %v2579, %v2581
    %v2583 = vrot.slane %v2567, %v2582
    %v2585 = vunpack.c.l.s4 1966171168
    %v2586 = vunpack.c.0.s8 %v2585
    %v2587 = vlaneseq
    %v2588 = vshrl.u32 %v2587, 7
    %v2589 = vsub.s32 %v2586, %v2588
    %v2590 = vrot.slane %v2568, %v2589
    %v2592 = vunpack.c.l.s4 1966171168
    %v2593 = vunpack.c.0.s8 %v2592
    %v2594 = vlaneseq
    %v2595 = vshrl.u32 %v2594, 7
    %v2596 = vsub.s32 %v2593, %v2595
    %v2597 = vrot.slane %v2569, %v2596
    %v2598 = vcombine.high %v2576, %v2576
    %v2599 = vcombine.high %v2583, %v2583
    %v2600 = vcombine.high %v2590, %v2590
    %v2601 = vcombine.high %v2597, %v2597
    %v2602 = vcombine.high %v1242, %v1242
    %v2604 = vunpack.c.l.s4 1966171168
    %v2605 = vunpack.c.0.s8 %v2604
    %v2606 = vlaneseq
    %v2607 = vshrl.u32 %v2606, 7
    %v2608 = vsub.s32 %v2605, %v2607
    %v2609 = vrot.slane %v1242, %v2608
    %v2611 = vunpack.c.l.s4 1966171168
    %v2612 = vunpack.c.0.s8 %v2611
    %v2613 = vlaneseq
    %v2614 = vshrl.u32 %v2613, 7
    %v2615 = vsub.s32 %v2612, %v2614
    %v2616 = vrot.slane %v2602, %v2615
    %v2617 = vcombine.high %v2609, %v2609
    %v2618 = vcombine.high %v2616, %v2616
    %v2620 = vunpack.c.l.s4 1966171168
    %v2621 = vunpack.c.0.s8 %v2620
    %v2622 = vlaneseq
    %v2623 = vshrl.u32 %v2622, 7
    %v2624 = vsub.s32 %v2621, %v2623
    %v2625 = vrot.slane %v2609, %v2624
    %v2627 = vunpack.c.l.s4 1966171168
    %v2628 = vunpack.c.0.s8 %v2627
    %v2629 = vlaneseq
    %v2630 = vshrl.u32 %v2629, 7
    %v2631 = vsub.s32 %v2628, %v2630
    %v2632 = vrot.slane %v2616, %v2631
    %v2634 = vunpack.c.l.s4 1966171168
    %v2635 = vunpack.c.0.s8 %v2634
    %v2636 = vlaneseq
    %v2637 = vshrl.u32 %v2636, 7
    %v2638 = vsub.s32 %v2635, %v2637
    %v2639 = vrot.slane %v2617, %v2638
    %v2641 = vunpack.c.l.s4 1966171168
    %v2642 = vunpack.c.0.s8 %v2641
    %v2643 = vlaneseq
    %v2644 = vshrl.u32 %v2643, 7
    %v2645 = vsub.s32 %v2642, %v2644
    %v2646 = vrot.slane %v2618, %v2645
    %v2647 = vcombine.high %v2625, %v2625
    %v2648 = vcombine.high %v2632, %v2632
    %v2649 = vcombine.high %v2639, %v2639
    %v2650 = vcombine.high %v2646, %v2646
    %v2651 = vcombine.high %v1243, %v1243
    %v2653 = vunpack.c.l.s4 1966171168
    %v2654 = vunpack.c.0.s8 %v2653
    %v2655 = vlaneseq
    %v2656 = vshrl.u32 %v2655, 7
    %v2657 = vsub.s32 %v2654, %v2656
    %v2658 = vrot.slane %v1243, %v2657
    %v2660 = vunpack.c.l.s4 1966171168
    %v2661 = vunpack.c.0.s8 %v2660
    %v2662 = vlaneseq
    %v2663 = vshrl.u32 %v2662, 7
    %v2664 = vsub.s32 %v2661, %v2663
    %v2665 = vrot.slane %v2651, %v2664
    %v2666 = vcombine.high %v2658, %v2658
    %v2667 = vcombine.high %v2665, %v2665
    %v2669 = vunpack.c.l.s4 1966171168
    %v2670 = vunpack.c.0.s8 %v2669
    %v2671 = vlaneseq
    %v2672 = vshrl.u32 %v2671, 7
    %v2673 = vsub.s32 %v2670, %v2672
    %v2674 = vrot.slane %v2658, %v2673
    %v2676 = vunpack.c.l.s4 1966171168
    %v2677 = vunpack.c.0.s8 %v2676
    %v2678 = vlaneseq
    %v2679 = vshrl.u32 %v2678, 7
    %v2680 = vsub.s32 %v2677, %v2679
    %v2681 = vrot.slane %v2665, %v2680
    %v2683 = vunpack.c.l.s4 1966171168
    %v2684 = vunpack.c.0.s8 %v2683
    %v2685 = vlaneseq
    %v2686 = vshrl.u32 %v2685, 7
    %v2687 = vsub.s32 %v2684, %v2686
    %v2688 = vrot.slane %v2666, %v2687
    %v2690 = vunpack.c.l.s4 1966171168
    %v2691 = vunpack.c.0.s8 %v2690
    %v2692 = vlaneseq
    %v2693 = vshrl.u32 %v2692, 7
    %v2694 = vsub.s32 %v2691, %v2693
    %v2695 = vrot.slane %v2667, %v2694
    %v2696 = vcombine.high %v2674, %v2674
    %v2697 = vcombine.high %v2681, %v2681
    %v2698 = vcombine.high %v2688, %v2688
    %v2699 = vcombine.high %v2695, %v2695
    %v2700 = vcombine.high %v1244, %v1244
    %v2702 = vunpack.c.l.s4 1966171168
    %v2703 = vunpack.c.0.s8 %v2702
    %v2704 = vlaneseq
    %v2705 = vshrl.u32 %v2704, 7
    %v2706 = vsub.s32 %v2703, %v2705
    %v2707 = vrot.slane %v1244, %v2706
    %v2709 = vunpack.c.l.s4 1966171168
    %v2710 = vunpack.c.0.s8 %v2709
    %v2711 = vlaneseq
    %v2712 = vshrl.u32 %v2711, 7
    %v2713 = vsub.s32 %v2710, %v2712
    %v2714 = vrot.slane %v2700, %v2713
    %v2715 = vcombine.high %v2707, %v2707
    %v2716 = vcombine.high %v2714, %v2714
    %v2718 = vunpack.c.l.s4 1966171168
    %v2719 = vunpack.c.0.s8 %v2718
    %v2720 = vlaneseq
    %v2721 = vshrl.u32 %v2720, 7
    %v2722 = vsub.s32 %v2719, %v2721
    %v2723 = vrot.slane %v2707, %v2722
    %v2725 = vunpack.c.l.s4 1966171168
    %v2726 = vunpack.c.0.s8 %v2725
    %v2727 = vlaneseq
    %v2728 = vshrl.u32 %v2727, 7
    %v2729 = vsub.s32 %v2726, %v2728
    %v2730 = vrot.slane %v2714, %v2729
    %v2732 = vunpack.c.l.s4 1966171168
    %v2733 = vunpack.c.0.s8 %v2732
    %v2734 = vlaneseq
    %v2735 = vshrl.u32 %v2734, 7
    %v2736 = vsub.s32 %v2733, %v2735
    %v2737 = vrot.slane %v2715, %v2736
    %v2739 = vunpack.c.l.s4 1966171168
    %v2740 = vunpack.c.0.s8 %v2739
    %v2741 = vlaneseq
    %v2742 = vshrl.u32 %v2741, 7
    %v2743 = vsub.s32 %v2740, %v2742
    %v2744 = vrot.slane %v2716, %v2743
    %v2745 = vcombine.high %v2723, %v2723
    %v2746 = vcombine.high %v2730, %v2730
    %v2747 = vcombine.high %v2737, %v2737
    %v2748 = vcombine.high %v2744, %v2744
    %v2749 = vcombine.high %v1245, %v1245
    %v2751 = vunpack.c.l.s4 1966171168
    %v2752 = vunpack.c.0.s8 %v2751
    %v2753 = vlaneseq
    %v2754 = vshrl.u32 %v2753, 7
    %v2755 = vsub.s32 %v2752, %v2754
    %v2756 = vrot.slane %v1245, %v2755
    %v2758 = vunpack.c.l.s4 1966171168
    %v2759 = vunpack.c.0.s8 %v2758
    %v2760 = vlaneseq
    %v2761 = vshrl.u32 %v2760, 7
    %v2762 = vsub.s32 %v2759, %v2761
    %v2763 = vrot.slane %v2749, %v2762
    %v2764 = vcombine.high %v2756, %v2756
    %v2765 = vcombine.high %v2763, %v2763
    %v2767 = vunpack.c.l.s4 1966171168
    %v2768 = vunpack.c.0.s8 %v2767
    %v2769 = vlaneseq
    %v2770 = vshrl.u32 %v2769, 7
    %v2771 = vsub.s32 %v2768, %v2770
    %v2772 = vrot.slane %v2756, %v2771
    %v2774 = vunpack.c.l.s4 1966171168
    %v2775 = vunpack.c.0.s8 %v2774
    %v2776 = vlaneseq
    %v2777 = vshrl.u32 %v2776, 7
    %v2778 = vsub.s32 %v2775, %v2777
    %v2779 = vrot.slane %v2763, %v2778
    %v2781 = vunpack.c.l.s4 1966171168
    %v2782 = vunpack.c.0.s8 %v2781
    %v2783 = vlaneseq
    %v2784 = vshrl.u32 %v2783, 7
    %v2785 = vsub.s32 %v2782, %v2784
    %v2786 = vrot.slane %v2764, %v2785
    %v2788 = vunpack.c.l.s4 1966171168
    %v2789 = vunpack.c.0.s8 %v2788
    %v2790 = vlaneseq
    %v2791 = vshrl.u32 %v2790, 7
    %v2792 = vsub.s32 %v2789, %v2791
    %v2793 = vrot.slane %v2765, %v2792
    %v2794 = vcombine.high %v2772, %v2772
    %v2795 = vcombine.high %v2779, %v2779
    %v2796 = vcombine.high %v2786, %v2786
    %v2797 = vcombine.high %v2793, %v2793
    %v2798 = vcombine.high %v1246, %v1246
    %v2800 = vunpack.c.l.s4 1966171168
    %v2801 = vunpack.c.0.s8 %v2800
    %v2802 = vlaneseq
    %v2803 = vshrl.u32 %v2802, 7
    %v2804 = vsub.s32 %v2801, %v2803
    %v2805 = vrot.slane %v1246, %v2804
    %v2807 = vunpack.c.l.s4 1966171168
    %v2808 = vunpack.c.0.s8 %v2807
    %v2809 = vlaneseq
    %v2810 = vshrl.u32 %v2809, 7
    %v2811 = vsub.s32 %v2808, %v2810
    %v2812 = vrot.slane %v2798, %v2811
    %v2813 = vcombine.high %v2805, %v2805
    %v2814 = vcombine.high %v2812, %v2812
    %v2816 = vunpack.c.l.s4 1966171168
    %v2817 = vunpack.c.0.s8 %v2816
    %v2818 = vlaneseq
    %v2819 = vshrl.u32 %v2818, 7
    %v2820 = vsub.s32 %v2817, %v2819
    %v2821 = vrot.slane %v2805, %v2820
    %v2823 = vunpack.c.l.s4 1966171168
    %v2824 = vunpack.c.0.s8 %v2823
    %v2825 = vlaneseq
    %v2826 = vshrl.u32 %v2825, 7
    %v2827 = vsub.s32 %v2824, %v2826
    %v2828 = vrot.slane %v2812, %v2827
    %v2830 = vunpack.c.l.s4 1966171168
    %v2831 = vunpack.c.0.s8 %v2830
    %v2832 = vlaneseq
    %v2833 = vshrl.u32 %v2832, 7
    %v2834 = vsub.s32 %v2831, %v2833
    %v2835 = vrot.slane %v2813, %v2834
    %v2837 = vunpack.c.l.s4 1966171168
    %v2838 = vunpack.c.0.s8 %v2837
    %v2839 = vlaneseq
    %v2840 = vshrl.u32 %v2839, 7
    %v2841 = vsub.s32 %v2838, %v2840
    %v2842 = vrot.slane %v2814, %v2841
    %v2843 = vcombine.high %v2821, %v2821
    %v2844 = vcombine.high %v2828, %v2828
    %v2845 = vcombine.high %v2835, %v2835
    %v2846 = vcombine.high %v2842, %v2842
    %v2847 = vcombine.low %v1302, %v1316
    %v2848 = vcombine.low %v1324, %v1326
    %v2849 = vcombine.low %v1309, %v1323
    %v2850 = vcombine.low %v1325, %v1327
    %v2852 = vunpack.c.l.s4 1966171168
    %v2853 = vunpack.c.0.s8 %v2852
    %v2854 = vlaneseq
    %v2855 = vshrl.u32 %v2854, 7
    %v2856 = vsub.s32 %v2853, %v2855
    %v2857 = vrot.slane %v2847, %v2856
    %v2859 = vunpack.c.l.s4 1966171168
    %v2860 = vunpack.c.0.s8 %v2859
    %v2861 = vlaneseq
    %v2862 = vshrl.u32 %v2861, 7
    %v2863 = vsub.s32 %v2860, %v2862
    %v2864 = vrot.slane %v2848, %v2863
    %v2866 = vunpack.c.l.s4 1966171168
    %v2867 = vunpack.c.0.s8 %v2866
    %v2868 = vlaneseq
    %v2869 = vshrl.u32 %v2868, 7
    %v2870 = vsub.s32 %v2867, %v2869
    %v2871 = vrot.slane %v2849, %v2870
    %v2873 = vunpack.c.l.s4 1966171168
    %v2874 = vunpack.c.0.s8 %v2873
    %v2875 = vlaneseq
    %v2876 = vshrl.u32 %v2875, 7
    %v2877 = vsub.s32 %v2874, %v2876
    %v2878 = vrot.slane %v2850, %v2877
    %v2879 = vcombine.low %v2857, %v2864
    %v2880 = vcombine.low %v2871, %v2878
    %v2882 = vunpack.c.l.s4 1966171168
    %v2883 = vunpack.c.0.s8 %v2882
    %v2884 = vlaneseq
    %v2885 = vshrl.u32 %v2884, 7
    %v2886 = vsub.s32 %v2883, %v2885
    %v2887 = vrot.slane %v2879, %v2886
    %v2889 = vunpack.c.l.s4 1966171168
    %v2890 = vunpack.c.0.s8 %v2889
    %v2891 = vlaneseq
    %v2892 = vshrl.u32 %v2891, 7
    %v2893 = vsub.s32 %v2890, %v2892
    %v2894 = vrot.slane %v2880, %v2893
    %v2895 = vcombine.low %v2887, %v2894
    %v2896 = vcombine.low %v1351, %v1365
    %v2897 = vcombine.low %v1373, %v1375
    %v2898 = vcombine.low %v1358, %v1372
    %v2899 = vcombine.low %v1374, %v1376
    %v2901 = vunpack.c.l.s4 1966171168
    %v2902 = vunpack.c.0.s8 %v2901
    %v2903 = vlaneseq
    %v2904 = vshrl.u32 %v2903, 7
    %v2905 = vsub.s32 %v2902, %v2904
    %v2906 = vrot.slane %v2896, %v2905
    %v2908 = vunpack.c.l.s4 1966171168
    %v2909 = vunpack.c.0.s8 %v2908
    %v2910 = vlaneseq
    %v2911 = vshrl.u32 %v2910, 7
    %v2912 = vsub.s32 %v2909, %v2911
    %v2913 = vrot.slane %v2897, %v2912
    %v2915 = vunpack.c.l.s4 1966171168
    %v2916 = vunpack.c.0.s8 %v2915
    %v2917 = vlaneseq
    %v2918 = vshrl.u32 %v2917, 7
    %v2919 = vsub.s32 %v2916, %v2918
    %v2920 = vrot.slane %v2898, %v2919
    %v2922 = vunpack.c.l.s4 1966171168
    %v2923 = vunpack.c.0.s8 %v2922
    %v2924 = vlaneseq
    %v2925 = vshrl.u32 %v2924, 7
    %v2926 = vsub.s32 %v2923, %v2925
    %v2927 = vrot.slane %v2899, %v2926
    %v2928 = vcombine.low %v2906, %v2913
    %v2929 = vcombine.low %v2920, %v2927
    %v2931 = vunpack.c.l.s4 1966171168
    %v2932 = vunpack.c.0.s8 %v2931
    %v2933 = vlaneseq
    %v2934 = vshrl.u32 %v2933, 7
    %v2935 = vsub.s32 %v2932, %v2934
    %v2936 = vrot.slane %v2928, %v2935
    %v2938 = vunpack.c.l.s4 1966171168
    %v2939 = vunpack.c.0.s8 %v2938
    %v2940 = vlaneseq
    %v2941 = vshrl.u32 %v2940, 7
    %v2942 = vsub.s32 %v2939, %v2941
    %v2943 = vrot.slane %v2929, %v2942
    %v2944 = vcombine.low %v2936, %v2943
    %v2945 = vcombine.low %v1400, %v1414
    %v2946 = vcombine.low %v1422, %v1424
    %v2947 = vcombine.low %v1407, %v1421
    %v2948 = vcombine.low %v1423, %v1425
    %v2950 = vunpack.c.l.s4 1966171168
    %v2951 = vunpack.c.0.s8 %v2950
    %v2952 = vlaneseq
    %v2953 = vshrl.u32 %v2952, 7
    %v2954 = vsub.s32 %v2951, %v2953
    %v2955 = vrot.slane %v2945, %v2954
    %v2957 = vunpack.c.l.s4 1966171168
    %v2958 = vunpack.c.0.s8 %v2957
    %v2959 = vlaneseq
    %v2960 = vshrl.u32 %v2959, 7
    %v2961 = vsub.s32 %v2958, %v2960
    %v2962 = vrot.slane %v2946, %v2961
    %v2964 = vunpack.c.l.s4 1966171168
    %v2965 = vunpack.c.0.s8 %v2964
    %v2966 = vlaneseq
    %v2967 = vshrl.u32 %v2966, 7
    %v2968 = vsub.s32 %v2965, %v2967
    %v2969 = vrot.slane %v2947, %v2968
    %v2971 = vunpack.c.l.s4 1966171168
    %v2972 = vunpack.c.0.s8 %v2971
    %v2973 = vlaneseq
    %v2974 = vshrl.u32 %v2973, 7
    %v2975 = vsub.s32 %v2972, %v2974
    %v2976 = vrot.slane %v2948, %v2975
    %v2977 = vcombine.low %v2955, %v2962
    %v2978 = vcombine.low %v2969, %v2976
    %v2980 = vunpack.c.l.s4 1966171168
    %v2981 = vunpack.c.0.s8 %v2980
    %v2982 = vlaneseq
    %v2983 = vshrl.u32 %v2982, 7
    %v2984 = vsub.s32 %v2981, %v2983
    %v2985 = vrot.slane %v2977, %v2984
    %v2987 = vunpack.c.l.s4 1966171168
    %v2988 = vunpack.c.0.s8 %v2987
    %v2989 = vlaneseq
    %v2990 = vshrl.u32 %v2989, 7
    %v2991 = vsub.s32 %v2988, %v2990
    %v2992 = vrot.slane %v2978, %v2991
    %v2993 = vcombine.low %v2985, %v2992
    %v2994 = vcombine.low %v1449, %v1463
    %v2995 = vcombine.low %v1471, %v1473
    %v2996 = vcombine.low %v1456, %v1470
    %v2997 = vcombine.low %v1472, %v1474
    %v2999 = vunpack.c.l.s4 1966171168
    %v3000 = vunpack.c.0.s8 %v2999
    %v3001 = vlaneseq
    %v3002 = vshrl.u32 %v3001, 7
    %v3003 = vsub.s32 %v3000, %v3002
    %v3004 = vrot.slane %v2994, %v3003
    %v3006 = vunpack.c.l.s4 1966171168
    %v3007 = vunpack.c.0.s8 %v3006
    %v3008 = vlaneseq
    %v3009 = vshrl.u32 %v3008, 7
    %v3010 = vsub.s32 %v3007, %v3009
    %v3011 = vrot.slane %v2995, %v3010
    %v3013 = vunpack.c.l.s4 1966171168
    %v3014 = vunpack.c.0.s8 %v3013
    %v3015 = vlaneseq
    %v3016 = vshrl.u32 %v3015, 7
    %v3017 = vsub.s32 %v3014, %v3016
    %v3018 = vrot.slane %v2996, %v3017
    %v3020 = vunpack.c.l.s4 1966171168
    %v3021 = vunpack.c.0.s8 %v3020
    %v3022 = vlaneseq
    %v3023 = vshrl.u32 %v3022, 7
    %v3024 = vsub.s32 %v3021, %v3023
    %v3025 = vrot.slane %v2997, %v3024
    %v3026 = vcombine.low %v3004, %v3011
    %v3027 = vcombine.low %v3018, %v3025
    %v3029 = vunpack.c.l.s4 1966171168
    %v3030 = vunpack.c.0.s8 %v3029
    %v3031 = vlaneseq
    %v3032 = vshrl.u32 %v3031, 7
    %v3033 = vsub.s32 %v3030, %v3032
    %v3034 = vrot.slane %v3026, %v3033
    %v3036 = vunpack.c.l.s4 1966171168
    %v3037 = vunpack.c.0.s8 %v3036
    %v3038 = vlaneseq
    %v3039 = vshrl.u32 %v3038, 7
    %v3040 = vsub.s32 %v3037, %v3039
    %v3041 = vrot.slane %v3027, %v3040
    %v3042 = vcombine.low %v3034, %v3041
    %v3043 = vcombine.low %v1498, %v1512
    %v3044 = vcombine.low %v1520, %v1522
    %v3045 = vcombine.low %v1505, %v1519
    %v3046 = vcombine.low %v1521, %v1523
    %v3048 = vunpack.c.l.s4 1966171168
    %v3049 = vunpack.c.0.s8 %v3048
    %v3050 = vlaneseq
    %v3051 = vshrl.u32 %v3050, 7
    %v3052 = vsub.s32 %v3049, %v3051
    %v3053 = vrot.slane %v3043, %v3052
    %v3055 = vunpack.c.l.s4 1966171168
    %v3056 = vunpack.c.0.s8 %v3055
    %v3057 = vlaneseq
    %v3058 = vshrl.u32 %v3057, 7
    %v3059 = vsub.s32 %v3056, %v3058
    %v3060 = vrot.slane %v3044, %v3059
    %v3062 = vunpack.c.l.s4 1966171168
    %v3063 = vunpack.c.0.s8 %v3062
    %v3064 = vlaneseq
    %v3065 = vshrl.u32 %v3064, 7
    %v3066 = vsub.s32 %v3063, %v3065
    %v3067 = vrot.slane %v3045, %v3066
    %v3069 = vunpack.c.l.s4 1966171168
    %v3070 = vunpack.c.0.s8 %v3069
    %v3071 = vlaneseq
    %v3072 = vshrl.u32 %v3071, 7
    %v3073 = vsub.s32 %v3070, %v3072
    %v3074 = vrot.slane %v3046, %v3073
    %v3075 = vcombine.low %v3053, %v3060
    %v3076 = vcombine.low %v3067, %v3074
    %v3078 = vunpack.c.l.s4 1966171168
    %v3079 = vunpack.c.0.s8 %v3078
    %v3080 = vlaneseq
    %v3081 = vshrl.u32 %v3080, 7
    %v3082 = vsub.s32 %v3079, %v3081
    %v3083 = vrot.slane %v3075, %v3082
    %v3085 = vunpack.c.l.s4 1966171168
    %v3086 = vunpack.c.0.s8 %v3085
    %v3087 = vlaneseq
    %v3088 = vshrl.u32 %v3087, 7
    %v3089 = vsub.s32 %v3086, %v3088
    %v3090 = vrot.slane %v3076, %v3089
    %v3091 = vcombine.low %v3083, %v3090
    %v3092 = vcombine.low %v1547, %v1561
    %v3093 = vcombine.low %v1569, %v1571
    %v3094 = vcombine.low %v1554, %v1568
    %v3095 = vcombine.low %v1570, %v1572
    %v3097 = vunpack.c.l.s4 1966171168
    %v3098 = vunpack.c.0.s8 %v3097
    %v3099 = vlaneseq
    %v3100 = vshrl.u32 %v3099, 7
    %v3101 = vsub.s32 %v3098, %v3100
    %v3102 = vrot.slane %v3092, %v3101
    %v3104 = vunpack.c.l.s4 1966171168
    %v3105 = vunpack.c.0.s8 %v3104
    %v3106 = vlaneseq
    %v3107 = vshrl.u32 %v3106, 7
    %v3108 = vsub.s32 %v3105, %v3107
    %v3109 = vrot.slane %v3093, %v3108
    %v3111 = vunpack.c.l.s4 1966171168
    %v3112 = vunpack.c.0.s8 %v3111
    %v3113 = vlaneseq
    %v3114 = vshrl.u32 %v3113, 7
    %v3115 = vsub.s32 %v3112, %v3114
    %v3116 = vrot.slane %v3094, %v3115
    %v3118 = vunpack.c.l.s4 1966171168
    %v3119 = vunpack.c.0.s8 %v3118
    %v3120 = vlaneseq
    %v3121 = vshrl.u32 %v3120, 7
    %v3122 = vsub.s32 %v3119, %v3121
    %v3123 = vrot.slane %v3095, %v3122
    %v3124 = vcombine.low %v3102, %v3109
    %v3125 = vcombine.low %v3116, %v3123
    %v3127 = vunpack.c.l.s4 1966171168
    %v3128 = vunpack.c.0.s8 %v3127
    %v3129 = vlaneseq
    %v3130 = vshrl.u32 %v3129, 7
    %v3131 = vsub.s32 %v3128, %v3130
    %v3132 = vrot.slane %v3124, %v3131
    %v3134 = vunpack.c.l.s4 1966171168
    %v3135 = vunpack.c.0.s8 %v3134
    %v3136 = vlaneseq
    %v3137 = vshrl.u32 %v3136, 7
    %v3138 = vsub.s32 %v3135, %v3137
    %v3139 = vrot.slane %v3125, %v3138
    %v3140 = vcombine.low %v3132, %v3139
    %v3141 = vcombine.low %v1596, %v1610
    %v3142 = vcombine.low %v1618, %v1620
    %v3143 = vcombine.low %v1603, %v1617
    %v3144 = vcombine.low %v1619, %v1621
    %v3146 = vunpack.c.l.s4 1966171168
    %v3147 = vunpack.c.0.s8 %v3146
    %v3148 = vlaneseq
    %v3149 = vshrl.u32 %v3148, 7
    %v3150 = vsub.s32 %v3147, %v3149
    %v3151 = vrot.slane %v3141, %v3150
    %v3153 = vunpack.c.l.s4 1966171168
    %v3154 = vunpack.c.0.s8 %v3153
    %v3155 = vlaneseq
    %v3156 = vshrl.u32 %v3155, 7
    %v3157 = vsub.s32 %v3154, %v3156
    %v3158 = vrot.slane %v3142, %v3157
    %v3160 = vunpack.c.l.s4 1966171168
    %v3161 = vunpack.c.0.s8 %v3160
    %v3162 = vlaneseq
    %v3163 = vshrl.u32 %v3162, 7
    %v3164 = vsub.s32 %v3161, %v3163
    %v3165 = vrot.slane %v3143, %v3164
    %v3167 = vunpack.c.l.s4 1966171168
    %v3168 = vunpack.c.0.s8 %v3167
    %v3169 = vlaneseq
    %v3170 = vshrl.u32 %v3169, 7
    %v3171 = vsub.s32 %v3168, %v3170
    %v3172 = vrot.slane %v3144, %v3171
    %v3173 = vcombine.low %v3151, %v3158
    %v3174 = vcombine.low %v3165, %v3172
    %v3176 = vunpack.c.l.s4 1966171168
    %v3177 = vunpack.c.0.s8 %v3176
    %v3178 = vlaneseq
    %v3179 = vshrl.u32 %v3178, 7
    %v3180 = vsub.s32 %v3177, %v3179
    %v3181 = vrot.slane %v3173, %v3180
    %v3183 = vunpack.c.l.s4 1966171168
    %v3184 = vunpack.c.0.s8 %v3183
    %v3185 = vlaneseq
    %v3186 = vshrl.u32 %v3185, 7
    %v3187 = vsub.s32 %v3184, %v3186
    %v3188 = vrot.slane %v3174, %v3187
    %v3189 = vcombine.low %v3181, %v3188
    %v3190 = vcombine.low %v1645, %v1659
    %v3191 = vcombine.low %v1667, %v1669
    %v3192 = vcombine.low %v1652, %v1666
    %v3193 = vcombine.low %v1668, %v1670
    %v3195 = vunpack.c.l.s4 1966171168
    %v3196 = vunpack.c.0.s8 %v3195
    %v3197 = vlaneseq
    %v3198 = vshrl.u32 %v3197, 7
    %v3199 = vsub.s32 %v3196, %v3198
    %v3200 = vrot.slane %v3190, %v3199
    %v3202 = vunpack.c.l.s4 1966171168
    %v3203 = vunpack.c.0.s8 %v3202
    %v3204 = vlaneseq
    %v3205 = vshrl.u32 %v3204, 7
    %v3206 = vsub.s32 %v3203, %v3205
    %v3207 = vrot.slane %v3191, %v3206
    %v3209 = vunpack.c.l.s4 1966171168
    %v3210 = vunpack.c.0.s8 %v3209
    %v3211 = vlaneseq
    %v3212 = vshrl.u32 %v3211, 7
    %v3213 = vsub.s32 %v3210, %v3212
    %v3214 = vrot.slane %v3192, %v3213
    %v3216 = vunpack.c.l.s4 1966171168
    %v3217 = vunpack.c.0.s8 %v3216
    %v3218 = vlaneseq
    %v3219 = vshrl.u32 %v3218, 7
    %v3220 = vsub.s32 %v3217, %v3219
    %v3221 = vrot.slane %v3193, %v3220
    %v3222 = vcombine.low %v3200, %v3207
    %v3223 = vcombine.low %v3214, %v3221
    %v3225 = vunpack.c.l.s4 1966171168
    %v3226 = vunpack.c.0.s8 %v3225
    %v3227 = vlaneseq
    %v3228 = vshrl.u32 %v3227, 7
    %v3229 = vsub.s32 %v3226, %v3228
    %v3230 = vrot.slane %v3222, %v3229
    %v3232 = vunpack.c.l.s4 1966171168
    %v3233 = vunpack.c.0.s8 %v3232
    %v3234 = vlaneseq
    %v3235 = vshrl.u32 %v3234, 7
    %v3236 = vsub.s32 %v3233, %v3235
    %v3237 = vrot.slane %v3223, %v3236
    %v3238 = vcombine.low %v3230, %v3237
    %v3239 = vcombine.low %v1694, %v1708
    %v3240 = vcombine.low %v1716, %v1718
    %v3241 = vcombine.low %v1701, %v1715
    %v3242 = vcombine.low %v1717, %v1719
    %v3244 = vunpack.c.l.s4 1966171168
    %v3245 = vunpack.c.0.s8 %v3244
    %v3246 = vlaneseq
    %v3247 = vshrl.u32 %v3246, 7
    %v3248 = vsub.s32 %v3245, %v3247
    %v3249 = vrot.slane %v3239, %v3248
    %v3251 = vunpack.c.l.s4 1966171168
    %v3252 = vunpack.c.0.s8 %v3251
    %v3253 = vlaneseq
    %v3254 = vshrl.u32 %v3253, 7
    %v3255 = vsub.s32 %v3252, %v3254
    %v3256 = vrot.slane %v3240, %v3255
    %v3258 = vunpack.c.l.s4 1966171168
    %v3259 = vunpack.c.0.s8 %v3258
    %v3260 = vlaneseq
    %v3261 = vshrl.u32 %v3260, 7
    %v3262 = vsub.s32 %v3259, %v3261
    %v3263 = vrot.slane %v3241, %v3262
    %v3265 = vunpack.c.l.s4 1966171168
    %v3266 = vunpack.c.0.s8 %v3265
    %v3267 = vlaneseq
    %v3268 = vshrl.u32 %v3267, 7
    %v3269 = vsub.s32 %v3266, %v3268
    %v3270 = vrot.slane %v3242, %v3269
    %v3271 = vcombine.low %v3249, %v3256
    %v3272 = vcombine.low %v3263, %v3270
    %v3274 = vunpack.c.l.s4 1966171168
    %v3275 = vunpack.c.0.s8 %v3274
    %v3276 = vlaneseq
    %v3277 = vshrl.u32 %v3276, 7
    %v3278 = vsub.s32 %v3275, %v3277
    %v3279 = vrot.slane %v3271, %v3278
    %v3281 = vunpack.c.l.s4 1966171168
    %v3282 = vunpack.c.0.s8 %v3281
    %v3283 = vlaneseq
    %v3284 = vshrl.u32 %v3283, 7
    %v3285 = vsub.s32 %v3282, %v3284
    %v3286 = vrot.slane %v3272, %v3285
    %v3287 = vcombine.low %v3279, %v3286
    %v3288 = vcombine.low %v1743, %v1757
    %v3289 = vcombine.low %v1765, %v1767
    %v3290 = vcombine.low %v1750, %v1764
    %v3291 = vcombine.low %v1766, %v1768
    %v3293 = vunpack.c.l.s4 1966171168
    %v3294 = vunpack.c.0.s8 %v3293
    %v3295 = vlaneseq
    %v3296 = vshrl.u32 %v3295, 7
    %v3297 = vsub.s32 %v3294, %v3296
    %v3298 = vrot.slane %v3288, %v3297
    %v3300 = vunpack.c.l.s4 1966171168
    %v3301 = vunpack.c.0.s8 %v3300
    %v3302 = vlaneseq
    %v3303 = vshrl.u32 %v3302, 7
    %v3304 = vsub.s32 %v3301, %v3303
    %v3305 = vrot.slane %v3289, %v3304
    %v3307 = vunpack.c.l.s4 1966171168
    %v3308 = vunpack.c.0.s8 %v3307
    %v3309 = vlaneseq
    %v3310 = vshrl.u32 %v3309, 7
    %v3311 = vsub.s32 %v3308, %v3310
    %v3312 = vrot.slane %v3290, %v3311
    %v3314 = vunpack.c.l.s4 1966171168
    %v3315 = vunpack.c.0.s8 %v3314
    %v3316 = vlaneseq
    %v3317 = vshrl.u32 %v3316, 7
    %v3318 = vsub.s32 %v3315, %v3317
    %v3319 = vrot.slane %v3291, %v3318
    %v3320 = vcombine.low %v3298, %v3305
    %v3321 = vcombine.low %v3312, %v3319
    %v3323 = vunpack.c.l.s4 1966171168
    %v3324 = vunpack.c.0.s8 %v3323
    %v3325 = vlaneseq
    %v3326 = vshrl.u32 %v3325, 7
    %v3327 = vsub.s32 %v3324, %v3326
    %v3328 = vrot.slane %v3320, %v3327
    %v3330 = vunpack.c.l.s4 1966171168
    %v3331 = vunpack.c.0.s8 %v3330
    %v3332 = vlaneseq
    %v3333 = vshrl.u32 %v3332, 7
    %v3334 = vsub.s32 %v3331, %v3333
    %v3335 = vrot.slane %v3321, %v3334
    %v3336 = vcombine.low %v3328, %v3335
    %v3337 = vcombine.low %v1792, %v1806
    %v3338 = vcombine.low %v1814, %v1816
    %v3339 = vcombine.low %v1799, %v1813
    %v3340 = vcombine.low %v1815, %v1817
    %v3342 = vunpack.c.l.s4 1966171168
    %v3343 = vunpack.c.0.s8 %v3342
    %v3344 = vlaneseq
    %v3345 = vshrl.u32 %v3344, 7
    %v3346 = vsub.s32 %v3343, %v3345
    %v3347 = vrot.slane %v3337, %v3346
    %v3349 = vunpack.c.l.s4 1966171168
    %v3350 = vunpack.c.0.s8 %v3349
    %v3351 = vlaneseq
    %v3352 = vshrl.u32 %v3351, 7
    %v3353 = vsub.s32 %v3350, %v3352
    %v3354 = vrot.slane %v3338, %v3353
    %v3356 = vunpack.c.l.s4 1966171168
    %v3357 = vunpack.c.0.s8 %v3356
    %v3358 = vlaneseq
    %v3359 = vshrl.u32 %v3358, 7
    %v3360 = vsub.s32 %v3357, %v3359
    %v3361 = vrot.slane %v3339, %v3360
    %v3363 = vunpack.c.l.s4 1966171168
    %v3364 = vunpack.c.0.s8 %v3363
    %v3365 = vlaneseq
    %v3366 = vshrl.u32 %v3365, 7
    %v3367 = vsub.s32 %v3364, %v3366
    %v3368 = vrot.slane %v3340, %v3367
    %v3369 = vcombine.low %v3347, %v3354
    %v3370 = vcombine.low %v3361, %v3368
    %v3372 = vunpack.c.l.s4 1966171168
    %v3373 = vunpack.c.0.s8 %v3372
    %v3374 = vlaneseq
    %v3375 = vshrl.u32 %v3374, 7
    %v3376 = vsub.s32 %v3373, %v3375
    %v3377 = vrot.slane %v3369, %v3376
    %v3379 = vunpack.c.l.s4 1966171168
    %v3380 = vunpack.c.0.s8 %v3379
    %v3381 = vlaneseq
    %v3382 = vshrl.u32 %v3381, 7
    %v3383 = vsub.s32 %v3380, %v3382
    %v3384 = vrot.slane %v3370, %v3383
    %v3385 = vcombine.low %v3377, %v3384
    %v3386 = vcombine.low %v1841, %v1855
    %v3387 = vcombine.low %v1863, %v1865
    %v3388 = vcombine.low %v1848, %v1862
    %v3389 = vcombine.low %v1864, %v1866
    %v3391 = vunpack.c.l.s4 1966171168
    %v3392 = vunpack.c.0.s8 %v3391
    %v3393 = vlaneseq
    %v3394 = vshrl.u32 %v3393, 7
    %v3395 = vsub.s32 %v3392, %v3394
    %v3396 = vrot.slane %v3386, %v3395
    %v3398 = vunpack.c.l.s4 1966171168
    %v3399 = vunpack.c.0.s8 %v3398
    %v3400 = vlaneseq
    %v3401 = vshrl.u32 %v3400, 7
    %v3402 = vsub.s32 %v3399, %v3401
    %v3403 = vrot.slane %v3387, %v3402
    %v3405 = vunpack.c.l.s4 1966171168
    %v3406 = vunpack.c.0.s8 %v3405
    %v3407 = vlaneseq
    %v3408 = vshrl.u32 %v3407, 7
    %v3409 = vsub.s32 %v3406, %v3408
    %v3410 = vrot.slane %v3388, %v3409
    %v3412 = vunpack.c.l.s4 1966171168
    %v3413 = vunpack.c.0.s8 %v3412
    %v3414 = vlaneseq
    %v3415 = vshrl.u32 %v3414, 7
    %v3416 = vsub.s32 %v3413, %v3415
    %v3417 = vrot.slane %v3389, %v3416
    %v3418 = vcombine.low %v3396, %v3403
    %v3419 = vcombine.low %v3410, %v3417
    %v3421 = vunpack.c.l.s4 1966171168
    %v3422 = vunpack.c.0.s8 %v3421
    %v3423 = vlaneseq
    %v3424 = vshrl.u32 %v3423, 7
    %v3425 = vsub.s32 %v3422, %v3424
    %v3426 = vrot.slane %v3418, %v3425
    %v3428 = vunpack.c.l.s4 1966171168
    %v3429 = vunpack.c.0.s8 %v3428
    %v3430 = vlaneseq
    %v3431 = vshrl.u32 %v3430, 7
    %v3432 = vsub.s32 %v3429, %v3431
    %v3433 = vrot.slane %v3419, %v3432
    %v3434 = vcombine.low %v3426, %v3433
    %v3435 = vcombine.low %v1890, %v1904
    %v3436 = vcombine.low %v1912, %v1914
    %v3437 = vcombine.low %v1897, %v1911
    %v3438 = vcombine.low %v1913, %v1915
    %v3440 = vunpack.c.l.s4 1966171168
    %v3441 = vunpack.c.0.s8 %v3440
    %v3442 = vlaneseq
    %v3443 = vshrl.u32 %v3442, 7
    %v3444 = vsub.s32 %v3441, %v3443
    %v3445 = vrot.slane %v3435, %v3444
    %v3447 = vunpack.c.l.s4 1966171168
    %v3448 = vunpack.c.0.s8 %v3447
    %v3449 = vlaneseq
    %v3450 = vshrl.u32 %v3449, 7
    %v3451 = vsub.s32 %v3448, %v3450
    %v3452 = vrot.slane %v3436, %v3451
    %v3454 = vunpack.c.l.s4 1966171168
    %v3455 = vunpack.c.0.s8 %v3454
    %v3456 = vlaneseq
    %v3457 = vshrl.u32 %v3456, 7
    %v3458 = vsub.s32 %v3455, %v3457
    %v3459 = vrot.slane %v3437, %v3458
    %v3461 = vunpack.c.l.s4 1966171168
    %v3462 = vunpack.c.0.s8 %v3461
    %v3463 = vlaneseq
    %v3464 = vshrl.u32 %v3463, 7
    %v3465 = vsub.s32 %v3462, %v3464
    %v3466 = vrot.slane %v3438, %v3465
    %v3467 = vcombine.low %v3445, %v3452
    %v3468 = vcombine.low %v3459, %v3466
    %v3470 = vunpack.c.l.s4 1966171168
    %v3471 = vunpack.c.0.s8 %v3470
    %v3472 = vlaneseq
    %v3473 = vshrl.u32 %v3472, 7
    %v3474 = vsub.s32 %v3471, %v3473
    %v3475 = vrot.slane %v3467, %v3474
    %v3477 = vunpack.c.l.s4 1966171168
    %v3478 = vunpack.c.0.s8 %v3477
    %v3479 = vlaneseq
    %v3480 = vshrl.u32 %v3479, 7
    %v3481 = vsub.s32 %v3478, %v3480
    %v3482 = vrot.slane %v3468, %v3481
    %v3483 = vcombine.low %v3475, %v3482
    %v3484 = vcombine.low %v1939, %v1953
    %v3485 = vcombine.low %v1961, %v1963
    %v3486 = vcombine.low %v1946, %v1960
    %v3487 = vcombine.low %v1962, %v1964
    %v3489 = vunpack.c.l.s4 1966171168
    %v3490 = vunpack.c.0.s8 %v3489
    %v3491 = vlaneseq
    %v3492 = vshrl.u32 %v3491, 7
    %v3493 = vsub.s32 %v3490, %v3492
    %v3494 = vrot.slane %v3484, %v3493
    %v3496 = vunpack.c.l.s4 1966171168
    %v3497 = vunpack.c.0.s8 %v3496
    %v3498 = vlaneseq
    %v3499 = vshrl.u32 %v3498, 7
    %v3500 = vsub.s32 %v3497, %v3499
    %v3501 = vrot.slane %v3485, %v3500
    %v3503 = vunpack.c.l.s4 1966171168
    %v3504 = vunpack.c.0.s8 %v3503
    %v3505 = vlaneseq
    %v3506 = vshrl.u32 %v3505, 7
    %v3507 = vsub.s32 %v3504, %v3506
    %v3508 = vrot.slane %v3486, %v3507
    %v3510 = vunpack.c.l.s4 1966171168
    %v3511 = vunpack.c.0.s8 %v3510
    %v3512 = vlaneseq
    %v3513 = vshrl.u32 %v3512, 7
    %v3514 = vsub.s32 %v3511, %v3513
    %v3515 = vrot.slane %v3487, %v3514
    %v3516 = vcombine.low %v3494, %v3501
    %v3517 = vcombine.low %v3508, %v3515
    %v3519 = vunpack.c.l.s4 1966171168
    %v3520 = vunpack.c.0.s8 %v3519
    %v3521 = vlaneseq
    %v3522 = vshrl.u32 %v3521, 7
    %v3523 = vsub.s32 %v3520, %v3522
    %v3524 = vrot.slane %v3516, %v3523
    %v3526 = vunpack.c.l.s4 1966171168
    %v3527 = vunpack.c.0.s8 %v3526
    %v3528 = vlaneseq
    %v3529 = vshrl.u32 %v3528, 7
    %v3530 = vsub.s32 %v3527, %v3529
    %v3531 = vrot.slane %v3517, %v3530
    %v3532 = vcombine.low %v3524, %v3531
    %v3533 = vcombine.low %v1988, %v2002
    %v3534 = vcombine.low %v2010, %v2012
    %v3535 = vcombine.low %v1995, %v2009
    %v3536 = vcombine.low %v2011, %v2013
    %v3538 = vunpack.c.l.s4 1966171168
    %v3539 = vunpack.c.0.s8 %v3538
    %v3540 = vlaneseq
    %v3541 = vshrl.u32 %v3540, 7
    %v3542 = vsub.s32 %v3539, %v3541
    %v3543 = vrot.slane %v3533, %v3542
    %v3545 = vunpack.c.l.s4 1966171168
    %v3546 = vunpack.c.0.s8 %v3545
    %v3547 = vlaneseq
    %v3548 = vshrl.u32 %v3547, 7
    %v3549 = vsub.s32 %v3546, %v3548
    %v3550 = vrot.slane %v3534, %v3549
    %v3552 = vunpack.c.l.s4 1966171168
    %v3553 = vunpack.c.0.s8 %v3552
    %v3554 = vlaneseq
    %v3555 = vshrl.u32 %v3554, 7
    %v3556 = vsub.s32 %v3553, %v3555
    %v3557 = vrot.slane %v3535, %v3556
    %v3559 = vunpack.c.l.s4 1966171168
    %v3560 = vunpack.c.0.s8 %v3559
    %v3561 = vlaneseq
    %v3562 = vshrl.u32 %v3561, 7
    %v3563 = vsub.s32 %v3560, %v3562
    %v3564 = vrot.slane %v3536, %v3563
    %v3565 = vcombine.low %v3543, %v3550
    %v3566 = vcombine.low %v3557, %v3564
    %v3568 = vunpack.c.l.s4 1966171168
    %v3569 = vunpack.c.0.s8 %v3568
    %v3570 = vlaneseq
    %v3571 = vshrl.u32 %v3570, 7
    %v3572 = vsub.s32 %v3569, %v3571
    %v3573 = vrot.slane %v3565, %v3572
    %v3575 = vunpack.c.l.s4 1966171168
    %v3576 = vunpack.c.0.s8 %v3575
    %v3577 = vlaneseq
    %v3578 = vshrl.u32 %v3577, 7
    %v3579 = vsub.s32 %v3576, %v3578
    %v3580 = vrot.slane %v3566, %v3579
    %v3581 = vcombine.low %v3573, %v3580
    %v3582 = vcombine.low %v2037, %v2051
    %v3583 = vcombine.low %v2059, %v2061
    %v3584 = vcombine.low %v2044, %v2058
    %v3585 = vcombine.low %v2060, %v2062
    %v3587 = vunpack.c.l.s4 1966171168
    %v3588 = vunpack.c.0.s8 %v3587
    %v3589 = vlaneseq
    %v3590 = vshrl.u32 %v3589, 7
    %v3591 = vsub.s32 %v3588, %v3590
    %v3592 = vrot.slane %v3582, %v3591
    %v3594 = vunpack.c.l.s4 1966171168
    %v3595 = vunpack.c.0.s8 %v3594
    %v3596 = vlaneseq
    %v3597 = vshrl.u32 %v3596, 7
    %v3598 = vsub.s32 %v3595, %v3597
    %v3599 = vrot.slane %v3583, %v3598
    %v3601 = vunpack.c.l.s4 1966171168
    %v3602 = vunpack.c.0.s8 %v3601
    %v3603 = vlaneseq
    %v3604 = vshrl.u32 %v3603, 7
    %v3605 = vsub.s32 %v3602, %v3604
    %v3606 = vrot.slane %v3584, %v3605
    %v3608 = vunpack.c.l.s4 1966171168
    %v3609 = vunpack.c.0.s8 %v3608
    %v3610 = vlaneseq
    %v3611 = vshrl.u32 %v3610, 7
    %v3612 = vsub.s32 %v3609, %v3611
    %v3613 = vrot.slane %v3585, %v3612
    %v3614 = vcombine.low %v3592, %v3599
    %v3615 = vcombine.low %v3606, %v3613
    %v3617 = vunpack.c.l.s4 1966171168
    %v3618 = vunpack.c.0.s8 %v3617
    %v3619 = vlaneseq
    %v3620 = vshrl.u32 %v3619, 7
    %v3621 = vsub.s32 %v3618, %v3620
    %v3622 = vrot.slane %v3614, %v3621
    %v3624 = vunpack.c.l.s4 1966171168
    %v3625 = vunpack.c.0.s8 %v3624
    %v3626 = vlaneseq
    %v3627 = vshrl.u32 %v3626, 7
    %v3628 = vsub.s32 %v3625, %v3627
    %v3629 = vrot.slane %v3615, %v3628
    %v3630 = vcombine.low %v3622, %v3629
    %v3631 = vcombine.low %v2086, %v2100
    %v3632 = vcombine.low %v2108, %v2110
    %v3633 = vcombine.low %v2093, %v2107
    %v3634 = vcombine.low %v2109, %v2111
    %v3636 = vunpack.c.l.s4 1966171168
    %v3637 = vunpack.c.0.s8 %v3636
    %v3638 = vlaneseq
    %v3639 = vshrl.u32 %v3638, 7
    %v3640 = vsub.s32 %v3637, %v3639
    %v3641 = vrot.slane %v3631, %v3640
    %v3643 = vunpack.c.l.s4 1966171168
    %v3644 = vunpack.c.0.s8 %v3643
    %v3645 = vlaneseq
    %v3646 = vshrl.u32 %v3645, 7
    %v3647 = vsub.s32 %v3644, %v3646
    %v3648 = vrot.slane %v3632, %v3647
    %v3650 = vunpack.c.l.s4 1966171168
    %v3651 = vunpack.c.0.s8 %v3650
    %v3652 = vlaneseq
    %v3653 = vshrl.u32 %v3652, 7
    %v3654 = vsub.s32 %v3651, %v3653
    %v3655 = vrot.slane %v3633, %v3654
    %v3657 = vunpack.c.l.s4 1966171168
    %v3658 = vunpack.c.0.s8 %v3657
    %v3659 = vlaneseq
    %v3660 = vshrl.u32 %v3659, 7
    %v3661 = vsub.s32 %v3658, %v3660
    %v3662 = vrot.slane %v3634, %v3661
    %v3663 = vcombine.low %v3641, %v3648
    %v3664 = vcombine.low %v3655, %v3662
    %v3666 = vunpack.c.l.s4 1966171168
    %v3667 = vunpack.c.0.s8 %v3666
    %v3668 = vlaneseq
    %v3669 = vshrl.u32 %v3668, 7
    %v3670 = vsub.s32 %v3667, %v3669
    %v3671 = vrot.slane %v3663, %v3670
    %v3673 = vunpack.c.l.s4 1966171168
    %v3674 = vunpack.c.0.s8 %v3673
    %v3675 = vlaneseq
    %v3676 = vshrl.u32 %v3675, 7
    %v3677 = vsub.s32 %v3674, %v3676
    %v3678 = vrot.slane %v3664, %v3677
    %v3679 = vcombine.low %v3671, %v3678
    %v3680 = vcombine.low %v2135, %v2149
    %v3681 = vcombine.low %v2157, %v2159
    %v3682 = vcombine.low %v2142, %v2156
    %v3683 = vcombine.low %v2158, %v2160
    %v3685 = vunpack.c.l.s4 1966171168
    %v3686 = vunpack.c.0.s8 %v3685
    %v3687 = vlaneseq
    %v3688 = vshrl.u32 %v3687, 7
    %v3689 = vsub.s32 %v3686, %v3688
    %v3690 = vrot.slane %v3680, %v3689
    %v3692 = vunpack.c.l.s4 1966171168
    %v3693 = vunpack.c.0.s8 %v3692
    %v3694 = vlaneseq
    %v3695 = vshrl.u32 %v3694, 7
    %v3696 = vsub.s32 %v3693, %v3695
    %v3697 = vrot.slane %v3681, %v3696
    %v3699 = vunpack.c.l.s4 1966171168
    %v3700 = vunpack.c.0.s8 %v3699
    %v3701 = vlaneseq
    %v3702 = vshrl.u32 %v3701, 7
    %v3703 = vsub.s32 %v3700, %v3702
    %v3704 = vrot.slane %v3682, %v3703
    %v3706 = vunpack.c.l.s4 1966171168
    %v3707 = vunpack.c.0.s8 %v3706
    %v3708 = vlaneseq
    %v3709 = vshrl.u32 %v3708, 7
    %v3710 = vsub.s32 %v3707, %v3709
    %v3711 = vrot.slane %v3683, %v3710
    %v3712 = vcombine.low %v3690, %v3697
    %v3713 = vcombine.low %v3704, %v3711
    %v3715 = vunpack.c.l.s4 1966171168
    %v3716 = vunpack.c.0.s8 %v3715
    %v3717 = vlaneseq
    %v3718 = vshrl.u32 %v3717, 7
    %v3719 = vsub.s32 %v3716, %v3718
    %v3720 = vrot.slane %v3712, %v3719
    %v3722 = vunpack.c.l.s4 1966171168
    %v3723 = vunpack.c.0.s8 %v3722
    %v3724 = vlaneseq
    %v3725 = vshrl.u32 %v3724, 7
    %v3726 = vsub.s32 %v3723, %v3725
    %v3727 = vrot.slane %v3713, %v3726
    %v3728 = vcombine.low %v3720, %v3727
    %v3729 = vcombine.low %v2184, %v2198
    %v3730 = vcombine.low %v2206, %v2208
    %v3731 = vcombine.low %v2191, %v2205
    %v3732 = vcombine.low %v2207, %v2209
    %v3734 = vunpack.c.l.s4 1966171168
    %v3735 = vunpack.c.0.s8 %v3734
    %v3736 = vlaneseq
    %v3737 = vshrl.u32 %v3736, 7
    %v3738 = vsub.s32 %v3735, %v3737
    %v3739 = vrot.slane %v3729, %v3738
    %v3741 = vunpack.c.l.s4 1966171168
    %v3742 = vunpack.c.0.s8 %v3741
    %v3743 = vlaneseq
    %v3744 = vshrl.u32 %v3743, 7
    %v3745 = vsub.s32 %v3742, %v3744
    %v3746 = vrot.slane %v3730, %v3745
    %v3748 = vunpack.c.l.s4 1966171168
    %v3749 = vunpack.c.0.s8 %v3748
    %v3750 = vlaneseq
    %v3751 = vshrl.u32 %v3750, 7
    %v3752 = vsub.s32 %v3749, %v3751
    %v3753 = vrot.slane %v3731, %v3752
    %v3755 = vunpack.c.l.s4 1966171168
    %v3756 = vunpack.c.0.s8 %v3755
    %v3757 = vlaneseq
    %v3758 = vshrl.u32 %v3757, 7
    %v3759 = vsub.s32 %v3756, %v3758
    %v3760 = vrot.slane %v3732, %v3759
    %v3761 = vcombine.low %v3739, %v3746
    %v3762 = vcombine.low %v3753, %v3760
    %v3764 = vunpack.c.l.s4 1966171168
    %v3765 = vunpack.c.0.s8 %v3764
    %v3766 = vlaneseq
    %v3767 = vshrl.u32 %v3766, 7
    %v3768 = vsub.s32 %v3765, %v3767
    %v3769 = vrot.slane %v3761, %v3768
    %v3771 = vunpack.c.l.s4 1966171168
    %v3772 = vunpack.c.0.s8 %v3771
    %v3773 = vlaneseq
    %v3774 = vshrl.u32 %v3773, 7
    %v3775 = vsub.s32 %v3772, %v3774
    %v3776 = vrot.slane %v3762, %v3775
    %v3777 = vcombine.low %v3769, %v3776
    %v3778 = vcombine.low %v2233, %v2247
    %v3779 = vcombine.low %v2255, %v2257
    %v3780 = vcombine.low %v2240, %v2254
    %v3781 = vcombine.low %v2256, %v2258
    %v3783 = vunpack.c.l.s4 1966171168
    %v3784 = vunpack.c.0.s8 %v3783
    %v3785 = vlaneseq
    %v3786 = vshrl.u32 %v3785, 7
    %v3787 = vsub.s32 %v3784, %v3786
    %v3788 = vrot.slane %v3778, %v3787
    %v3790 = vunpack.c.l.s4 1966171168
    %v3791 = vunpack.c.0.s8 %v3790
    %v3792 = vlaneseq
    %v3793 = vshrl.u32 %v3792, 7
    %v3794 = vsub.s32 %v3791, %v3793
    %v3795 = vrot.slane %v3779, %v3794
    %v3797 = vunpack.c.l.s4 1966171168
    %v3798 = vunpack.c.0.s8 %v3797
    %v3799 = vlaneseq
    %v3800 = vshrl.u32 %v3799, 7
    %v3801 = vsub.s32 %v3798, %v3800
    %v3802 = vrot.slane %v3780, %v3801
    %v3804 = vunpack.c.l.s4 1966171168
    %v3805 = vunpack.c.0.s8 %v3804
    %v3806 = vlaneseq
    %v3807 = vshrl.u32 %v3806, 7
    %v3808 = vsub.s32 %v3805, %v3807
    %v3809 = vrot.slane %v3781, %v3808
    %v3810 = vcombine.low %v3788, %v3795
    %v3811 = vcombine.low %v3802, %v3809
    %v3813 = vunpack.c.l.s4 1966171168
    %v3814 = vunpack.c.0.s8 %v3813
    %v3815 = vlaneseq
    %v3816 = vshrl.u32 %v3815, 7
    %v3817 = vsub.s32 %v3814, %v3816
    %v3818 = vrot.slane %v3810, %v3817
    %v3820 = vunpack.c.l.s4 1966171168
    %v3821 = vunpack.c.0.s8 %v3820
    %v3822 = vlaneseq
    %v3823 = vshrl.u32 %v3822, 7
    %v3824 = vsub.s32 %v3821, %v3823
    %v3825 = vrot.slane %v3811, %v3824
    %v3826 = vcombine.low %v3818, %v3825
    %v3827 = vcombine.low %v2282, %v2296
    %v3828 = vcombine.low %v2304, %v2306
    %v3829 = vcombine.low %v2289, %v2303
    %v3830 = vcombine.low %v2305, %v2307
    %v3832 = vunpack.c.l.s4 1966171168
    %v3833 = vunpack.c.0.s8 %v3832
    %v3834 = vlaneseq
    %v3835 = vshrl.u32 %v3834, 7
    %v3836 = vsub.s32 %v3833, %v3835
    %v3837 = vrot.slane %v3827, %v3836
    %v3839 = vunpack.c.l.s4 1966171168
    %v3840 = vunpack.c.0.s8 %v3839
    %v3841 = vlaneseq
    %v3842 = vshrl.u32 %v3841, 7
    %v3843 = vsub.s32 %v3840, %v3842
    %v3844 = vrot.slane %v3828, %v3843
    %v3846 = vunpack.c.l.s4 1966171168
    %v3847 = vunpack.c.0.s8 %v3846
    %v3848 = vlaneseq
    %v3849 = vshrl.u32 %v3848, 7
    %v3850 = vsub.s32 %v3847, %v3849
    %v3851 = vrot.slane %v3829, %v3850
    %v3853 = vunpack.c.l.s4 1966171168
    %v3854 = vunpack.c.0.s8 %v3853
    %v3855 = vlaneseq
    %v3856 = vshrl.u32 %v3855, 7
    %v3857 = vsub.s32 %v3854, %v3856
    %v3858 = vrot.slane %v3830, %v3857
    %v3859 = vcombine.low %v3837, %v3844
    %v3860 = vcombine.low %v3851, %v3858
    %v3862 = vunpack.c.l.s4 1966171168
    %v3863 = vunpack.c.0.s8 %v3862
    %v3864 = vlaneseq
    %v3865 = vshrl.u32 %v3864, 7
    %v3866 = vsub.s32 %v3863, %v3865
    %v3867 = vrot.slane %v3859, %v3866
    %v3869 = vunpack.c.l.s4 1966171168
    %v3870 = vunpack.c.0.s8 %v3869
    %v3871 = vlaneseq
    %v3872 = vshrl.u32 %v3871, 7
    %v3873 = vsub.s32 %v3870, %v3872
    %v3874 = vrot.slane %v3860, %v3873
    %v3875 = vcombine.low %v3867, %v3874
    %v3876 = vcombine.low %v2331, %v2345
    %v3877 = vcombine.low %v2353, %v2355
    %v3878 = vcombine.low %v2338, %v2352
    %v3879 = vcombine.low %v2354, %v2356
    %v3881 = vunpack.c.l.s4 1966171168
    %v3882 = vunpack.c.0.s8 %v3881
    %v3883 = vlaneseq
    %v3884 = vshrl.u32 %v3883, 7
    %v3885 = vsub.s32 %v3882, %v3884
    %v3886 = vrot.slane %v3876, %v3885
    %v3888 = vunpack.c.l.s4 1966171168
    %v3889 = vunpack.c.0.s8 %v3888
    %v3890 = vlaneseq
    %v3891 = vshrl.u32 %v3890, 7
    %v3892 = vsub.s32 %v3889, %v3891
    %v3893 = vrot.slane %v3877, %v3892
    %v3895 = vunpack.c.l.s4 1966171168
    %v3896 = vunpack.c.0.s8 %v3895
    %v3897 = vlaneseq
    %v3898 = vshrl.u32 %v3897, 7
    %v3899 = vsub.s32 %v3896, %v3898
    %v3900 = vrot.slane %v3878, %v3899
    %v3902 = vunpack.c.l.s4 1966171168
    %v3903 = vunpack.c.0.s8 %v3902
    %v3904 = vlaneseq
    %v3905 = vshrl.u32 %v3904, 7
    %v3906 = vsub.s32 %v3903, %v3905
    %v3907 = vrot.slane %v3879, %v3906
    %v3908 = vcombine.low %v3886, %v3893
    %v3909 = vcombine.low %v3900, %v3907
    %v3911 = vunpack.c.l.s4 1966171168
    %v3912 = vunpack.c.0.s8 %v3911
    %v3913 = vlaneseq
    %v3914 = vshrl.u32 %v3913, 7
    %v3915 = vsub.s32 %v3912, %v3914
    %v3916 = vrot.slane %v3908, %v3915
    %v3918 = vunpack.c.l.s4 1966171168
    %v3919 = vunpack.c.0.s8 %v3918
    %v3920 = vlaneseq
    %v3921 = vshrl.u32 %v3920, 7
    %v3922 = vsub.s32 %v3919, %v3921
    %v3923 = vrot.slane %v3909, %v3922
    %v3924 = vcombine.low %v3916, %v3923
    %v3925 = vcombine.low %v2380, %v2394
    %v3926 = vcombine.low %v2402, %v2404
    %v3927 = vcombine.low %v2387, %v2401
    %v3928 = vcombine.low %v2403, %v2405
    %v3930 = vunpack.c.l.s4 1966171168
    %v3931 = vunpack.c.0.s8 %v3930
    %v3932 = vlaneseq
    %v3933 = vshrl.u32 %v3932, 7
    %v3934 = vsub.s32 %v3931, %v3933
    %v3935 = vrot.slane %v3925, %v3934
    %v3937 = vunpack.c.l.s4 1966171168
    %v3938 = vunpack.c.0.s8 %v3937
    %v3939 = vlaneseq
    %v3940 = vshrl.u32 %v3939, 7
    %v3941 = vsub.s32 %v3938, %v3940
    %v3942 = vrot.slane %v3926, %v3941
    %v3944 = vunpack.c.l.s4 1966171168
    %v3945 = vunpack.c.0.s8 %v3944
    %v3946 = vlaneseq
    %v3947 = vshrl.u32 %v3946, 7
    %v3948 = vsub.s32 %v3945, %v3947
    %v3949 = vrot.slane %v3927, %v3948
    %v3951 = vunpack.c.l.s4 1966171168
    %v3952 = vunpack.c.0.s8 %v3951
    %v3953 = vlaneseq
    %v3954 = vshrl.u32 %v3953, 7
    %v3955 = vsub.s32 %v3952, %v3954
    %v3956 = vrot.slane %v3928, %v3955
    %v3957 = vcombine.low %v3935, %v3942
    %v3958 = vcombine.low %v3949, %v3956
    %v3960 = vunpack.c.l.s4 1966171168
    %v3961 = vunpack.c.0.s8 %v3960
    %v3962 = vlaneseq
    %v3963 = vshrl.u32 %v3962, 7
    %v3964 = vsub.s32 %v3961, %v3963
    %v3965 = vrot.slane %v3957, %v3964
    %v3967 = vunpack.c.l.s4 1966171168
    %v3968 = vunpack.c.0.s8 %v3967
    %v3969 = vlaneseq
    %v3970 = vshrl.u32 %v3969, 7
    %v3971 = vsub.s32 %v3968, %v3970
    %v3972 = vrot.slane %v3958, %v3971
    %v3973 = vcombine.low %v3965, %v3972
    %v3974 = vcombine.low %v2429, %v2443
    %v3975 = vcombine.low %v2451, %v2453
    %v3976 = vcombine.low %v2436, %v2450
    %v3977 = vcombine.low %v2452, %v2454
    %v3979 = vunpack.c.l.s4 1966171168
    %v3980 = vunpack.c.0.s8 %v3979
    %v3981 = vlaneseq
    %v3982 = vshrl.u32 %v3981, 7
    %v3983 = vsub.s32 %v3980, %v3982
    %v3984 = vrot.slane %v3974, %v3983
    %v3986 = vunpack.c.l.s4 1966171168
    %v3987 = vunpack.c.0.s8 %v3986
    %v3988 = vlaneseq
    %v3989 = vshrl.u32 %v3988, 7
    %v3990 = vsub.s32 %v3987, %v3989
    %v3991 = vrot.slane %v3975, %v3990
    %v3993 = vunpack.c.l.s4 1966171168
    %v3994 = vunpack.c.0.s8 %v3993
    %v3995 = vlaneseq
    %v3996 = vshrl.u32 %v3995, 7
    %v3997 = vsub.s32 %v3994, %v3996
    %v3998 = vrot.slane %v3976, %v3997
    %v4000 = vunpack.c.l.s4 1966171168
    %v4001 = vunpack.c.0.s8 %v4000
    %v4002 = vlaneseq
    %v4003 = vshrl.u32 %v4002, 7
    %v4004 = vsub.s32 %v4001, %v4003
    %v4005 = vrot.slane %v3977, %v4004
    %v4006 = vcombine.low %v3984, %v3991
    %v4007 = vcombine.low %v3998, %v4005
    %v4009 = vunpack.c.l.s4 1966171168
    %v4010 = vunpack.c.0.s8 %v4009
    %v4011 = vlaneseq
    %v4012 = vshrl.u32 %v4011, 7
    %v4013 = vsub.s32 %v4010, %v4012
    %v4014 = vrot.slane %v4006, %v4013
    %v4016 = vunpack.c.l.s4 1966171168
    %v4017 = vunpack.c.0.s8 %v4016
    %v4018 = vlaneseq
    %v4019 = vshrl.u32 %v4018, 7
    %v4020 = vsub.s32 %v4017, %v4019
    %v4021 = vrot.slane %v4007, %v4020
    %v4022 = vcombine.low %v4014, %v4021
    %v4023 = vcombine.low %v2478, %v2492
    %v4024 = vcombine.low %v2500, %v2502
    %v4025 = vcombine.low %v2485, %v2499
    %v4026 = vcombine.low %v2501, %v2503
    %v4028 = vunpack.c.l.s4 1966171168
    %v4029 = vunpack.c.0.s8 %v4028
    %v4030 = vlaneseq
    %v4031 = vshrl.u32 %v4030, 7
    %v4032 = vsub.s32 %v4029, %v4031
    %v4033 = vrot.slane %v4023, %v4032
    %v4035 = vunpack.c.l.s4 1966171168
    %v4036 = vunpack.c.0.s8 %v4035
    %v4037 = vlaneseq
    %v4038 = vshrl.u32 %v4037, 7
    %v4039 = vsub.s32 %v4036, %v4038
    %v4040 = vrot.slane %v4024, %v4039
    %v4042 = vunpack.c.l.s4 1966171168
    %v4043 = vunpack.c.0.s8 %v4042
    %v4044 = vlaneseq
    %v4045 = vshrl.u32 %v4044, 7
    %v4046 = vsub.s32 %v4043, %v4045
    %v4047 = vrot.slane %v4025, %v4046
    %v4049 = vunpack.c.l.s4 1966171168
    %v4050 = vunpack.c.0.s8 %v4049
    %v4051 = vlaneseq
    %v4052 = vshrl.u32 %v4051, 7
    %v4053 = vsub.s32 %v4050, %v4052
    %v4054 = vrot.slane %v4026, %v4053
    %v4055 = vcombine.low %v4033, %v4040
    %v4056 = vcombine.low %v4047, %v4054
    %v4058 = vunpack.c.l.s4 1966171168
    %v4059 = vunpack.c.0.s8 %v4058
    %v4060 = vlaneseq
    %v4061 = vshrl.u32 %v4060, 7
    %v4062 = vsub.s32 %v4059, %v4061
    %v4063 = vrot.slane %v4055, %v4062
    %v4065 = vunpack.c.l.s4 1966171168
    %v4066 = vunpack.c.0.s8 %v4065
    %v4067 = vlaneseq
    %v4068 = vshrl.u32 %v4067, 7
    %v4069 = vsub.s32 %v4066, %v4068
    %v4070 = vrot.slane %v4056, %v4069
    %v4071 = vcombine.low %v4063, %v4070
    %v4072 = vcombine.low %v2527, %v2541
    %v4073 = vcombine.low %v2549, %v2551
    %v4074 = vcombine.low %v2534, %v2548
    %v4075 = vcombine.low %v2550, %v2552
    %v4077 = vunpack.c.l.s4 1966171168
    %v4078 = vunpack.c.0.s8 %v4077
    %v4079 = vlaneseq
    %v4080 = vshrl.u32 %v4079, 7
    %v4081 = vsub.s32 %v4078, %v4080
    %v4082 = vrot.slane %v4072, %v4081
    %v4084 = vunpack.c.l.s4 1966171168
    %v4085 = vunpack.c.0.s8 %v4084
    %v4086 = vlaneseq
    %v4087 = vshrl.u32 %v4086, 7
    %v4088 = vsub.s32 %v4085, %v4087
    %v4089 = vrot.slane %v4073, %v4088
    %v4091 = vunpack.c.l.s4 1966171168
    %v4092 = vunpack.c.0.s8 %v4091
    %v4093 = vlaneseq
    %v4094 = vshrl.u32 %v4093, 7
    %v4095 = vsub.s32 %v4092, %v4094
    %v4096 = vrot.slane %v4074, %v4095
    %v4098 = vunpack.c.l.s4 1966171168
    %v4099 = vunpack.c.0.s8 %v4098
    %v4100 = vlaneseq
    %v4101 = vshrl.u32 %v4100, 7
    %v4102 = vsub.s32 %v4099, %v4101
    %v4103 = vrot.slane %v4075, %v4102
    %v4104 = vcombine.low %v4082, %v4089
    %v4105 = vcombine.low %v4096, %v4103
    %v4107 = vunpack.c.l.s4 1966171168
    %v4108 = vunpack.c.0.s8 %v4107
    %v4109 = vlaneseq
    %v4110 = vshrl.u32 %v4109, 7
    %v4111 = vsub.s32 %v4108, %v4110
    %v4112 = vrot.slane %v4104, %v4111
    %v4114 = vunpack.c.l.s4 1966171168
    %v4115 = vunpack.c.0.s8 %v4114
    %v4116 = vlaneseq
    %v4117 = vshrl.u32 %v4116, 7
    %v4118 = vsub.s32 %v4115, %v4117
    %v4119 = vrot.slane %v4105, %v4118
    %v4120 = vcombine.low %v4112, %v4119
    %v4121 = vcombine.low %v2576, %v2590
    %v4122 = vcombine.low %v2598, %v2600
    %v4123 = vcombine.low %v2583, %v2597
    %v4124 = vcombine.low %v2599, %v2601
    %v4126 = vunpack.c.l.s4 1966171168
    %v4127 = vunpack.c.0.s8 %v4126
    %v4128 = vlaneseq
    %v4129 = vshrl.u32 %v4128, 7
    %v4130 = vsub.s32 %v4127, %v4129
    %v4131 = vrot.slane %v4121, %v4130
    %v4133 = vunpack.c.l.s4 1966171168
    %v4134 = vunpack.c.0.s8 %v4133
    %v4135 = vlaneseq
    %v4136 = vshrl.u32 %v4135, 7
    %v4137 = vsub.s32 %v4134, %v4136
    %v4138 = vrot.slane %v4122, %v4137
    %v4140 = vunpack.c.l.s4 1966171168
    %v4141 = vunpack.c.0.s8 %v4140
    %v4142 = vlaneseq
    %v4143 = vshrl.u32 %v4142, 7
    %v4144 = vsub.s32 %v4141, %v4143
    %v4145 = vrot.slane %v4123, %v4144
    %v4147 = vunpack.c.l.s4 1966171168
    %v4148 = vunpack.c.0.s8 %v4147
    %v4149 = vlaneseq
    %v4150 = vshrl.u32 %v4149, 7
    %v4151 = vsub.s32 %v4148, %v4150
    %v4152 = vrot.slane %v4124, %v4151
    %v4153 = vcombine.low %v4131, %v4138
    %v4154 = vcombine.low %v4145, %v4152
    %v4156 = vunpack.c.l.s4 1966171168
    %v4157 = vunpack.c.0.s8 %v4156
    %v4158 = vlaneseq
    %v4159 = vshrl.u32 %v4158, 7
    %v4160 = vsub.s32 %v4157, %v4159
    %v4161 = vrot.slane %v4153, %v4160
    %v4163 = vunpack.c.l.s4 1966171168
    %v4164 = vunpack.c.0.s8 %v4163
    %v4165 = vlaneseq
    %v4166 = vshrl.u32 %v4165, 7
    %v4167 = vsub.s32 %v4164, %v4166
    %v4168 = vrot.slane %v4154, %v4167
    %v4169 = vcombine.low %v4161, %v4168
    %v4170 = vcombine.low %v2625, %v2639
    %v4171 = vcombine.low %v2647, %v2649
    %v4172 = vcombine.low %v2632, %v2646
    %v4173 = vcombine.low %v2648, %v2650
    %v4175 = vunpack.c.l.s4 1966171168
    %v4176 = vunpack.c.0.s8 %v4175
    %v4177 = vlaneseq
    %v4178 = vshrl.u32 %v4177, 7
    %v4179 = vsub.s32 %v4176, %v4178
    %v4180 = vrot.slane %v4170, %v4179
    %v4182 = vunpack.c.l.s4 1966171168
    %v4183 = vunpack.c.0.s8 %v4182
    %v4184 = vlaneseq
    %v4185 = vshrl.u32 %v4184, 7
    %v4186 = vsub.s32 %v4183, %v4185
    %v4187 = vrot.slane %v4171, %v4186
    %v4189 = vunpack.c.l.s4 1966171168
    %v4190 = vunpack.c.0.s8 %v4189
    %v4191 = vlaneseq
    %v4192 = vshrl.u32 %v4191, 7
    %v4193 = vsub.s32 %v4190, %v4192
    %v4194 = vrot.slane %v4172, %v4193
    %v4196 = vunpack.c.l.s4 1966171168
    %v4197 = vunpack.c.0.s8 %v4196
    %v4198 = vlaneseq
    %v4199 = vshrl.u32 %v4198, 7
    %v4200 = vsub.s32 %v4197, %v4199
    %v4201 = vrot.slane %v4173, %v4200
    %v4202 = vcombine.low %v4180, %v4187
    %v4203 = vcombine.low %v4194, %v4201
    %v4205 = vunpack.c.l.s4 1966171168
    %v4206 = vunpack.c.0.s8 %v4205
    %v4207 = vlaneseq
    %v4208 = vshrl.u32 %v4207, 7
    %v4209 = vsub.s32 %v4206, %v4208
    %v4210 = vrot.slane %v4202, %v4209
    %v4212 = vunpack.c.l.s4 1966171168
    %v4213 = vunpack.c.0.s8 %v4212
    %v4214 = vlaneseq
    %v4215 = vshrl.u32 %v4214, 7
    %v4216 = vsub.s32 %v4213, %v4215
    %v4217 = vrot.slane %v4203, %v4216
    %v4218 = vcombine.low %v4210, %v4217
    %v4219 = vcombine.low %v2674, %v2688
    %v4220 = vcombine.low %v2696, %v2698
    %v4221 = vcombine.low %v2681, %v2695
    %v4222 = vcombine.low %v2697, %v2699
    %v4224 = vunpack.c.l.s4 1966171168
    %v4225 = vunpack.c.0.s8 %v4224
    %v4226 = vlaneseq
    %v4227 = vshrl.u32 %v4226, 7
    %v4228 = vsub.s32 %v4225, %v4227
    %v4229 = vrot.slane %v4219, %v4228
    %v4231 = vunpack.c.l.s4 1966171168
    %v4232 = vunpack.c.0.s8 %v4231
    %v4233 = vlaneseq
    %v4234 = vshrl.u32 %v4233, 7
    %v4235 = vsub.s32 %v4232, %v4234
    %v4236 = vrot.slane %v4220, %v4235
    %v4238 = vunpack.c.l.s4 1966171168
    %v4239 = vunpack.c.0.s8 %v4238
    %v4240 = vlaneseq
    %v4241 = vshrl.u32 %v4240, 7
    %v4242 = vsub.s32 %v4239, %v4241
    %v4243 = vrot.slane %v4221, %v4242
    %v4245 = vunpack.c.l.s4 1966171168
    %v4246 = vunpack.c.0.s8 %v4245
    %v4247 = vlaneseq
    %v4248 = vshrl.u32 %v4247, 7
    %v4249 = vsub.s32 %v4246, %v4248
    %v4250 = vrot.slane %v4222, %v4249
    %v4251 = vcombine.low %v4229, %v4236
    %v4252 = vcombine.low %v4243, %v4250
    %v4254 = vunpack.c.l.s4 1966171168
    %v4255 = vunpack.c.0.s8 %v4254
    %v4256 = vlaneseq
    %v4257 = vshrl.u32 %v4256, 7
    %v4258 = vsub.s32 %v4255, %v4257
    %v4259 = vrot.slane %v4251, %v4258
    %v4261 = vunpack.c.l.s4 1966171168
    %v4262 = vunpack.c.0.s8 %v4261
    %v4263 = vlaneseq
    %v4264 = vshrl.u32 %v4263, 7
    %v4265 = vsub.s32 %v4262, %v4264
    %v4266 = vrot.slane %v4252, %v4265
    %v4267 = vcombine.low %v4259, %v4266
    %v4268 = vcombine.low %v2723, %v2737
    %v4269 = vcombine.low %v2745, %v2747
    %v4270 = vcombine.low %v2730, %v2744
    %v4271 = vcombine.low %v2746, %v2748
    %v4273 = vunpack.c.l.s4 1966171168
    %v4274 = vunpack.c.0.s8 %v4273
    %v4275 = vlaneseq
    %v4276 = vshrl.u32 %v4275, 7
    %v4277 = vsub.s32 %v4274, %v4276
    %v4278 = vrot.slane %v4268, %v4277
    %v4280 = vunpack.c.l.s4 1966171168
    %v4281 = vunpack.c.0.s8 %v4280
    %v4282 = vlaneseq
    %v4283 = vshrl.u32 %v4282, 7
    %v4284 = vsub.s32 %v4281, %v4283
    %v4285 = vrot.slane %v4269, %v4284
    %v4287 = vunpack.c.l.s4 1966171168
    %v4288 = vunpack.c.0.s8 %v4287
    %v4289 = vlaneseq
    %v4290 = vshrl.u32 %v4289, 7
    %v4291 = vsub.s32 %v4288, %v4290
    %v4292 = vrot.slane %v4270, %v4291
    %v4294 = vunpack.c.l.s4 1966171168
    %v4295 = vunpack.c.0.s8 %v4294
    %v4296 = vlaneseq
    %v4297 = vshrl.u32 %v4296, 7
    %v4298 = vsub.s32 %v4295, %v4297
    %v4299 = vrot.slane %v4271, %v4298
    %v4300 = vcombine.low %v4278, %v4285
    %v4301 = vcombine.low %v4292, %v4299
    %v4303 = vunpack.c.l.s4 1966171168
    %v4304 = vunpack.c.0.s8 %v4303
    %v4305 = vlaneseq
    %v4306 = vshrl.u32 %v4305, 7
    %v4307 = vsub.s32 %v4304, %v4306
    %v4308 = vrot.slane %v4300, %v4307
    %v4310 = vunpack.c.l.s4 1966171168
    %v4311 = vunpack.c.0.s8 %v4310
    %v4312 = vlaneseq
    %v4313 = vshrl.u32 %v4312, 7
    %v4314 = vsub.s32 %v4311, %v4313
    %v4315 = vrot.slane %v4301, %v4314
    %v4316 = vcombine.low %v4308, %v4315
    %v4317 = vcombine.low %v2772, %v2786
    %v4318 = vcombine.low %v2794, %v2796
    %v4319 = vcombine.low %v2779, %v2793
    %v4320 = vcombine.low %v2795, %v2797
    %v4322 = vunpack.c.l.s4 1966171168
    %v4323 = vunpack.c.0.s8 %v4322
    %v4324 = vlaneseq
    %v4325 = vshrl.u32 %v4324, 7
    %v4326 = vsub.s32 %v4323, %v4325
    %v4327 = vrot.slane %v4317, %v4326
    %v4329 = vunpack.c.l.s4 1966171168
    %v4330 = vunpack.c.0.s8 %v4329
    %v4331 = vlaneseq
    %v4332 = vshrl.u32 %v4331, 7
    %v4333 = vsub.s32 %v4330, %v4332
    %v4334 = vrot.slane %v4318, %v4333
    %v4336 = vunpack.c.l.s4 1966171168
    %v4337 = vunpack.c.0.s8 %v4336
    %v4338 = vlaneseq
    %v4339 = vshrl.u32 %v4338, 7
    %v4340 = vsub.s32 %v4337, %v4339
    %v4341 = vrot.slane %v4319, %v4340
    %v4343 = vunpack.c.l.s4 1966171168
    %v4344 = vunpack.c.0.s8 %v4343
    %v4345 = vlaneseq
    %v4346 = vshrl.u32 %v4345, 7
    %v4347 = vsub.s32 %v4344, %v4346
    %v4348 = vrot.slane %v4320, %v4347
    %v4349 = vcombine.low %v4327, %v4334
    %v4350 = vcombine.low %v4341, %v4348
    %v4352 = vunpack.c.l.s4 1966171168
    %v4353 = vunpack.c.0.s8 %v4352
    %v4354 = vlaneseq
    %v4355 = vshrl.u32 %v4354, 7
    %v4356 = vsub.s32 %v4353, %v4355
    %v4357 = vrot.slane %v4349, %v4356
    %v4359 = vunpack.c.l.s4 1966171168
    %v4360 = vunpack.c.0.s8 %v4359
    %v4361 = vlaneseq
    %v4362 = vshrl.u32 %v4361, 7
    %v4363 = vsub.s32 %v4360, %v4362
    %v4364 = vrot.slane %v4350, %v4363
    %v4365 = vcombine.low %v4357, %v4364
    %v4366 = vcombine.low %v2821, %v2835
    %v4367 = vcombine.low %v2843, %v2845
    %v4368 = vcombine.low %v2828, %v2842
    %v4369 = vcombine.low %v2844, %v2846
    %v4371 = vunpack.c.l.s4 1966171168
    %v4372 = vunpack.c.0.s8 %v4371
    %v4373 = vlaneseq
    %v4374 = vshrl.u32 %v4373, 7
    %v4375 = vsub.s32 %v4372, %v4374
    %v4376 = vrot.slane %v4366, %v4375
    %v4378 = vunpack.c.l.s4 1966171168
    %v4379 = vunpack.c.0.s8 %v4378
    %v4380 = vlaneseq
    %v4381 = vshrl.u32 %v4380, 7
    %v4382 = vsub.s32 %v4379, %v4381
    %v4383 = vrot.slane %v4367, %v4382
    %v4385 = vunpack.c.l.s4 1966171168
    %v4386 = vunpack.c.0.s8 %v4385
    %v4387 = vlaneseq
    %v4388 = vshrl.u32 %v4387, 7
    %v4389 = vsub.s32 %v4386, %v4388
    %v4390 = vrot.slane %v4368, %v4389
    %v4392 = vunpack.c.l.s4 1966171168
    %v4393 = vunpack.c.0.s8 %v4392
    %v4394 = vlaneseq
    %v4395 = vshrl.u32 %v4394, 7
    %v4396 = vsub.s32 %v4393, %v4395
    %v4397 = vrot.slane %v4369, %v4396
    %v4398 = vcombine.low %v4376, %v4383
    %v4399 = vcombine.low %v4390, %v4397
    %v4401 = vunpack.c.l.s4 1966171168
    %v4402 = vunpack.c.0.s8 %v4401
    %v4403 = vlaneseq
    %v4404 = vshrl.u32 %v4403, 7
    %v4405 = vsub.s32 %v4402, %v4404
    %v4406 = vrot.slane %v4398, %v4405
    %v4408 = vunpack.c.l.s4 1966171168
    %v4409 = vunpack.c.0.s8 %v4408
    %v4410 = vlaneseq
    %v4411 = vshrl.u32 %v4410, 7
    %v4412 = vsub.s32 %v4409, %v4411
    %v4413 = vrot.slane %v4399, %v4412
    %v4414 = vcombine.low %v4406, %v4413
    %4415 = vset.pattern.permute.xlu0 0
    %4416 = vperm.xlu0 %4415, %v2895
    %v4417 = vpop.permute.xlu0 %4416
    %4418 = vset.pattern.permute.xlu0 0
    %4419 = vperm.xlu0 %4418, %v2944
    %v4420 = vpop.permute.xlu0 %4419
    %4421 = vset.pattern.permute.xlu0 0
    %4422 = vperm.xlu0 %4421, %v2993
    %v4423 = vpop.permute.xlu0 %4422
    %4424 = vset.pattern.permute.xlu0 0
    %4425 = vperm.xlu0 %4424, %v3042
    %v4426 = vpop.permute.xlu0 %4425
    %4427 = vset.pattern.permute.xlu0 0
    %4428 = vperm.xlu0 %4427, %v3091
    %v4429 = vpop.permute.xlu0 %4428
    %4430 = vset.pattern.permute.xlu0 0
    %4431 = vperm.xlu0 %4430, %v3140
    %v4432 = vpop.permute.xlu0 %4431
    %4433 = vset.pattern.permute.xlu0 0
    %4434 = vperm.xlu0 %4433, %v3189
    %v4435 = vpop.permute.xlu0 %4434
    %4436 = vset.pattern.permute.xlu0 0
    %4437 = vperm.xlu0 %4436, %v3238
    %v4438 = vpop.permute.xlu0 %4437
    %4439 = vset.pattern.permute.xlu0 0
    %4440 = vperm.xlu0 %4439, %v3287
    %v4441 = vpop.permute.xlu0 %4440
    %4442 = vset.pattern.permute.xlu0 0
    %4443 = vperm.xlu0 %4442, %v3336
    %v4444 = vpop.permute.xlu0 %4443
    %4445 = vset.pattern.permute.xlu0 0
    %4446 = vperm.xlu0 %4445, %v3385
    %v4447 = vpop.permute.xlu0 %4446
    %4448 = vset.pattern.permute.xlu0 0
    %4449 = vperm.xlu0 %4448, %v3434
    %v4450 = vpop.permute.xlu0 %4449
    %4451 = vset.pattern.permute.xlu0 0
    %4452 = vperm.xlu0 %4451, %v3483
    %v4453 = vpop.permute.xlu0 %4452
    %4454 = vset.pattern.permute.xlu0 0
    %4455 = vperm.xlu0 %4454, %v3532
    %v4456 = vpop.permute.xlu0 %4455
    %4457 = vset.pattern.permute.xlu0 0
    %4458 = vperm.xlu0 %4457, %v3581
    %v4459 = vpop.permute.xlu0 %4458
    %4460 = vset.pattern.permute.xlu0 0
    %4461 = vperm.xlu0 %4460, %v3630
    %v4462 = vpop.permute.xlu0 %4461
    %4463 = vset.pattern.permute.xlu0 0
    %4464 = vperm.xlu0 %4463, %v3679
    %v4465 = vpop.permute.xlu0 %4464
    %4466 = vset.pattern.permute.xlu0 0
    %4467 = vperm.xlu0 %4466, %v3728
    %v4468 = vpop.permute.xlu0 %4467
    %4469 = vset.pattern.permute.xlu0 0
    %4470 = vperm.xlu0 %4469, %v3777
    %v4471 = vpop.permute.xlu0 %4470
    %4472 = vset.pattern.permute.xlu0 0
    %4473 = vperm.xlu0 %4472, %v3826
    %v4474 = vpop.permute.xlu0 %4473
    %4475 = vset.pattern.permute.xlu0 0
    %4476 = vperm.xlu0 %4475, %v3875
    %v4477 = vpop.permute.xlu0 %4476
    %4478 = vset.pattern.permute.xlu0 0
    %4479 = vperm.xlu0 %4478, %v3924
    %v4480 = vpop.permute.xlu0 %4479
    %4481 = vset.pattern.permute.xlu0 0
    %4482 = vperm.xlu0 %4481, %v3973
    %v4483 = vpop.permute.xlu0 %4482
    %4484 = vset.pattern.permute.xlu0 0
    %4485 = vperm.xlu0 %4484, %v4022
    %v4486 = vpop.permute.xlu0 %4485
    %4487 = vset.pattern.permute.xlu0 0
    %4488 = vperm.xlu0 %4487, %v4071
    %v4489 = vpop.permute.xlu0 %4488
    %4490 = vset.pattern.permute.xlu0 0
    %4491 = vperm.xlu0 %4490, %v4120
    %v4492 = vpop.permute.xlu0 %4491
    %4493 = vset.pattern.permute.xlu0 0
    %4494 = vperm.xlu0 %4493, %v4169
    %v4495 = vpop.permute.xlu0 %4494
    %4496 = vset.pattern.permute.xlu0 0
    %4497 = vperm.xlu0 %4496, %v4218
    %v4498 = vpop.permute.xlu0 %4497
    %4499 = vset.pattern.permute.xlu0 0
    %4500 = vperm.xlu0 %4499, %v4267
    %v4501 = vpop.permute.xlu0 %4500
    %4502 = vset.pattern.permute.xlu0 0
    %4503 = vperm.xlu0 %4502, %v4316
    %v4504 = vpop.permute.xlu0 %4503
    %4505 = vset.pattern.permute.xlu0 0
    %4506 = vperm.xlu0 %4505, %v4365
    %v4507 = vpop.permute.xlu0 %4506
    %4508 = vset.pattern.permute.xlu0 0
    %4509 = vperm.xlu0 %4508, %v4414
    %v4510 = vpop.permute.xlu0 %4509
    %v4511 = vlaneseq
    %v4512 = vand.u32 %v4511, 127
    %v4513 = vlaneseq
    %v4514 = vshrl.u32 %v4513, 7
    %v4515 = vsub.s32 %v4512, %v4514
    %v4516 = vrot.slane %v4417, %v4515
    %v4517 = vadd.s32 %v4512, 4294967288
    %v4518 = vlaneseq
    %v4519 = vshrl.u32 %v4518, 7
    %v4520 = vsub.s32 %v4517, %v4519
    %v4521 = vrot.slane %v4420, %v4520
    %vm4522 = vcmask 130112
    %v4523 = vsel %vm4522, %v4521, %v4516
    %v4524 = vadd.s32 %v4512, 4294967280
    %v4525 = vlaneseq
    %v4526 = vshrl.u32 %v4525, 7
    %v4527 = vsub.s32 %v4524, %v4526
    %v4528 = vrot.slane %v4423, %v4527
    %vm4529 = vcmask 195712
    %v4530 = vsel %vm4529, %v4528, %v4523
    %v4531 = vadd.s32 %v4512, 4294967272
    %v4532 = vlaneseq
    %v4533 = vshrl.u32 %v4532, 7
    %v4534 = vsub.s32 %v4531, %v4533
    %v4535 = vrot.slane %v4426, %v4534
    %vm4536 = vcmask 261312
    %v4537 = vsel %vm4536, %v4535, %v4530
    %v4538 = vadd.s32 %v4512, 4294967264
    %v4539 = vlaneseq
    %v4540 = vshrl.u32 %v4539, 7
    %v4541 = vsub.s32 %v4538, %v4540
    %v4542 = vrot.slane %v4429, %v4541
    %vm4543 = vcmask 326912
    %v4544 = vsel %vm4543, %v4542, %v4537
    %v4545 = vadd.s32 %v4512, 4294967256
    %v4546 = vlaneseq
    %v4547 = vshrl.u32 %v4546, 7
    %v4548 = vsub.s32 %v4545, %v4547
    %v4549 = vrot.slane %v4432, %v4548
    %vm4550 = vcmask 392512
    %v4551 = vsel %vm4550, %v4549, %v4544
    %v4552 = vadd.s32 %v4512, 4294967248
    %v4553 = vlaneseq
    %v4554 = vshrl.u32 %v4553, 7
    %v4555 = vsub.s32 %v4552, %v4554
    %v4556 = vrot.slane %v4435, %v4555
    %vm4557 = vcmask 458112
    %v4558 = vsel %vm4557, %v4556, %v4551
    %v4559 = vadd.s32 %v4512, 4294967240
    %v4560 = vlaneseq
    %v4561 = vshrl.u32 %v4560, 7
    %v4562 = vsub.s32 %v4559, %v4561
    %v4563 = vrot.slane %v4438, %v4562
    %vm4564 = vcmask 523712
    %v4565 = vsel %vm4564, %v4563, %v4558
    %v4566 = vadd.s32 %v4512, 4294967232
    %v4567 = vlaneseq
    %v4568 = vshrl.u32 %v4567, 7
    %v4569 = vsub.s32 %v4566, %v4568
    %v4570 = vrot.slane %v4441, %v4569
    %vm4571 = vcmask 589312
    %v4572 = vsel %vm4571, %v4570, %v4565
    %v4573 = vadd.s32 %v4512, 4294967224
    %v4574 = vlaneseq
    %v4575 = vshrl.u32 %v4574, 7
    %v4576 = vsub.s32 %v4573, %v4575
    %v4577 = vrot.slane %v4444, %v4576
    %vm4578 = vcmask 654912
    %v4579 = vsel %vm4578, %v4577, %v4572
    %v4580 = vadd.s32 %v4512, 4294967216
    %v4581 = vlaneseq
    %v4582 = vshrl.u32 %v4581, 7
    %v4583 = vsub.s32 %v4580, %v4582
    %v4584 = vrot.slane %v4447, %v4583
    %vm4585 = vcmask 720512
    %v4586 = vsel %vm4585, %v4584, %v4579
    %v4587 = vadd.s32 %v4512, 4294967208
    %v4588 = vlaneseq
    %v4589 = vshrl.u32 %v4588, 7
    %v4590 = vsub.s32 %v4587, %v4589
    %v4591 = vrot.slane %v4450, %v4590
    %vm4592 = vcmask 786112
    %v4593 = vsel %vm4592, %v4591, %v4586
    %v4594 = vadd.s32 %v4512, 4294967200
    %v4595 = vlaneseq
    %v4596 = vshrl.u32 %v4595, 7
    %v4597 = vsub.s32 %v4594, %v4596
    %v4598 = vrot.slane %v4453, %v4597
    %vm4599 = vcmask 851712
    %v4600 = vsel %vm4599, %v4598, %v4593
    %v4601 = vadd.s32 %v4512, 4294967192
    %v4602 = vlaneseq
    %v4603 = vshrl.u32 %v4602, 7
    %v4604 = vsub.s32 %v4601, %v4603
    %v4605 = vrot.slane %v4456, %v4604
    %vm4606 = vcmask 917312
    %v4607 = vsel %vm4606, %v4605, %v4600
    %v4608 = vadd.s32 %v4512, 4294967184
    %v4609 = vlaneseq
    %v4610 = vshrl.u32 %v4609, 7
    %v4611 = vsub.s32 %v4608, %v4610
    %v4612 = vrot.slane %v4459, %v4611
    %vm4613 = vcmask 982912
    %v4614 = vsel %vm4613, %v4612, %v4607
    %v4615 = vadd.s32 %v4512, 4294967176
    %v4616 = vlaneseq
    %v4617 = vshrl.u32 %v4616, 7
    %v4618 = vsub.s32 %v4615, %v4617
    %v4619 = vrot.slane %v4462, %v4618
    %vm4620 = vcmask 1048512
    %v4621 = vsel %vm4620, %v4619, %v4614
    %v4622 = vlaneseq
    %v4623 = vshrl.u32 %v4622, 7
    %v4624 = vsub.s32 %v4512, %v4623
    %v4625 = vrot.slane %v4465, %v4624
    %v4626 = vlaneseq
    %v4627 = vshrl.u32 %v4626, 7
    %v4628 = vsub.s32 %v4517, %v4627
    %v4629 = vrot.slane %v4468, %v4628
    %v4630 = vsel %vm4522, %v4629, %v4625
    %v4631 = vlaneseq
    %v4632 = vshrl.u32 %v4631, 7
    %v4633 = vsub.s32 %v4524, %v4632
    %v4634 = vrot.slane %v4471, %v4633
    %v4635 = vsel %vm4529, %v4634, %v4630
    %v4636 = vlaneseq
    %v4637 = vshrl.u32 %v4636, 7
    %v4638 = vsub.s32 %v4531, %v4637
    %v4639 = vrot.slane %v4474, %v4638
    %v4640 = vsel %vm4536, %v4639, %v4635
    %v4641 = vlaneseq
    %v4642 = vshrl.u32 %v4641, 7
    %v4643 = vsub.s32 %v4538, %v4642
    %v4644 = vrot.slane %v4477, %v4643
    %v4645 = vsel %vm4543, %v4644, %v4640
    %v4646 = vlaneseq
    %v4647 = vshrl.u32 %v4646, 7
    %v4648 = vsub.s32 %v4545, %v4647
    %v4649 = vrot.slane %v4480, %v4648
    %v4650 = vsel %vm4550, %v4649, %v4645
    %v4651 = vlaneseq
    %v4652 = vshrl.u32 %v4651, 7
    %v4653 = vsub.s32 %v4552, %v4652
    %v4654 = vrot.slane %v4483, %v4653
    %v4655 = vsel %vm4557, %v4654, %v4650
    %v4656 = vlaneseq
    %v4657 = vshrl.u32 %v4656, 7
    %v4658 = vsub.s32 %v4559, %v4657
    %v4659 = vrot.slane %v4486, %v4658
    %v4660 = vsel %vm4564, %v4659, %v4655
    %v4661 = vlaneseq
    %v4662 = vshrl.u32 %v4661, 7
    %v4663 = vsub.s32 %v4566, %v4662
    %v4664 = vrot.slane %v4489, %v4663
    %v4665 = vsel %vm4571, %v4664, %v4660
    %v4666 = vlaneseq
    %v4667 = vshrl.u32 %v4666, 7
    %v4668 = vsub.s32 %v4573, %v4667
    %v4669 = vrot.slane %v4492, %v4668
    %v4670 = vsel %vm4578, %v4669, %v4665
    %v4671 = vlaneseq
    %v4672 = vshrl.u32 %v4671, 7
    %v4673 = vsub.s32 %v4580, %v4672
    %v4674 = vrot.slane %v4495, %v4673
    %v4675 = vsel %vm4585, %v4674, %v4670
    %v4676 = vlaneseq
    %v4677 = vshrl.u32 %v4676, 7
    %v4678 = vsub.s32 %v4587, %v4677
    %v4679 = vrot.slane %v4498, %v4678
    %v4680 = vsel %vm4592, %v4679, %v4675
    %v4681 = vlaneseq
    %v4682 = vshrl.u32 %v4681, 7
    %v4683 = vsub.s32 %v4594, %v4682
    %v4684 = vrot.slane %v4501, %v4683
    %v4685 = vsel %vm4599, %v4684, %v4680
    %v4686 = vlaneseq
    %v4687 = vshrl.u32 %v4686, 7
    %v4688 = vsub.s32 %v4601, %v4687
    %v4689 = vrot.slane %v4504, %v4688
    %v4690 = vsel %vm4606, %v4689, %v4685
    %v4691 = vlaneseq
    %v4692 = vshrl.u32 %v4691, 7
    %v4693 = vsub.s32 %v4608, %v4692
    %v4694 = vrot.slane %v4507, %v4693
    %v4695 = vsel %vm4613, %v4694, %v4690
    %v4696 = vlaneseq
    %v4697 = vshrl.u32 %v4696, 7
    %v4698 = vsub.s32 %v4615, %v4697
    %v4699 = vrot.slane %v4510, %v4698
    %v4700 = vsel %vm4620, %v4699, %v4695
    %v4701 = vcombine.low %v4621, %v4700
    %v4703 = vunpack.c.l.s4 1966171168
    %v4704 = vunpack.c.0.s8 %v4703
    %v4705 = vlaneseq
    %v4706 = vshrl.u32 %v4705, 7
    %v4707 = vsub.s32 %v4704, %v4706
    %v4708 = vrot.slane %v4701, %v4707
    %v4710 = vunpack.c.l.s4 1966171168
    %v4711 = vunpack.c.0.s8 %v4710
    %v4712 = vlaneseq
    %v4713 = vshrl.u32 %v4712, 7
    %v4714 = vsub.s32 %v4711, %v4713
    %v4715 = vrot.slane %v4708, %v4714
    %v4717 = vlaneseq
    %vm4718 = vcmp.ge.s32.totalorder %v4717, 0
    %vm4719 = vcmp.lt.s32.totalorder %v4717, 256
    %vm4720 = vmand %vm4718, %vm4719
    %4721 = vst.msk [vmem:[#allocation2] sm:$0x3] %vm4720, %v4715
    // Predicated region
    $region14: #{tpu_custom_call.1} parent=1 // pred_check
      _
    $region15: #{tpu_custom_call.1} parent=1 // pred_check_branch
      %4723 = sbr.rel (0) target = $region17
    $region16: #{tpu_custom_call.1} parent=1 // pred_region
      %s4725 = ssub.s32 32, 32
      %4726 = vsyncadd [#allocation3], %s4725
      %s4728 = sshll.u32 [#allocation2], 4
      %s4729 = int_to_ptr.vmem [resolvable:$true] %s4728
      %4731 = dma.vmem_to_hbm [thread:$0]  %s4729, 32, %s3, [#allocation3]
    $region17: #{tpu_custom_call.1} parent=1 // pred_fallthru
      _
    // Predicated region
    $region18: #{tpu_custom_call.1} parent=1 // pred_check
      _
    $region19: #{tpu_custom_call.1} parent=1 // pred_check_branch
      %4733 = sbr.rel (0) target = $region21
    $region20: #{tpu_custom_call.1} parent=1 // pred_region
      %4734 = dma.done [#allocation3], 32
    $region21: #{tpu_custom_call.1} parent=1 // pred_fallthru
      _
    %4735 = vsyncpa [#allocation3], 1

</llo_original>
